<compile_context>
chip_gen: v6e
topology: v6e:2x2x1
jax: 0.10.0
libtpu: 0.0.40
codegen_flags: <defaults>
</compile_context>

<pallas_src>
import jax
import jax.numpy as jnp
import numpy as np
from jax import lax
from jax.experimental import pallas as pl
from jax.experimental.pallas import tpu as pltpu


_LANE = 128          # lambda output padded to a lane-dense multiple of 128
_BATCH_ALIGN = 16    # bf16 sublane packing: keep batch rows 16-aligned
_STORE_CHUNK = 8     # steps between coalesced hidden-state block stores


def _build_kernel(num_layers, seq_len, hidden, batch_chunk, store_chunk):
    """Kernel arity depends on num_layers (3 weight refs per layer)."""
    L, T, H, Bc = num_layers, seq_len, hidden, batch_chunk

    def kernel(*refs):
        # inputs
        s_ref = refs[0]                                   # (T*Bc, I)  bf16, time-major rows
        layer_refs = refs[1:1 + 3 * L]                    # per layer: WihT (I_l,4H) bf16, WhhT (H,4H) bf16, bias (1,4H) f32
        h0_ref, c0_ref, w_ref, scale_ref = refs[1 + 3 * L:5 + 3 * L]
        # outputs
        lam_ref = refs[5 + 3 * L]                         # (T*Bc, C_pad) f32, lane-dense
        # scratch
        gx_ref, xbuf_ref = refs[6 + 3 * L:8 + 3 * L]      # (T*Bc,4H) f32, ((T+1)*Bc,H) bf16

        for l in range(L):                                # static loop over LSTM layers
            wih_t = layer_refs[3 * l][...]                # (I_l, 4H) bf16
            whh_t = layer_refs[3 * l + 1][...]            # (H,   4H) bf16
            bias = layer_refs[3 * l + 2][...]             # (1,   4H) f32  (= b_ih + b_hh)

            # ---- hoisted input projection: one big MXU matmul for all timesteps ----
            if l == 0:
                x2d = s_ref[...]                          # (T*Bc, I) bf16
            else:
                x2d = xbuf_ref[pl.ds(0, T * Bc), :]       # prev-layer outputs, already bf16
            gx_ref[...] = jnp.dot(x2d, wih_t, preferred_element_type=jnp.float32) + bias

            last = (l == L - 1)
            out_off = Bc if last else 0
            if last:
                # row-block 0 of xbuf feeds lambdas[:, 0, :] = f(hidden0[-1] @ W)
                xbuf_ref[pl.ds(0, Bc), :] = jnp.broadcast_to(
                    h0_ref[L - 1], (Bc, H)).astype(jnp.bfloat16)

            h = jnp.broadcast_to(h0_ref[l], (Bc, H))      # f32 recurrent state
            c = jnp.broadcast_to(c0_ref[l], (Bc, H))

            # TODO(synk): keep WhhT resident in the MXU across the time loop with
            # pltpu.matmul_push_rhs / matmul_acc_lhs / matmul_pop to drop the
            # per-step weight staging from the serial h-dependency.
            for t0 in range(0, T, store_chunk):           # bounded unroll + coalesced stores
                nsteps = min(store_chunk, T - t0)
                h_outs = []
                for dt in range(nsteps):
                    row = (t0 + dt) * Bc                  # static offset
                    gates = gx_ref[pl.ds(row, Bc), :] + jnp.dot(
                        h.astype(jnp.bfloat16), whh_t,
                        preferred_element_type=jnp.float32)   # (Bc,4H), gate order i,f,g,o
                    sig = jax.nn.sigmoid(gates)           # full-width EUP pass
                    th = jnp.tanh(gates)                  # full-width EUP pass
                    i_g = sig[:, 0:H]
                    f_g = sig[:, H:2 * H]
                    o_g = sig[:, 3 * H:4 * H]
                    g_g = th[:, 2 * H:3 * H]
                    c = f_g * c + i_g * g_g
                    h = o_g * jnp.tanh(c)
                    h_outs.append(h.astype(jnp.bfloat16))
                # single coalesced block store per chunk (off the recurrence chain)
                wrow = t0 * Bc + out_off                  # static, 16-row aligned
                xbuf_ref[pl.ds(wrow, nsteps * Bc), :] = jnp.concatenate(h_outs, axis=0)

        # ---- lambdas: one (T*Bc, H) @ (H, C_pad) projection + stable ScaledSoftplus ----
        scale = scale_ref[0]
        inv_scale = 1.0 / scale
        hprev = xbuf_ref[pl.ds(0, T * Bc), :]             # bf16, time-shifted last-layer h
        proj = jnp.dot(hprev, w_ref[...], preferred_element_type=jnp.float32)
        z = proj * inv_scale
        softplus = jnp.maximum(z, 0.0) + jnp.log(1.0 + jnp.exp(-jnp.abs(z)))
        lam_ref[...] = scale * softplus                   # unmasked 128-lane stores

    return kernel


def _multi_tensorcore():
    """True on chips with >1 TensorCore per JAX device (v7x, v4/v5p megacore)."""
    try:
        kind = jax.devices()[0].device_kind.lower()
    except Exception:
        return False
    return ("v7" in kind) or ("7x" in kind) or ("v4" in kind) or ("v5p" in kind)


def _vmem_limit_bytes():
    """Per-generation VMEM budget: ~3/4 of physical, capped at 100 MiB, min 32 MiB."""
    try:
        phys = int(pltpu.get_tpu_info().vmem_capacity_bytes)
    except Exception:
        phys = 64 << 20  # assume the smaller (v7x) budget if unknown
    return max(32 << 20, min((phys * 3) // 4, 100 << 20))


def lstm_pp_forward(s, params):
    """Pallas forward of LSTMSinglePointProcess: s (B, T, I) -> lambdas (B, T, C)."""
    B, T, I = s.shape
    L, H = params["hidden0"].shape
    C = params["W"].shape[1]
    C_pad = max(_LANE, ((C + _LANE - 1) // _LANE) * _LANE)

    # Batch-chunk grid only where a second TensorCore exists and batch is big enough.
    n_chunks = 2 if (_multi_tensorcore() and B > _BATCH_ALIGN) else 1
    align = _BATCH_ALIGN * n_chunks
    Bp = ((max(B, _BATCH_ALIGN) + align - 1) // align) * align
    Bc = Bp // n_chunks

    # TODO(synk): for very long sequences, stream s from HBM (memory_space=pl.ANY or a
    # time-chunked "arbitrary" grid axis) instead of materializing the full time-major
    # copy and the full-sequence gx scratch in VMEM.
    s_tm = jnp.transpose(s, (1, 0, 2)).astype(jnp.float32)            # (T, B, I)
    s_tm = jnp.pad(s_tm, ((0, 0), (0, Bp - B), (0, 0)))               # (T, Bp, I)
    s_cm = (s_tm.reshape(T, n_chunks, Bc, I).transpose(1, 0, 2, 3)
            .reshape(n_chunks, T * Bc, I).astype(jnp.bfloat16))       # chunk-major rows

    inputs = [s_cm]
    for l in range(L):
        wih = params["w_ih"][l]                                       # (4H, I_l)
        whh = params["w_hh"][l]                                       # (4H, H)
        bsum = (params["b_ih"][l] + params["b_hh"][l]).reshape(1, 4 * H).astype(jnp.float32)
        inputs += [wih.T.astype(jnp.bfloat16), whh.T.astype(jnp.bfloat16), bsum]
    w_pad = jnp.zeros((H, C_pad), jnp.bfloat16).at[:, :C].set(params["W"].astype(jnp.bfloat16))
    inputs += [params["hidden0"][:, None, :].astype(jnp.float32),     # (L, 1, H)
               params["cell0"][:, None, :].astype(jnp.float32),       # (L, 1, H)
               w_pad,                                                  # (H, C_pad) lane-dense
               params["scale"].reshape(1).astype(jnp.float32)]        # SMEM scalar

    vmem = pl.BlockSpec(memory_space=pltpu.MemorySpace.VMEM)
    smem = pl.BlockSpec(memory_space=pltpu.MemorySpace.SMEM)
    in_specs = ([pl.BlockSpec((None, T * Bc, I), lambda b: (b, 0, 0))]  # s: per-chunk block
                + [vmem] * (3 * L + 3)                                  # weights/states resident
                + [smem])                                               # scale scalar
    out_specs = pl.BlockSpec((None, T * Bc, C_pad), lambda b: (b, 0, 0))

    lam_cm = pl.pallas_call(
        _build_kernel(L, T, H, Bc, _STORE_CHUNK),
        out_shape=jax.ShapeDtypeStruct((n_chunks, T * Bc, C_pad), jnp.float32),
        grid_spec=pltpu.PrefetchScalarGridSpec(
            num_scalar_prefetch=0,
            grid=(n_chunks,),
            in_specs=in_specs,
            out_specs=out_specs,
            scratch_shapes=[
                pltpu.VMEM((T * Bc, 4 * H), jnp.float32),      # hoisted input-projection gates
                pltpu.VMEM(((T + 1) * Bc, H), jnp.bfloat16),   # layer hand-off / lambda buffer
            ]),
        compiler_params=pltpu.CompilerParams(
            dimension_semantics=("parallel",),
            vmem_limit_bytes=_vmem_limit_bytes()),
    )(*inputs)

    lam = (lam_cm.reshape(n_chunks, T, Bc, C_pad).transpose(1, 0, 2, 3)
           .reshape(T, Bp, C_pad)[:, :B, :C])                          # (T, B, C)
    return jnp.transpose(lam, (1, 0, 2))                               # (B, T, C)


def lstm_pp_reference(s, params):
    """Pure-JAX f32 reference mirroring the PyTorch forward exactly."""
    B, T, I = s.shape
    L, H = params["hidden0"].shape
    x = s.astype(jnp.float32)
    for l in range(L):
        wih, whh = params["w_ih"][l], params["w_hh"][l]
        b = params["b_ih"][l] + params["b_hh"][l]
        h = jnp.broadcast_to(params["hidden0"][l], (B, H))
        c = jnp.broadcast_to(params["cell0"][l], (B, H))
        outs = []
        for t in range(T):
            gates = x[:, t] @ wih.T + h @ whh.T + b
            i_g = jax.nn.sigmoid(gates[:, :H])
            f_g = jax.nn.sigmoid(gates[:, H:2 * H])
            g_g = jnp.tanh(gates[:, 2 * H:3 * H])
            o_g = jax.nn.sigmoid(gates[:, 3 * H:])
            c = f_g * c + i_g * g_g
            h = o_g * jnp.tanh(c)
            outs.append(h)
        x = jnp.stack(outs, axis=1)
    scale = params["scale"]
    f = lambda v: scale * jax.nn.softplus(v / scale)
    C = params["W"].shape[1]
    lam0 = f(params["hidden0"][-1] @ params["W"])                     # (C,)
    lam_rest = f(x[:, :-1] @ params["W"])                             # (B, T-1, C)
    return jnp.concatenate([jnp.broadcast_to(lam0, (B, 1, C)), lam_rest], axis=1)


if __name__ == "__main__":
    # Small shapes consistent with the module's forward:
    #   s: (batch, seq_len, input_size); hidden_size=32, num_layers=2, num_classes=4
    B, T, I, H, C, L = 2, 8, 4, 32, 4, 2

    key = jax.random.PRNGKey(0)
    ki = iter(jax.random.split(key, 4 * L + 4))
    k = 1.0 / np.sqrt(H)

    w_ih, w_hh, b_ih, b_hh = [], [], [], []
    for l in range(L):
        in_l = I if l == 0 else H
        w_ih.append(jax.random.uniform(next(ki), (4 * H, in_l), jnp.float32, -k, k))
        w_hh.append(jax.random.uniform(next(ki), (4 * H, H), jnp.float32, -k, k))
        b_ih.append(jax.random.uniform(next(ki), (4 * H,), jnp.float32, -k, k))
        b_hh.append(jax.random.uniform(next(ki), (4 * H,), jnp.float32, -k, k))

    params = dict(
        w_ih=w_ih, w_hh=w_hh, b_ih=b_ih, b_hh=b_hh,
        hidden0=jax.random.normal(next(ki), (L, H), jnp.float32),     # like torch.randn
        cell0=jax.random.normal(next(ki), (L, H), jnp.float32),
        W=jax.random.normal(next(ki), (H, C), jnp.float32),
        scale=jnp.ones((), jnp.float32),                              # ScaledSoftplus s = 1
    )
    s = jax.random.normal(next(ki), (B, T, I), jnp.float32)

    lambdas = jax.block_until_ready(lstm_pp_forward(s, params))
    ref = lstm_pp_reference(s, params)
    # bf16 MXU operands (f32 accumulate) => ~1e-2 relative drift through the recurrence.
    np.testing.assert_allclose(np.asarray(lambdas), np.asarray(ref), rtol=5e-2, atol=5e-2)

    # TODO(synk): `provide_states=True` (returning LSTM hidden/cell) and the
    # Poisson-sampling `simulate()` path are not part of the kernel output.
    print("KERNEL_OK")
</pallas_src>

<mosaic_0001>
module attributes {stable_mosaic.version = 11 : i64} {
  func.func @kernel(%arg0: i32, %arg1: memref<1x128x4xbf16, #tpu.memory_space<vmem>>, %arg2: memref<4x128xbf16, #tpu.memory_space<vmem>>, %arg3: memref<32x128xbf16, #tpu.memory_space<vmem>>, %arg4: memref<1x128xf32, #tpu.memory_space<vmem>>, %arg5: memref<32x128xbf16, #tpu.memory_space<vmem>>, %arg6: memref<32x128xbf16, #tpu.memory_space<vmem>>, %arg7: memref<1x128xf32, #tpu.memory_space<vmem>>, %arg8: memref<2x1x32xf32, #tpu.memory_space<vmem>>, %arg9: memref<2x1x32xf32, #tpu.memory_space<vmem>>, %arg10: memref<32x128xbf16, #tpu.memory_space<vmem>>, %arg11: memref<1xf32, #tpu.memory_space<smem>>, %arg12: memref<1x128x128xf32, #tpu.memory_space<vmem>>, %arg13: memref<128x128xf32, #tpu.memory_space<vmem>>, %arg14: memref<144x32xbf16, #tpu.memory_space<vmem>>) attributes {dimension_semantics = [#tpu.dimension_semantics<parallel>], iteration_bounds = array<i64: 1>, scalar_prefetch = 0 : i64, scratch_operands = 2 : i64, tpu.core_type = #tpu.core_type<tc>, window_params = [{transform_indices = @transform_0, window_bounds = array<i64: 1, 128, 4>}, {pipeline_mode = #tpu.pipeline_mode<synchronous>, transform_indices = @transform_1, window_bounds = array<i64: 4, 128>}, {pipeline_mode = #tpu.pipeline_mode<synchronous>, transform_indices = @transform_2, window_bounds = array<i64: 32, 128>}, {pipeline_mode = #tpu.pipeline_mode<synchronous>, transform_indices = @transform_3, window_bounds = array<i64: 1, 128>}, {pipeline_mode = #tpu.pipeline_mode<synchronous>, transform_indices = @transform_4, window_bounds = array<i64: 32, 128>}, {pipeline_mode = #tpu.pipeline_mode<synchronous>, transform_indices = @transform_5, window_bounds = array<i64: 32, 128>}, {pipeline_mode = #tpu.pipeline_mode<synchronous>, transform_indices = @transform_6, window_bounds = array<i64: 1, 128>}, {pipeline_mode = #tpu.pipeline_mode<synchronous>, transform_indices = @transform_7, window_bounds = array<i64: 2, 1, 32>}, {pipeline_mode = #tpu.pipeline_mode<synchronous>, transform_indices = @transform_8, window_bounds = array<i64: 2, 1, 32>}, {pipeline_mode = #tpu.pipeline_mode<synchronous>, transform_indices = @transform_9, window_bounds = array<i64: 32, 128>}, {transform_indices = @transform_10, window_bounds = array<i64: 1>}, {transform_indices = @transform_11, window_bounds = array<i64: 1, 128, 128>}]} {
    %c0 = arith.constant 0 : index
    %c0_0 = arith.constant 0 : index
    %0 = vector.load %arg2[%c0, %c0_0] : memref<4x128xbf16, #tpu.memory_space<vmem>>, vector<4x128xbf16>
    %c0_1 = arith.constant 0 : index
    %c0_2 = arith.constant 0 : index
    %1 = vector.load %arg3[%c0_1, %c0_2] : memref<32x128xbf16, #tpu.memory_space<vmem>>, vector<32x128xbf16>
    %c0_3 = arith.constant 0 : index
    %c0_4 = arith.constant 0 : index
    %2 = vector.load %arg4[%c0_3, %c0_4] : memref<1x128xf32, #tpu.memory_space<vmem>>, vector<1x128xf32>
    %c0_5 = arith.constant 0 : index
    %c0_6 = arith.constant 0 : index
    %c0_7 = arith.constant 0 : index
    %3 = vector.load %arg1[%c0_5, %c0_6, %c0_7] : memref<1x128x4xbf16, #tpu.memory_space<vmem>>, vector<1x128x4xbf16>
    %4 = vector.shape_cast %3 : vector<1x128x4xbf16> to vector<128x4xbf16>
    %cst = arith.constant dense<0.000000e+00> : vector<128x128xf32>
    %5 = tpu.matmul %4, %0, %cst {dimension_numbers = #tpu.dot_dimension_numbers<[1], [0], [0], [1], [0, 0, 1, 1], [], []>} : vector<128x4xbf16>, vector<4x128xbf16>, vector<128x128xf32> -> vector<128x128xf32>
    %6 = vector.broadcast %2 : vector<1x128xf32> to vector<128x128xf32>
    %7 = arith.addf %5, %6 : vector<128x128xf32>
    %c0_8 = arith.constant 0 : index
    %c0_9 = arith.constant 0 : index
    %8 = vector.load %arg13[%c0_8, %c0_9] : memref<128x128xf32, #tpu.memory_space<vmem>>, vector<128x128xf32>
    tpu.vector_store %arg13[%c0_8, %c0_9], %7 {strides = array<i32>} : memref<128x128xf32, #tpu.memory_space<vmem>>, vector<128x128xf32>,
    %c0_10 = arith.constant 0 : index
    %c0_11 = arith.constant 0 : index
    %c0_12 = arith.constant 0 : index
    %9 = vector.load %arg8[%c0_10, %c0_11, %c0_12] : memref<2x1x32xf32, #tpu.memory_space<vmem>>, vector<1x1x32xf32>
    %10 = vector.shape_cast %9 : vector<1x1x32xf32> to vector<1x32xf32>
    %11 = vector.shape_cast %10 : vector<1x32xf32> to vector<1x32xf32>
    %12 = vector.broadcast %11 : vector<1x32xf32> to vector<16x32xf32>
    %c0_13 = arith.constant 0 : index
    %c0_14 = arith.constant 0 : index
    %c0_15 = arith.constant 0 : index
    %13 = vector.load %arg9[%c0_13, %c0_14, %c0_15] : memref<2x1x32xf32, #tpu.memory_space<vmem>>, vector<1x1x32xf32>
    %14 = vector.shape_cast %13 : vector<1x1x32xf32> to vector<1x32xf32>
    %15 = vector.shape_cast %14 : vector<1x32xf32> to vector<1x32xf32>
    %16 = vector.broadcast %15 : vector<1x32xf32> to vector<16x32xf32>
    %c0_16 = arith.constant 0 : index
    %c0_17 = arith.constant 0 : index
    %17 = vector.load %arg13[%c0_16, %c0_17] : memref<128x128xf32, #tpu.memory_space<vmem>>, vector<16x128xf32>
    %18 = arith.truncf %12 : vector<16x32xf32> to vector<16x32xbf16>
    %cst_18 = arith.constant dense<0.000000e+00> : vector<16x128xf32>
    %19 = tpu.matmul %18, %1, %cst_18 {dimension_numbers = #tpu.dot_dimension_numbers<[1], [0], [0], [1], [0, 0, 1, 1], [], []>} : vector<16x32xbf16>, vector<32x128xbf16>, vector<16x128xf32> -> vector<16x128xf32>
    %20 = arith.addf %17, %19 : vector<16x128xf32>
    %21 = arith.negf %20 : vector<16x128xf32>
    %22 = math.exp %21 : vector<16x128xf32>
    %cst_19 = arith.constant 1.000000e+00 : f32
    %23 = vector.broadcast %cst_19 : f32 to vector<16x128xf32>
    %24 = arith.addf %23, %22 : vector<16x128xf32>
    %25 = arith.divf %23, %24 : vector<16x128xf32>
    %26 = math.tanh %20 : vector<16x128xf32>
    %27 = vector.extract_strided_slice %25 {offsets = [0, 0], sizes = [16, 32], strides = [1, 1]} : vector<16x128xf32> to vector<16x32xf32>
    %28 = vector.extract_strided_slice %25 {offsets = [0, 32], sizes = [16, 32], strides = [1, 1]} : vector<16x128xf32> to vector<16x32xf32>
    %29 = vector.extract_strided_slice %25 {offsets = [0, 96], sizes = [16, 32], strides = [1, 1]} : vector<16x128xf32> to vector<16x32xf32>
    %30 = vector.extract_strided_slice %26 {offsets = [0, 64], sizes = [16, 32], strides = [1, 1]} : vector<16x128xf32> to vector<16x32xf32>
    %31 = arith.mulf %28, %16 : vector<16x32xf32>
    %32 = arith.mulf %27, %30 : vector<16x32xf32>
    %33 = arith.addf %31, %32 : vector<16x32xf32>
    %34 = math.tanh %33 : vector<16x32xf32>
    %35 = arith.mulf %29, %34 : vector<16x32xf32>
    %36 = arith.truncf %35 : vector<16x32xf32> to vector<16x32xbf16>
    %c16 = arith.constant 16 : index
    %c0_20 = arith.constant 0 : index
    %37 = vector.load %arg13[%c16, %c0_20] : memref<128x128xf32, #tpu.memory_space<vmem>>, vector<16x128xf32>
    %38 = arith.truncf %35 : vector<16x32xf32> to vector<16x32xbf16>
    %cst_21 = arith.constant dense<0.000000e+00> : vector<16x128xf32>
    %39 = tpu.matmul %38, %1, %cst_21 {dimension_numbers = #tpu.dot_dimension_numbers<[1], [0], [0], [1], [0, 0, 1, 1], [], []>} : vector<16x32xbf16>, vector<32x128xbf16>, vector<16x128xf32> -> vector<16x128xf32>
    %40 = arith.addf %37, %39 : vector<16x128xf32>
    %41 = arith.negf %40 : vector<16x128xf32>
    %42 = math.exp %41 : vector<16x128xf32>
    %cst_22 = arith.constant 1.000000e+00 : f32
    %43 = vector.broadcast %cst_22 : f32 to vector<16x128xf32>
    %44 = arith.addf %43, %42 : vector<16x128xf32>
    %45 = arith.divf %43, %44 : vector<16x128xf32>
    %46 = math.tanh %40 : vector<16x128xf32>
    %47 = vector.extract_strided_slice %45 {offsets = [0, 0], sizes = [16, 32], strides = [1, 1]} : vector<16x128xf32> to vector<16x32xf32>
    %48 = vector.extract_strided_slice %45 {offsets = [0, 32], sizes = [16, 32], strides = [1, 1]} : vector<16x128xf32> to vector<16x32xf32>
    %49 = vector.extract_strided_slice %45 {offsets = [0, 96], sizes = [16, 32], strides = [1, 1]} : vector<16x128xf32> to vector<16x32xf32>
    %50 = vector.extract_strided_slice %46 {offsets = [0, 64], sizes = [16, 32], strides = [1, 1]} : vector<16x128xf32> to vector<16x32xf32>
    %51 = arith.mulf %48, %33 : vector<16x32xf32>
    %52 = arith.mulf %47, %50 : vector<16x32xf32>
    %53 = arith.addf %51, %52 : vector<16x32xf32>
    %54 = math.tanh %53 : vector<16x32xf32>
    %55 = arith.mulf %49, %54 : vector<16x32xf32>
    %56 = arith.truncf %55 : vector<16x32xf32> to vector<16x32xbf16>
    %c32 = arith.constant 32 : index
    %c0_23 = arith.constant 0 : index
    %57 = vector.load %arg13[%c32, %c0_23] : memref<128x128xf32, #tpu.memory_space<vmem>>, vector<16x128xf32>
    %58 = arith.truncf %55 : vector<16x32xf32> to vector<16x32xbf16>
    %cst_24 = arith.constant dense<0.000000e+00> : vector<16x128xf32>
    %59 = tpu.matmul %58, %1, %cst_24 {dimension_numbers = #tpu.dot_dimension_numbers<[1], [0], [0], [1], [0, 0, 1, 1], [], []>} : vector<16x32xbf16>, vector<32x128xbf16>, vector<16x128xf32> -> vector<16x128xf32>
    %60 = arith.addf %57, %59 : vector<16x128xf32>
    %61 = arith.negf %60 : vector<16x128xf32>
    %62 = math.exp %61 : vector<16x128xf32>
    %cst_25 = arith.constant 1.000000e+00 : f32
    %63 = vector.broadcast %cst_25 : f32 to vector<16x128xf32>
    %64 = arith.addf %63, %62 : vector<16x128xf32>
    %65 = arith.divf %63, %64 : vector<16x128xf32>
    %66 = math.tanh %60 : vector<16x128xf32>
    %67 = vector.extract_strided_slice %65 {offsets = [0, 0], sizes = [16, 32], strides = [1, 1]} : vector<16x128xf32> to vector<16x32xf32>
    %68 = vector.extract_strided_slice %65 {offsets = [0, 32], sizes = [16, 32], strides = [1, 1]} : vector<16x128xf32> to vector<16x32xf32>
    %69 = vector.extract_strided_slice %65 {offsets = [0, 96], sizes = [16, 32], strides = [1, 1]} : vector<16x128xf32> to vector<16x32xf32>
    %70 = vector.extract_strided_slice %66 {offsets = [0, 64], sizes = [16, 32], strides = [1, 1]} : vector<16x128xf32> to vector<16x32xf32>
    %71 = arith.mulf %68, %53 : vector<16x32xf32>
    %72 = arith.mulf %67, %70 : vector<16x32xf32>
    %73 = arith.addf %71, %72 : vector<16x32xf32>
    %74 = math.tanh %73 : vector<16x32xf32>
    %75 = arith.mulf %69, %74 : vector<16x32xf32>
    %76 = arith.truncf %75 : vector<16x32xf32> to vector<16x32xbf16>
    %c48 = arith.constant 48 : index
    %c0_26 = arith.constant 0 : index
    %77 = vector.load %arg13[%c48, %c0_26] : memref<128x128xf32, #tpu.memory_space<vmem>>, vector<16x128xf32>
    %78 = arith.truncf %75 : vector<16x32xf32> to vector<16x32xbf16>
    %cst_27 = arith.constant dense<0.000000e+00> : vector<16x128xf32>
    %79 = tpu.matmul %78, %1, %cst_27 {dimension_numbers = #tpu.dot_dimension_numbers<[1], [0], [0], [1], [0, 0, 1, 1], [], []>} : vector<16x32xbf16>, vector<32x128xbf16>, vector<16x128xf32> -> vector<16x128xf32>
    %80 = arith.addf %77, %79 : vector<16x128xf32>
    %81 = arith.negf %80 : vector<16x128xf32>
    %82 = math.exp %81 : vector<16x128xf32>
    %cst_28 = arith.constant 1.000000e+00 : f32
    %83 = vector.broadcast %cst_28 : f32 to vector<16x128xf32>
    %84 = arith.addf %83, %82 : vector<16x128xf32>
    %85 = arith.divf %83, %84 : vector<16x128xf32>
    %86 = math.tanh %80 : vector<16x128xf32>
    %87 = vector.extract_strided_slice %85 {offsets = [0, 0], sizes = [16, 32], strides = [1, 1]} : vector<16x128xf32> to vector<16x32xf32>
    %88 = vector.extract_strided_slice %85 {offsets = [0, 32], sizes = [16, 32], strides = [1, 1]} : vector<16x128xf32> to vector<16x32xf32>
    %89 = vector.extract_strided_slice %85 {offsets = [0, 96], sizes = [16, 32], strides = [1, 1]} : vector<16x128xf32> to vector<16x32xf32>
    %90 = vector.extract_strided_slice %86 {offsets = [0, 64], sizes = [16, 32], strides = [1, 1]} : vector<16x128xf32> to vector<16x32xf32>
    %91 = arith.mulf %88, %73 : vector<16x32xf32>
    %92 = arith.mulf %87, %90 : vector<16x32xf32>
    %93 = arith.addf %91, %92 : vector<16x32xf32>
    %94 = math.tanh %93 : vector<16x32xf32>
    %95 = arith.mulf %89, %94 : vector<16x32xf32>
    %96 = arith.truncf %95 : vector<16x32xf32> to vector<16x32xbf16>
    %c64 = arith.constant 64 : index
    %c0_29 = arith.constant 0 : index
    %97 = vector.load %arg13[%c64, %c0_29] : memref<128x128xf32, #tpu.memory_space<vmem>>, vector<16x128xf32>
    %98 = arith.truncf %95 : vector<16x32xf32> to vector<16x32xbf16>
    %cst_30 = arith.constant dense<0.000000e+00> : vector<16x128xf32>
    %99 = tpu.matmul %98, %1, %cst_30 {dimension_numbers = #tpu.dot_dimension_numbers<[1], [0], [0], [1], [0, 0, 1, 1], [], []>} : vector<16x32xbf16>, vector<32x128xbf16>, vector<16x128xf32> -> vector<16x128xf32>
    %100 = arith.addf %97, %99 : vector<16x128xf32>
    %101 = arith.negf %100 : vector<16x128xf32>
    %102 = math.exp %101 : vector<16x128xf32>
    %cst_31 = arith.constant 1.000000e+00 : f32
    %103 = vector.broadcast %cst_31 : f32 to vector<16x128xf32>
    %104 = arith.addf %103, %102 : vector<16x128xf32>
    %105 = arith.divf %103, %104 : vector<16x128xf32>
    %106 = math.tanh %100 : vector<16x128xf32>
    %107 = vector.extract_strided_slice %105 {offsets = [0, 0], sizes = [16, 32], strides = [1, 1]} : vector<16x128xf32> to vector<16x32xf32>
    %108 = vector.extract_strided_slice %105 {offsets = [0, 32], sizes = [16, 32], strides = [1, 1]} : vector<16x128xf32> to vector<16x32xf32>
    %109 = vector.extract_strided_slice %105 {offsets = [0, 96], sizes = [16, 32], strides = [1, 1]} : vector<16x128xf32> to vector<16x32xf32>
    %110 = vector.extract_strided_slice %106 {offsets = [0, 64], sizes = [16, 32], strides = [1, 1]} : vector<16x128xf32> to vector<16x32xf32>
    %111 = arith.mulf %108, %93 : vector<16x32xf32>
    %112 = arith.mulf %107, %110 : vector<16x32xf32>
    %113 = arith.addf %111, %112 : vector<16x32xf32>
    %114 = math.tanh %113 : vector<16x32xf32>
    %115 = arith.mulf %109, %114 : vector<16x32xf32>
    %116 = arith.truncf %115 : vector<16x32xf32> to vector<16x32xbf16>
    %c80 = arith.constant 80 : index
    %c0_32 = arith.constant 0 : index
    %117 = vector.load %arg13[%c80, %c0_32] : memref<128x128xf32, #tpu.memory_space<vmem>>, vector<16x128xf32>
    %118 = arith.truncf %115 : vector<16x32xf32> to vector<16x32xbf16>
    %cst_33 = arith.constant dense<0.000000e+00> : vector<16x128xf32>
    %119 = tpu.matmul %118, %1, %cst_33 {dimension_numbers = #tpu.dot_dimension_numbers<[1], [0], [0], [1], [0, 0, 1, 1], [], []>} : vector<16x32xbf16>, vector<32x128xbf16>, vector<16x128xf32> -> vector<16x128xf32>
    %120 = arith.addf %117, %119 : vector<16x128xf32>
    %121 = arith.negf %120 : vector<16x128xf32>
    %122 = math.exp %121 : vector<16x128xf32>
    %cst_34 = arith.constant 1.000000e+00 : f32
    %123 = vector.broadcast %cst_34 : f32 to vector<16x128xf32>
    %124 = arith.addf %123, %122 : vector<16x128xf32>
    %125 = arith.divf %123, %124 : vector<16x128xf32>
    %126 = math.tanh %120 : vector<16x128xf32>
    %127 = vector.extract_strided_slice %125 {offsets = [0, 0], sizes = [16, 32], strides = [1, 1]} : vector<16x128xf32> to vector<16x32xf32>
    %128 = vector.extract_strided_slice %125 {offsets = [0, 32], sizes = [16, 32], strides = [1, 1]} : vector<16x128xf32> to vector<16x32xf32>
    %129 = vector.extract_strided_slice %125 {offsets = [0, 96], sizes = [16, 32], strides = [1, 1]} : vector<16x128xf32> to vector<16x32xf32>
    %130 = vector.extract_strided_slice %126 {offsets = [0, 64], sizes = [16, 32], strides = [1, 1]} : vector<16x128xf32> to vector<16x32xf32>
    %131 = arith.mulf %128, %113 : vector<16x32xf32>
    %132 = arith.mulf %127, %130 : vector<16x32xf32>
    %133 = arith.addf %131, %132 : vector<16x32xf32>
    %134 = math.tanh %133 : vector<16x32xf32>
    %135 = arith.mulf %129, %134 : vector<16x32xf32>
    %136 = arith.truncf %135 : vector<16x32xf32> to vector<16x32xbf16>
    %c96 = arith.constant 96 : index
    %c0_35 = arith.constant 0 : index
    %137 = vector.load %arg13[%c96, %c0_35] : memref<128x128xf32, #tpu.memory_space<vmem>>, vector<16x128xf32>
    %138 = arith.truncf %135 : vector<16x32xf32> to vector<16x32xbf16>
    %cst_36 = arith.constant dense<0.000000e+00> : vector<16x128xf32>
    %139 = tpu.matmul %138, %1, %cst_36 {dimension_numbers = #tpu.dot_dimension_numbers<[1], [0], [0], [1], [0, 0, 1, 1], [], []>} : vector<16x32xbf16>, vector<32x128xbf16>, vector<16x128xf32> -> vector<16x128xf32>
    %140 = arith.addf %137, %139 : vector<16x128xf32>
    %141 = arith.negf %140 : vector<16x128xf32>
    %142 = math.exp %141 : vector<16x128xf32>
    %cst_37 = arith.constant 1.000000e+00 : f32
    %143 = vector.broadcast %cst_37 : f32 to vector<16x128xf32>
    %144 = arith.addf %143, %142 : vector<16x128xf32>
    %145 = arith.divf %143, %144 : vector<16x128xf32>
    %146 = math.tanh %140 : vector<16x128xf32>
    %147 = vector.extract_strided_slice %145 {offsets = [0, 0], sizes = [16, 32], strides = [1, 1]} : vector<16x128xf32> to vector<16x32xf32>
    %148 = vector.extract_strided_slice %145 {offsets = [0, 32], sizes = [16, 32], strides = [1, 1]} : vector<16x128xf32> to vector<16x32xf32>
    %149 = vector.extract_strided_slice %145 {offsets = [0, 96], sizes = [16, 32], strides = [1, 1]} : vector<16x128xf32> to vector<16x32xf32>
    %150 = vector.extract_strided_slice %146 {offsets = [0, 64], sizes = [16, 32], strides = [1, 1]} : vector<16x128xf32> to vector<16x32xf32>
    %151 = arith.mulf %148, %133 : vector<16x32xf32>
    %152 = arith.mulf %147, %150 : vector<16x32xf32>
    %153 = arith.addf %151, %152 : vector<16x32xf32>
    %154 = math.tanh %153 : vector<16x32xf32>
    %155 = arith.mulf %149, %154 : vector<16x32xf32>
    %156 = arith.truncf %155 : vector<16x32xf32> to vector<16x32xbf16>
    %c112 = arith.constant 112 : index
    %c0_38 = arith.constant 0 : index
    %157 = vector.load %arg13[%c112, %c0_38] : memref<128x128xf32, #tpu.memory_space<vmem>>, vector<16x128xf32>
    %158 = arith.truncf %155 : vector<16x32xf32> to vector<16x32xbf16>
    %cst_39 = arith.constant dense<0.000000e+00> : vector<16x128xf32>
    %159 = tpu.matmul %158, %1, %cst_39 {dimension_numbers = #tpu.dot_dimension_numbers<[1], [0], [0], [1], [0, 0, 1, 1], [], []>} : vector<16x32xbf16>, vector<32x128xbf16>, vector<16x128xf32> -> vector<16x128xf32>
    %160 = arith.addf %157, %159 : vector<16x128xf32>
    %161 = arith.negf %160 : vector<16x128xf32>
    %162 = math.exp %161 : vector<16x128xf32>
    %cst_40 = arith.constant 1.000000e+00 : f32
    %163 = vector.broadcast %cst_40 : f32 to vector<16x128xf32>
    %164 = arith.addf %163, %162 : vector<16x128xf32>
    %165 = arith.divf %163, %164 : vector<16x128xf32>
    %166 = math.tanh %160 : vector<16x128xf32>
    %167 = vector.extract_strided_slice %165 {offsets = [0, 0], sizes = [16, 32], strides = [1, 1]} : vector<16x128xf32> to vector<16x32xf32>
    %168 = vector.extract_strided_slice %165 {offsets = [0, 32], sizes = [16, 32], strides = [1, 1]} : vector<16x128xf32> to vector<16x32xf32>
    %169 = vector.extract_strided_slice %165 {offsets = [0, 96], sizes = [16, 32], strides = [1, 1]} : vector<16x128xf32> to vector<16x32xf32>
    %170 = vector.extract_strided_slice %166 {offsets = [0, 64], sizes = [16, 32], strides = [1, 1]} : vector<16x128xf32> to vector<16x32xf32>
    %171 = arith.mulf %168, %153 : vector<16x32xf32>
    %172 = arith.mulf %167, %170 : vector<16x32xf32>
    %173 = arith.addf %171, %172 : vector<16x32xf32>
    %174 = math.tanh %173 : vector<16x32xf32>
    %175 = arith.mulf %169, %174 : vector<16x32xf32>
    %176 = arith.truncf %175 : vector<16x32xf32> to vector<16x32xbf16>
    %177 = tpu.concatenate %36, %56, %76, %96, %116, %136, %156, %176 in 0 : vector<16x32xbf16>, vector<16x32xbf16>, vector<16x32xbf16>, vector<16x32xbf16>, vector<16x32xbf16>, vector<16x32xbf16>, vector<16x32xbf16>, vector<16x32xbf16> -> vector<128x32xbf16>
    %c0_41 = arith.constant 0 : index
    %c0_42 = arith.constant 0 : index
    %178 = vector.load %arg14[%c0_41, %c0_42] : memref<144x32xbf16, #tpu.memory_space<vmem>>, vector<128x32xbf16>
    tpu.vector_store %arg14[%c0_41, %c0_42], %177 {strides = array<i32>} : memref<144x32xbf16, #tpu.memory_space<vmem>>, vector<128x32xbf16>,
    %c0_43 = arith.constant 0 : index
    %c0_44 = arith.constant 0 : index
    %179 = vector.load %arg5[%c0_43, %c0_44] : memref<32x128xbf16, #tpu.memory_space<vmem>>, vector<32x128xbf16>
    %c0_45 = arith.constant 0 : index
    %c0_46 = arith.constant 0 : index
    %180 = vector.load %arg6[%c0_45, %c0_46] : memref<32x128xbf16, #tpu.memory_space<vmem>>, vector<32x128xbf16>
    %c0_47 = arith.constant 0 : index
    %c0_48 = arith.constant 0 : index
    %181 = vector.load %arg7[%c0_47, %c0_48] : memref<1x128xf32, #tpu.memory_space<vmem>>, vector<1x128xf32>
    %c0_49 = arith.constant 0 : index
    %c0_50 = arith.constant 0 : index
    %182 = vector.load %arg14[%c0_49, %c0_50] : memref<144x32xbf16, #tpu.memory_space<vmem>>, vector<128x32xbf16>
    %cst_51 = arith.constant dense<0.000000e+00> : vector<128x128xf32>
    %183 = tpu.matmul %182, %179, %cst_51 {dimension_numbers = #tpu.dot_dimension_numbers<[1], [0], [0], [1], [0, 0, 1, 1], [], []>} : vector<128x32xbf16>, vector<32x128xbf16>, vector<128x128xf32> -> vector<128x128xf32>
    %184 = vector.broadcast %181 : vector<1x128xf32> to vector<128x128xf32>
    %185 = arith.addf %183, %184 : vector<128x128xf32>
    %c0_52 = arith.constant 0 : index
    %c0_53 = arith.constant 0 : index
    %186 = vector.load %arg13[%c0_52, %c0_53] : memref<128x128xf32, #tpu.memory_space<vmem>>, vector<128x128xf32>
    tpu.vector_store %arg13[%c0_52, %c0_53], %185 {strides = array<i32>} : memref<128x128xf32, #tpu.memory_space<vmem>>, vector<128x128xf32>,
    %c1 = arith.constant 1 : index
    %c0_54 = arith.constant 0 : index
    %c0_55 = arith.constant 0 : index
    %187 = vector.load %arg8[%c1, %c0_54, %c0_55] : memref<2x1x32xf32, #tpu.memory_space<vmem>>, vector<1x1x32xf32>
    %188 = vector.shape_cast %187 : vector<1x1x32xf32> to vector<1x32xf32>
    %189 = vector.shape_cast %188 : vector<1x32xf32> to vector<1x32xf32>
    %190 = vector.broadcast %189 : vector<1x32xf32> to vector<16x32xf32>
    %191 = arith.truncf %190 : vector<16x32xf32> to vector<16x32xbf16>
    %c0_56 = arith.constant 0 : index
    %c0_57 = arith.constant 0 : index
    %192 = vector.load %arg14[%c0_56, %c0_57] : memref<144x32xbf16, #tpu.memory_space<vmem>>, vector<16x32xbf16>
    tpu.vector_store %arg14[%c0_56, %c0_57], %191 {strides = array<i32>} : memref<144x32xbf16, #tpu.memory_space<vmem>>, vector<16x32xbf16>,
    %c1_58 = arith.constant 1 : index
    %c0_59 = arith.constant 0 : index
    %c0_60 = arith.constant 0 : index
    %193 = vector.load %arg8[%c1_58, %c0_59, %c0_60] : memref<2x1x32xf32, #tpu.memory_space<vmem>>, vector<1x1x32xf32>
    %194 = vector.shape_cast %193 : vector<1x1x32xf32> to vector<1x32xf32>
    %195 = vector.shape_cast %194 : vector<1x32xf32> to vector<1x32xf32>
    %196 = vector.broadcast %195 : vector<1x32xf32> to vector<16x32xf32>
    %c1_61 = arith.constant 1 : index
    %c0_62 = arith.constant 0 : index
    %c0_63 = arith.constant 0 : index
    %197 = vector.load %arg9[%c1_61, %c0_62, %c0_63] : memref<2x1x32xf32, #tpu.memory_space<vmem>>, vector<1x1x32xf32>
    %198 = vector.shape_cast %197 : vector<1x1x32xf32> to vector<1x32xf32>
    %199 = vector.shape_cast %198 : vector<1x32xf32> to vector<1x32xf32>
    %200 = vector.broadcast %199 : vector<1x32xf32> to vector<16x32xf32>
    %c0_64 = arith.constant 0 : index
    %c0_65 = arith.constant 0 : index
    %201 = vector.load %arg13[%c0_64, %c0_65] : memref<128x128xf32, #tpu.memory_space<vmem>>, vector<16x128xf32>
    %202 = arith.truncf %196 : vector<16x32xf32> to vector<16x32xbf16>
    %cst_66 = arith.constant dense<0.000000e+00> : vector<16x128xf32>
    %203 = tpu.matmul %202, %180, %cst_66 {dimension_numbers = #tpu.dot_dimension_numbers<[1], [0], [0], [1], [0, 0, 1, 1], [], []>} : vector<16x32xbf16>, vector<32x128xbf16>, vector<16x128xf32> -> vector<16x128xf32>
    %204 = arith.addf %201, %203 : vector<16x128xf32>
    %205 = arith.negf %204 : vector<16x128xf32>
    %206 = math.exp %205 : vector<16x128xf32>
    %cst_67 = arith.constant 1.000000e+00 : f32
    %207 = vector.broadcast %cst_67 : f32 to vector<16x128xf32>
    %208 = arith.addf %207, %206 : vector<16x128xf32>
    %209 = arith.divf %207, %208 : vector<16x128xf32>
    %210 = math.tanh %204 : vector<16x128xf32>
    %211 = vector.extract_strided_slice %209 {offsets = [0, 0], sizes = [16, 32], strides = [1, 1]} : vector<16x128xf32> to vector<16x32xf32>
    %212 = vector.extract_strided_slice %209 {offsets = [0, 32], sizes = [16, 32], strides = [1, 1]} : vector<16x128xf32> to vector<16x32xf32>
    %213 = vector.extract_strided_slice %209 {offsets = [0, 96], sizes = [16, 32], strides = [1, 1]} : vector<16x128xf32> to vector<16x32xf32>
    %214 = vector.extract_strided_slice %210 {offsets = [0, 64], sizes = [16, 32], strides = [1, 1]} : vector<16x128xf32> to vector<16x32xf32>
    %215 = arith.mulf %212, %200 : vector<16x32xf32>
    %216 = arith.mulf %211, %214 : vector<16x32xf32>
    %217 = arith.addf %215, %216 : vector<16x32xf32>
    %218 = math.tanh %217 : vector<16x32xf32>
    %219 = arith.mulf %213, %218 : vector<16x32xf32>
    %220 = arith.truncf %219 : vector<16x32xf32> to vector<16x32xbf16>
    %c16_68 = arith.constant 16 : index
    %c0_69 = arith.constant 0 : index
    %221 = vector.load %arg13[%c16_68, %c0_69] : memref<128x128xf32, #tpu.memory_space<vmem>>, vector<16x128xf32>
    %222 = arith.truncf %219 : vector<16x32xf32> to vector<16x32xbf16>
    %cst_70 = arith.constant dense<0.000000e+00> : vector<16x128xf32>
    %223 = tpu.matmul %222, %180, %cst_70 {dimension_numbers = #tpu.dot_dimension_numbers<[1], [0], [0], [1], [0, 0, 1, 1], [], []>} : vector<16x32xbf16>, vector<32x128xbf16>, vector<16x128xf32> -> vector<16x128xf32>
    %224 = arith.addf %221, %223 : vector<16x128xf32>
    %225 = arith.negf %224 : vector<16x128xf32>
    %226 = math.exp %225 : vector<16x128xf32>
    %cst_71 = arith.constant 1.000000e+00 : f32
    %227 = vector.broadcast %cst_71 : f32 to vector<16x128xf32>
    %228 = arith.addf %227, %226 : vector<16x128xf32>
    %229 = arith.divf %227, %228 : vector<16x128xf32>
    %230 = math.tanh %224 : vector<16x128xf32>
    %231 = vector.extract_strided_slice %229 {offsets = [0, 0], sizes = [16, 32], strides = [1, 1]} : vector<16x128xf32> to vector<16x32xf32>
    %232 = vector.extract_strided_slice %229 {offsets = [0, 32], sizes = [16, 32], strides = [1, 1]} : vector<16x128xf32> to vector<16x32xf32>
    %233 = vector.extract_strided_slice %229 {offsets = [0, 96], sizes = [16, 32], strides = [1, 1]} : vector<16x128xf32> to vector<16x32xf32>
    %234 = vector.extract_strided_slice %230 {offsets = [0, 64], sizes = [16, 32], strides = [1, 1]} : vector<16x128xf32> to vector<16x32xf32>
    %235 = arith.mulf %232, %217 : vector<16x32xf32>
    %236 = arith.mulf %231, %234 : vector<16x32xf32>
    %237 = arith.addf %235, %236 : vector<16x32xf32>
    %238 = math.tanh %237 : vector<16x32xf32>
    %239 = arith.mulf %233, %238 : vector<16x32xf32>
    %240 = arith.truncf %239 : vector<16x32xf32> to vector<16x32xbf16>
    %c32_72 = arith.constant 32 : index
    %c0_73 = arith.constant 0 : index
    %241 = vector.load %arg13[%c32_72, %c0_73] : memref<128x128xf32, #tpu.memory_space<vmem>>, vector<16x128xf32>
    %242 = arith.truncf %239 : vector<16x32xf32> to vector<16x32xbf16>
    %cst_74 = arith.constant dense<0.000000e+00> : vector<16x128xf32>
    %243 = tpu.matmul %242, %180, %cst_74 {dimension_numbers = #tpu.dot_dimension_numbers<[1], [0], [0], [1], [0, 0, 1, 1], [], []>} : vector<16x32xbf16>, vector<32x128xbf16>, vector<16x128xf32> -> vector<16x128xf32>
    %244 = arith.addf %241, %243 : vector<16x128xf32>
    %245 = arith.negf %244 : vector<16x128xf32>
    %246 = math.exp %245 : vector<16x128xf32>
    %cst_75 = arith.constant 1.000000e+00 : f32
    %247 = vector.broadcast %cst_75 : f32 to vector<16x128xf32>
    %248 = arith.addf %247, %246 : vector<16x128xf32>
    %249 = arith.divf %247, %248 : vector<16x128xf32>
    %250 = math.tanh %244 : vector<16x128xf32>
    %251 = vector.extract_strided_slice %249 {offsets = [0, 0], sizes = [16, 32], strides = [1, 1]} : vector<16x128xf32> to vector<16x32xf32>
    %252 = vector.extract_strided_slice %249 {offsets = [0, 32], sizes = [16, 32], strides = [1, 1]} : vector<16x128xf32> to vector<16x32xf32>
    %253 = vector.extract_strided_slice %249 {offsets = [0, 96], sizes = [16, 32], strides = [1, 1]} : vector<16x128xf32> to vector<16x32xf32>
    %254 = vector.extract_strided_slice %250 {offsets = [0, 64], sizes = [16, 32], strides = [1, 1]} : vector<16x128xf32> to vector<16x32xf32>
    %255 = arith.mulf %252, %237 : vector<16x32xf32>
    %256 = arith.mulf %251, %254 : vector<16x32xf32>
    %257 = arith.addf %255, %256 : vector<16x32xf32>
    %258 = math.tanh %257 : vector<16x32xf32>
    %259 = arith.mulf %253, %258 : vector<16x32xf32>
    %260 = arith.truncf %259 : vector<16x32xf32> to vector<16x32xbf16>
    %c48_76 = arith.constant 48 : index
    %c0_77 = arith.constant 0 : index
    %261 = vector.load %arg13[%c48_76, %c0_77] : memref<128x128xf32, #tpu.memory_space<vmem>>, vector<16x128xf32>
    %262 = arith.truncf %259 : vector<16x32xf32> to vector<16x32xbf16>
    %cst_78 = arith.constant dense<0.000000e+00> : vector<16x128xf32>
    %263 = tpu.matmul %262, %180, %cst_78 {dimension_numbers = #tpu.dot_dimension_numbers<[1], [0], [0], [1], [0, 0, 1, 1], [], []>} : vector<16x32xbf16>, vector<32x128xbf16>, vector<16x128xf32> -> vector<16x128xf32>
    %264 = arith.addf %261, %263 : vector<16x128xf32>
    %265 = arith.negf %264 : vector<16x128xf32>
    %266 = math.exp %265 : vector<16x128xf32>
    %cst_79 = arith.constant 1.000000e+00 : f32
    %267 = vector.broadcast %cst_79 : f32 to vector<16x128xf32>
    %268 = arith.addf %267, %266 : vector<16x128xf32>
    %269 = arith.divf %267, %268 : vector<16x128xf32>
    %270 = math.tanh %264 : vector<16x128xf32>
    %271 = vector.extract_strided_slice %269 {offsets = [0, 0], sizes = [16, 32], strides = [1, 1]} : vector<16x128xf32> to vector<16x32xf32>
    %272 = vector.extract_strided_slice %269 {offsets = [0, 32], sizes = [16, 32], strides = [1, 1]} : vector<16x128xf32> to vector<16x32xf32>
    %273 = vector.extract_strided_slice %269 {offsets = [0, 96], sizes = [16, 32], strides = [1, 1]} : vector<16x128xf32> to vector<16x32xf32>
    %274 = vector.extract_strided_slice %270 {offsets = [0, 64], sizes = [16, 32], strides = [1, 1]} : vector<16x128xf32> to vector<16x32xf32>
    %275 = arith.mulf %272, %257 : vector<16x32xf32>
    %276 = arith.mulf %271, %274 : vector<16x32xf32>
    %277 = arith.addf %275, %276 : vector<16x32xf32>
    %278 = math.tanh %277 : vector<16x32xf32>
    %279 = arith.mulf %273, %278 : vector<16x32xf32>
    %280 = arith.truncf %279 : vector<16x32xf32> to vector<16x32xbf16>
    %c64_80 = arith.constant 64 : index
    %c0_81 = arith.constant 0 : index
    %281 = vector.load %arg13[%c64_80, %c0_81] : memref<128x128xf32, #tpu.memory_space<vmem>>, vector<16x128xf32>
    %282 = arith.truncf %279 : vector<16x32xf32> to vector<16x32xbf16>
    %cst_82 = arith.constant dense<0.000000e+00> : vector<16x128xf32>
    %283 = tpu.matmul %282, %180, %cst_82 {dimension_numbers = #tpu.dot_dimension_numbers<[1], [0], [0], [1], [0, 0, 1, 1], [], []>} : vector<16x32xbf16>, vector<32x128xbf16>, vector<16x128xf32> -> vector<16x128xf32>
    %284 = arith.addf %281, %283 : vector<16x128xf32>
    %285 = arith.negf %284 : vector<16x128xf32>
    %286 = math.exp %285 : vector<16x128xf32>
    %cst_83 = arith.constant 1.000000e+00 : f32
    %287 = vector.broadcast %cst_83 : f32 to vector<16x128xf32>
    %288 = arith.addf %287, %286 : vector<16x128xf32>
    %289 = arith.divf %287, %288 : vector<16x128xf32>
    %290 = math.tanh %284 : vector<16x128xf32>
    %291 = vector.extract_strided_slice %289 {offsets = [0, 0], sizes = [16, 32], strides = [1, 1]} : vector<16x128xf32> to vector<16x32xf32>
    %292 = vector.extract_strided_slice %289 {offsets = [0, 32], sizes = [16, 32], strides = [1, 1]} : vector<16x128xf32> to vector<16x32xf32>
    %293 = vector.extract_strided_slice %289 {offsets = [0, 96], sizes = [16, 32], strides = [1, 1]} : vector<16x128xf32> to vector<16x32xf32>
    %294 = vector.extract_strided_slice %290 {offsets = [0, 64], sizes = [16, 32], strides = [1, 1]} : vector<16x128xf32> to vector<16x32xf32>
    %295 = arith.mulf %292, %277 : vector<16x32xf32>
    %296 = arith.mulf %291, %294 : vector<16x32xf32>
    %297 = arith.addf %295, %296 : vector<16x32xf32>
    %298 = math.tanh %297 : vector<16x32xf32>
    %299 = arith.mulf %293, %298 : vector<16x32xf32>
    %300 = arith.truncf %299 : vector<16x32xf32> to vector<16x32xbf16>
    %c80_84 = arith.constant 80 : index
    %c0_85 = arith.constant 0 : index
    %301 = vector.load %arg13[%c80_84, %c0_85] : memref<128x128xf32, #tpu.memory_space<vmem>>, vector<16x128xf32>
    %302 = arith.truncf %299 : vector<16x32xf32> to vector<16x32xbf16>
    %cst_86 = arith.constant dense<0.000000e+00> : vector<16x128xf32>
    %303 = tpu.matmul %302, %180, %cst_86 {dimension_numbers = #tpu.dot_dimension_numbers<[1], [0], [0], [1], [0, 0, 1, 1], [], []>} : vector<16x32xbf16>, vector<32x128xbf16>, vector<16x128xf32> -> vector<16x128xf32>
    %304 = arith.addf %301, %303 : vector<16x128xf32>
    %305 = arith.negf %304 : vector<16x128xf32>
    %306 = math.exp %305 : vector<16x128xf32>
    %cst_87 = arith.constant 1.000000e+00 : f32
    %307 = vector.broadcast %cst_87 : f32 to vector<16x128xf32>
    %308 = arith.addf %307, %306 : vector<16x128xf32>
    %309 = arith.divf %307, %308 : vector<16x128xf32>
    %310 = math.tanh %304 : vector<16x128xf32>
    %311 = vector.extract_strided_slice %309 {offsets = [0, 0], sizes = [16, 32], strides = [1, 1]} : vector<16x128xf32> to vector<16x32xf32>
    %312 = vector.extract_strided_slice %309 {offsets = [0, 32], sizes = [16, 32], strides = [1, 1]} : vector<16x128xf32> to vector<16x32xf32>
    %313 = vector.extract_strided_slice %309 {offsets = [0, 96], sizes = [16, 32], strides = [1, 1]} : vector<16x128xf32> to vector<16x32xf32>
    %314 = vector.extract_strided_slice %310 {offsets = [0, 64], sizes = [16, 32], strides = [1, 1]} : vector<16x128xf32> to vector<16x32xf32>
    %315 = arith.mulf %312, %297 : vector<16x32xf32>
    %316 = arith.mulf %311, %314 : vector<16x32xf32>
    %317 = arith.addf %315, %316 : vector<16x32xf32>
    %318 = math.tanh %317 : vector<16x32xf32>
    %319 = arith.mulf %313, %318 : vector<16x32xf32>
    %320 = arith.truncf %319 : vector<16x32xf32> to vector<16x32xbf16>
    %c96_88 = arith.constant 96 : index
    %c0_89 = arith.constant 0 : index
    %321 = vector.load %arg13[%c96_88, %c0_89] : memref<128x128xf32, #tpu.memory_space<vmem>>, vector<16x128xf32>
    %322 = arith.truncf %319 : vector<16x32xf32> to vector<16x32xbf16>
    %cst_90 = arith.constant dense<0.000000e+00> : vector<16x128xf32>
    %323 = tpu.matmul %322, %180, %cst_90 {dimension_numbers = #tpu.dot_dimension_numbers<[1], [0], [0], [1], [0, 0, 1, 1], [], []>} : vector<16x32xbf16>, vector<32x128xbf16>, vector<16x128xf32> -> vector<16x128xf32>
    %324 = arith.addf %321, %323 : vector<16x128xf32>
    %325 = arith.negf %324 : vector<16x128xf32>
    %326 = math.exp %325 : vector<16x128xf32>
    %cst_91 = arith.constant 1.000000e+00 : f32
    %327 = vector.broadcast %cst_91 : f32 to vector<16x128xf32>
    %328 = arith.addf %327, %326 : vector<16x128xf32>
    %329 = arith.divf %327, %328 : vector<16x128xf32>
    %330 = math.tanh %324 : vector<16x128xf32>
    %331 = vector.extract_strided_slice %329 {offsets = [0, 0], sizes = [16, 32], strides = [1, 1]} : vector<16x128xf32> to vector<16x32xf32>
    %332 = vector.extract_strided_slice %329 {offsets = [0, 32], sizes = [16, 32], strides = [1, 1]} : vector<16x128xf32> to vector<16x32xf32>
    %333 = vector.extract_strided_slice %329 {offsets = [0, 96], sizes = [16, 32], strides = [1, 1]} : vector<16x128xf32> to vector<16x32xf32>
    %334 = vector.extract_strided_slice %330 {offsets = [0, 64], sizes = [16, 32], strides = [1, 1]} : vector<16x128xf32> to vector<16x32xf32>
    %335 = arith.mulf %332, %317 : vector<16x32xf32>
    %336 = arith.mulf %331, %334 : vector<16x32xf32>
    %337 = arith.addf %335, %336 : vector<16x32xf32>
    %338 = math.tanh %337 : vector<16x32xf32>
    %339 = arith.mulf %333, %338 : vector<16x32xf32>
    %340 = arith.truncf %339 : vector<16x32xf32> to vector<16x32xbf16>
    %c112_92 = arith.constant 112 : index
    %c0_93 = arith.constant 0 : index
    %341 = vector.load %arg13[%c112_92, %c0_93] : memref<128x128xf32, #tpu.memory_space<vmem>>, vector<16x128xf32>
    %342 = arith.truncf %339 : vector<16x32xf32> to vector<16x32xbf16>
    %cst_94 = arith.constant dense<0.000000e+00> : vector<16x128xf32>
    %343 = tpu.matmul %342, %180, %cst_94 {dimension_numbers = #tpu.dot_dimension_numbers<[1], [0], [0], [1], [0, 0, 1, 1], [], []>} : vector<16x32xbf16>, vector<32x128xbf16>, vector<16x128xf32> -> vector<16x128xf32>
    %344 = arith.addf %341, %343 : vector<16x128xf32>
    %345 = arith.negf %344 : vector<16x128xf32>
    %346 = math.exp %345 : vector<16x128xf32>
    %cst_95 = arith.constant 1.000000e+00 : f32
    %347 = vector.broadcast %cst_95 : f32 to vector<16x128xf32>
    %348 = arith.addf %347, %346 : vector<16x128xf32>
    %349 = arith.divf %347, %348 : vector<16x128xf32>
    %350 = math.tanh %344 : vector<16x128xf32>
    %351 = vector.extract_strided_slice %349 {offsets = [0, 0], sizes = [16, 32], strides = [1, 1]} : vector<16x128xf32> to vector<16x32xf32>
    %352 = vector.extract_strided_slice %349 {offsets = [0, 32], sizes = [16, 32], strides = [1, 1]} : vector<16x128xf32> to vector<16x32xf32>
    %353 = vector.extract_strided_slice %349 {offsets = [0, 96], sizes = [16, 32], strides = [1, 1]} : vector<16x128xf32> to vector<16x32xf32>
    %354 = vector.extract_strided_slice %350 {offsets = [0, 64], sizes = [16, 32], strides = [1, 1]} : vector<16x128xf32> to vector<16x32xf32>
    %355 = arith.mulf %352, %337 : vector<16x32xf32>
    %356 = arith.mulf %351, %354 : vector<16x32xf32>
    %357 = arith.addf %355, %356 : vector<16x32xf32>
    %358 = math.tanh %357 : vector<16x32xf32>
    %359 = arith.mulf %353, %358 : vector<16x32xf32>
    %360 = arith.truncf %359 : vector<16x32xf32> to vector<16x32xbf16>
    %361 = tpu.concatenate %220, %240, %260, %280, %300, %320, %340, %360 in 0 : vector<16x32xbf16>, vector<16x32xbf16>, vector<16x32xbf16>, vector<16x32xbf16>, vector<16x32xbf16>, vector<16x32xbf16>, vector<16x32xbf16>, vector<16x32xbf16> -> vector<128x32xbf16>
    %c16_96 = arith.constant 16 : index
    %c0_97 = arith.constant 0 : index
    %362 = vector.load %arg14[%c16_96, %c0_97] : memref<144x32xbf16, #tpu.memory_space<vmem>>, vector<128x32xbf16>
    tpu.vector_store %arg14[%c16_96, %c0_97], %361 {strides = array<i32>} : memref<144x32xbf16, #tpu.memory_space<vmem>>, vector<128x32xbf16>,
    %c0_98 = arith.constant 0 : index
    %363 = memref.load %arg11[%c0_98] : memref<1xf32, #tpu.memory_space<smem>>
    %cst_99 = arith.constant 1.000000e+00 : f32
    %364 = arith.divf %cst_99, %363 : f32
    %c0_100 = arith.constant 0 : index
    %c0_101 = arith.constant 0 : index
    %365 = vector.load %arg14[%c0_100, %c0_101] : memref<144x32xbf16, #tpu.memory_space<vmem>>, vector<128x32xbf16>
    %c0_102 = arith.constant 0 : index
    %c0_103 = arith.constant 0 : index
    %366 = vector.load %arg10[%c0_102, %c0_103] : memref<32x128xbf16, #tpu.memory_space<vmem>>, vector<32x128xbf16>
    %cst_104 = arith.constant dense<0.000000e+00> : vector<128x128xf32>
    %367 = tpu.matmul %365, %366, %cst_104 {dimension_numbers = #tpu.dot_dimension_numbers<[1], [0], [0], [1], [0, 0, 1, 1], [], []>} : vector<128x32xbf16>, vector<32x128xbf16>, vector<128x128xf32> -> vector<128x128xf32>
    %368 = vector.broadcast %364 : f32 to vector<128x128xf32>
    %369 = arith.mulf %367, %368 : vector<128x128xf32>
    %cst_105 = arith.constant 0.000000e+00 : f32
    %370 = vector.broadcast %cst_105 : f32 to vector<128x128xf32>
    %371 = arith.maximumf %369, %370 : vector<128x128xf32>
    %372 = math.absf %369 : vector<128x128xf32>
    %cst_106 = arith.constant 0.000000e+00 : f32
    %373 = vector.broadcast %cst_106 : f32 to vector<128x128xf32>
    %374 = arith.subf %373, %372 : vector<128x128xf32>
    %375 = math.exp %374 : vector<128x128xf32>
    %cst_107 = arith.constant 1.000000e+00 : f32
    %376 = vector.broadcast %cst_107 : f32 to vector<128x128xf32>
    %377 = arith.addf %376, %375 : vector<128x128xf32>
    %378 = math.log %377 : vector<128x128xf32>
    %379 = arith.addf %371, %378 : vector<128x128xf32>
    %380 = vector.broadcast %363 : f32 to vector<128x128xf32>
    %381 = arith.mulf %380, %379 : vector<128x128xf32>
    %c0_108 = arith.constant 0 : index
    %c0_109 = arith.constant 0 : index
    %c0_110 = arith.constant 0 : index
    %382 = vector.load %arg12[%c0_108, %c0_109, %c0_110] : memref<1x128x128xf32, #tpu.memory_space<vmem>>, vector<1x128x128xf32>
    %383 = vector.shape_cast %382 : vector<1x128x128xf32> to vector<128x128xf32>
    %384 = vector.shape_cast %381 : vector<128x128xf32> to vector<1x128x128xf32>
    tpu.vector_store %arg12[%c0_108, %c0_109, %c0_110], %384 {strides = array<i32>} : memref<1x128x128xf32, #tpu.memory_space<vmem>>, vector<1x128x128xf32>,
    return
  }
  func.func @transform_0(%arg0: i32) -> (i32, i32, i32) {
    %c0_i32 = arith.constant 0 : i32
    %c0_i32_0 = arith.constant 0 : i32
    %c0_i32_1 = arith.constant 0 : i32
    return %arg0, %c0_i32, %c0_i32_0 : i32, i32, i32
  }
  func.func @transform_1(%arg0: i32) -> (i32, i32) {
    %c0_i32 = arith.constant 0 : i32
    %c0_i32_0 = arith.constant 0 : i32
    %c0_i32_1 = arith.constant 0 : i32
    return %c0_i32, %c0_i32_0 : i32, i32
  }
  func.func @transform_2(%arg0: i32) -> (i32, i32) {
    %c0_i32 = arith.constant 0 : i32
    %c0_i32_0 = arith.constant 0 : i32
    %c0_i32_1 = arith.constant 0 : i32
    return %c0_i32, %c0_i32_0 : i32, i32
  }
  func.func @transform_3(%arg0: i32) -> (i32, i32) {
    %c0_i32 = arith.constant 0 : i32
    %c0_i32_0 = arith.constant 0 : i32
    %c0_i32_1 = arith.constant 0 : i32
    return %c0_i32, %c0_i32_0 : i32, i32
  }
  func.func @transform_4(%arg0: i32) -> (i32, i32) {
    %c0_i32 = arith.constant 0 : i32
    %c0_i32_0 = arith.constant 0 : i32
    %c0_i32_1 = arith.constant 0 : i32
    return %c0_i32, %c0_i32_0 : i32, i32
  }
  func.func @transform_5(%arg0: i32) -> (i32, i32) {
    %c0_i32 = arith.constant 0 : i32
    %c0_i32_0 = arith.constant 0 : i32
    %c0_i32_1 = arith.constant 0 : i32
    return %c0_i32, %c0_i32_0 : i32, i32
  }
  func.func @transform_6(%arg0: i32) -> (i32, i32) {
    %c0_i32 = arith.constant 0 : i32
    %c0_i32_0 = arith.constant 0 : i32
    %c0_i32_1 = arith.constant 0 : i32
    return %c0_i32, %c0_i32_0 : i32, i32
  }
  func.func @transform_7(%arg0: i32) -> (i32, i32, i32) {
    %c0_i32 = arith.constant 0 : i32
    %c0_i32_0 = arith.constant 0 : i32
    %c0_i32_1 = arith.constant 0 : i32
    %c0_i32_2 = arith.constant 0 : i32
    return %c0_i32, %c0_i32_0, %c0_i32_1 : i32, i32, i32
  }
  func.func @transform_8(%arg0: i32) -> (i32, i32, i32) {
    %c0_i32 = arith.constant 0 : i32
    %c0_i32_0 = arith.constant 0 : i32
    %c0_i32_1 = arith.constant 0 : i32
    %c0_i32_2 = arith.constant 0 : i32
    return %c0_i32, %c0_i32_0, %c0_i32_1 : i32, i32, i32
  }
  func.func @transform_9(%arg0: i32) -> (i32, i32) {
    %c0_i32 = arith.constant 0 : i32
    %c0_i32_0 = arith.constant 0 : i32
    %c0_i32_1 = arith.constant 0 : i32
    return %c0_i32, %c0_i32_0 : i32, i32
  }
  func.func @transform_10(%arg0: i32) -> i32 {
    %c0_i32 = arith.constant 0 : i32
    %c0_i32_0 = arith.constant 0 : i32
    return %c0_i32 : i32
  }
  func.func @transform_11(%arg0: i32) -> (i32, i32, i32) {
    %c0_i32 = arith.constant 0 : i32
    %c0_i32_0 = arith.constant 0 : i32
    %c0_i32_1 = arith.constant 0 : i32
    return %arg0, %c0_i32, %c0_i32_0 : i32, i32, i32
  }
}

</mosaic_0001>

<llo_original>
// kernel: tpu_custom_call.1
$region0: #{tpu_custom_call.1}
  #allocation0 [shape = 'u32[]', space=smem, size = 0x4, offset = 0x4, fixed_abs, tag = 'smem constant byte address 0x4 - core index']
  #allocation1 [shape = 'u32[144,128]{1,0:T(1,128)}', space=vmem, size = 0x12000, scoped, tag = 'internal scratch']
  #allocation2 [shape = 'f32[128,128]{1,0:T(8,128)}', space=vmem, size = 0x10000, scoped, tag = 'scratch operand']
  #allocation3 [shape = 'bf16[144,32]{1,0:T(8,128)(2,1)}', space=vmem, size = 0x9000, scoped, tag = 'scratch operand']
  #allocation4 [shape = 'f32[1]{0:T(128)S(6)}', space=smem, size = 0x200, scoped, tag = 'scoped memory for tpu_custom_call.1']
  %s0 = inlined_call_operand.vmem [shape: bf16[1,128,4], index: 0, kind: input, shape index: {}]
  %s1 = inlined_call_operand.vmem [shape: bf16[4,128], index: 1, kind: input, shape index: {}]
  %s2 = inlined_call_operand.vmem [shape: bf16[32,128], index: 2, kind: input, shape index: {}]
  %s3 = inlined_call_operand.vmem [shape: f32[1,128], index: 3, kind: input, shape index: {}]
  %s4 = inlined_call_operand.vmem [shape: bf16[32,128], index: 4, kind: input, shape index: {}]
  %s5 = inlined_call_operand.vmem [shape: bf16[32,128], index: 5, kind: input, shape index: {}]
  %s6 = inlined_call_operand.vmem [shape: f32[1,128], index: 6, kind: input, shape index: {}]
  %s7 = inlined_call_operand.vmem [shape: f32[2,1,32], index: 7, kind: input, shape index: {}]
  %s8 = inlined_call_operand.vmem [shape: f32[2,1,32], index: 8, kind: input, shape index: {}]
  %s9 = inlined_call_operand.vmem [shape: bf16[32,128], index: 9, kind: input, shape index: {}]
  %s10 = inlined_call_operand.<no memory space> [shape: f32[1], index: 10, kind: input, shape index: {}]
  %s11 = inlined_call_operand.hbm [shape: f32[1,128,128], index: 11, kind: output, shape index: {}]
  %s12 = sld [smem:[#allocation0]]
  $region54: #{tpu_custom_call.1} parent=0
    _
  %s14 = ssub.s32 1, %s12
  %s15 = scalar_select 0, %s14, %s12
  %16 = sst [smem:[#allocation4]] %s10
  $region1: #{tpu_custom_call.1} parent=0
    #allocation5 [shape = 'u8[65536]{0}', space=vmem, size = 0x10000, scoped, tag = 'output window, operand 0, single buffered']
    #allocation6 [shape = 's32[1]{0}', space=sflag, size = 0x4, scoped, tag = 'scoped memory for tpu_custom_call.1']
    %17 = vsyncpa [#allocation6], 0
    // Predicated region
    $region2: #{tpu_custom_call.1} parent=1 // pred_check
      _
    $region3: #{tpu_custom_call.1} parent=1 // pred_check_branch
      %19 = sbr.rel (0) target = $region5
    $region4: #{tpu_custom_call.1} parent=1 // pred_region
      _
    $region5: #{tpu_custom_call.1} parent=1 // pred_fallthru
      _
    // Predicated region
    $region6: #{tpu_custom_call.1} parent=1 // pred_check
      _
    $region7: #{tpu_custom_call.1} parent=1 // pred_check_branch
      %21 = sbr.rel (0) target = $region9
    $region8: #{tpu_custom_call.1} parent=1 // pred_region
      _
    $region9: #{tpu_custom_call.1} parent=1 // pred_fallthru
      _
    // Predicated region
    $region10: #{tpu_custom_call.1} parent=1 // pred_check
      _
    $region11: #{tpu_custom_call.1} parent=1 // pred_check_branch
      %23 = sbr.rel (0) target = $region13
    $region12: #{tpu_custom_call.1} parent=1 // pred_region
      _
    $region13: #{tpu_custom_call.1} parent=1 // pred_fallthru
      _
    // Predicated region
    $region14: #{tpu_custom_call.1} parent=1 // pred_check
      _
    $region15: #{tpu_custom_call.1} parent=1 // pred_check_branch
      %25 = sbr.rel (0) target = $region17
    $region16: #{tpu_custom_call.1} parent=1 // pred_region
      _
    $region17: #{tpu_custom_call.1} parent=1 // pred_fallthru
      _
    // Predicated region
    $region18: #{tpu_custom_call.1} parent=1 // pred_check
      _
    $region19: #{tpu_custom_call.1} parent=1 // pred_check_branch
      %27 = sbr.rel (0) target = $region21
    $region20: #{tpu_custom_call.1} parent=1 // pred_region
      _
    $region21: #{tpu_custom_call.1} parent=1 // pred_fallthru
      _
    // Predicated region
    $region22: #{tpu_custom_call.1} parent=1 // pred_check
      _
    $region23: #{tpu_custom_call.1} parent=1 // pred_check_branch
      %29 = sbr.rel (0) target = $region25
    $region24: #{tpu_custom_call.1} parent=1 // pred_region
      _
    $region25: #{tpu_custom_call.1} parent=1 // pred_fallthru
      _
    // Predicated region
    $region26: #{tpu_custom_call.1} parent=1 // pred_check
      _
    $region27: #{tpu_custom_call.1} parent=1 // pred_check_branch
      %31 = sbr.rel (0) target = $region29
    $region28: #{tpu_custom_call.1} parent=1 // pred_region
      _
    $region29: #{tpu_custom_call.1} parent=1 // pred_fallthru
      _
    // Predicated region
    $region30: #{tpu_custom_call.1} parent=1 // pred_check
      _
    $region31: #{tpu_custom_call.1} parent=1 // pred_check_branch
      %33 = sbr.rel (0) target = $region33
    $region32: #{tpu_custom_call.1} parent=1 // pred_region
      _
    $region33: #{tpu_custom_call.1} parent=1 // pred_fallthru
      _
    // Predicated region
    $region34: #{tpu_custom_call.1} parent=1 // pred_check
      _
    $region35: #{tpu_custom_call.1} parent=1 // pred_check_branch
      %35 = sbr.rel (0) target = $region37
    $region36: #{tpu_custom_call.1} parent=1 // pred_region
      _
    $region37: #{tpu_custom_call.1} parent=1 // pred_fallthru
      _
    // Predicated region
    $region38: #{tpu_custom_call.1} parent=1 // pred_check
      _
    $region39: #{tpu_custom_call.1} parent=1 // pred_check_branch
      %37 = sbr.rel (0) target = $region41
    $region40: #{tpu_custom_call.1} parent=1 // pred_region
      _
    $region41: #{tpu_custom_call.1} parent=1 // pred_fallthru
      _
    // Predicated region
    $region42: #{tpu_custom_call.1} parent=1 // pred_check
      _
    $region43: #{tpu_custom_call.1} parent=1 // pred_check_branch
      %39 = sbr.rel (0) target = $region45
    $region44: #{tpu_custom_call.1} parent=1 // pred_region
      _
    $region45: #{tpu_custom_call.1} parent=1 // pred_fallthru
      _
    %v41 = vld [vmem:[%s1] sm:$0x3]
    %v42 = vld [vmem:[%s2] sm:$0xf]
    %v43 = vld [vmem:[%s2 + $0x4] sm:$0xf]
    %v44 = vld [vmem:[%s2 + $0x8] sm:$0xf]
    %v45 = vld [vmem:[%s2 + $0xc] sm:$0xf]
    %v46 = vld [vmem:[%s3] sm:$0x1]
    %v47 = vld [vmem:[%s0] sm:$0xf]
    %v48 = vld [vmem:[%s0 + $0x4] sm:$0xf]
    %v49 = vld [vmem:[%s0 + $0x8] sm:$0xf]
    %v50 = vld [vmem:[%s0 + $0xc] sm:$0xf]
    %v51 = vld [vmem:[%s0 + $0x10] sm:$0xf]
    %v52 = vld [vmem:[%s0 + $0x14] sm:$0xf]
    %v53 = vld [vmem:[%s0 + $0x18] sm:$0xf]
    %v54 = vld [vmem:[%s0 + $0x1c] sm:$0xf]
    %v55 = vld [vmem:[%s0 + $0x20] sm:$0xf]
    %v56 = vld [vmem:[%s0 + $0x24] sm:$0xf]
    %v57 = vld [vmem:[%s0 + $0x28] sm:$0xf]
    %v58 = vld [vmem:[%s0 + $0x2c] sm:$0xf]
    %v59 = vld [vmem:[%s0 + $0x30] sm:$0xf]
    %v60 = vld [vmem:[%s0 + $0x34] sm:$0xf]
    %v61 = vld [vmem:[%s0 + $0x38] sm:$0xf]
    %v62 = vld [vmem:[%s0 + $0x3c] sm:$0xf]
    %v64 = vlaneseq
    %v65 = vshrl.u32 %v64, 7
    %v66 = vsub.s32 0, %v65
    %v67 = vrot.slane %v46, %v66
    %v85 = vunpack.c.l.b16 %v47
    %v86 = vunpack.c.l.b16 %v48
    %v87 = vunpack.c.l.b16 %v49
    %v88 = vunpack.c.l.b16 %v50
    %v89 = vunpack.c.l.b16 %v51
    %v90 = vunpack.c.l.b16 %v52
    %v91 = vunpack.c.l.b16 %v53
    %v92 = vunpack.c.l.b16 %v54
    %v93 = vunpack.c.l.b16 %v55
    %v94 = vunpack.c.l.b16 %v56
    %v95 = vunpack.c.l.b16 %v57
    %v96 = vunpack.c.l.b16 %v58
    %v97 = vunpack.c.l.b16 %v59
    %v98 = vunpack.c.l.b16 %v60
    %v99 = vunpack.c.l.b16 %v61
    %v100 = vunpack.c.l.b16 %v62
    %v101 = vpack.c.b16 %v86, %v85
    %v102 = vpack.c.b16 %v88, %v87
    %v103 = vpack.c.b16 %v90, %v89
    %v104 = vpack.c.b16 %v92, %v91
    %v105 = vpack.c.b16 %v94, %v93
    %v106 = vpack.c.b16 %v96, %v95
    %v107 = vpack.c.b16 %v98, %v97
    %v108 = vpack.c.b16 %v100, %v99
    %vm109 = vcmask 31744
    %v111 = vsel %vm109, %v101, 0
    %v114 = vsel %vm109, %v102, 0
    %v117 = vsel %vm109, %v103, 0
    %v120 = vsel %vm109, %v104, 0
    %v123 = vsel %vm109, %v105, 0
    %v126 = vsel %vm109, %v106, 0
    %v129 = vsel %vm109, %v107, 0
    %v132 = vsel %vm109, %v108, 0
    %vm134 = vcmask 1041408
    %v136 = vsel %vm134, %v41, 0
    %138 = vmatprep.subr.bf16.mxu0 0
    %139 = vmatpush1.bf16.msra.mxu0 0
    %140 = vmatprep.subr.bf16.mxu0 0
    %141 = vmatpush1.bf16.msra.mxu0 0
    %142 = vmatprep.subr.bf16.mxu0 0
    %143 = vmatpush1.bf16.msra.mxu0 0
    %144 = vmatprep.subr.bf16.mxu0 0
    %145 = vmatpush1.bf16.msra.mxu0 0
    %146 = vmatprep.subr.bf16.mxu0 0
    %147 = vmatpush1.bf16.msra.mxu0 0
    %148 = vmatprep.subr.bf16.mxu0 0
    %149 = vmatpush1.bf16.msra.mxu0 0
    %150 = vmatprep.subr.bf16.mxu0 0
    %151 = vmatpush1.bf16.msra.mxu0 0
    %152 = vmatprep.subr.bf16.mxu0 0
    %153 = vmatpush1.bf16.msra.mxu0 %v136
    %154 = vmatprep.subr.bf16.mxu0 0
    %155 = vmatpush2.bf16.msra.mxu0 0
    %156 = vmatprep.subr.bf16.mxu0 0
    %157 = vmatpush2.bf16.msra.mxu0 0
    %158 = vmatprep.subr.bf16.mxu0 0
    %159 = vmatpush2.bf16.msra.mxu0 0
    %160 = vmatprep.subr.bf16.mxu0 0
    %161 = vmatpush2.bf16.msra.mxu0 0
    %162 = vmatprep.subr.bf16.mxu0 0
    %163 = vmatpush2.bf16.msra.mxu0 0
    %164 = vmatprep.subr.bf16.mxu0 0
    %165 = vmatpush2.bf16.msra.mxu0 0
    %166 = vmatprep.subr.bf16.mxu0 0
    %167 = vmatpush2.bf16.msra.mxu0 0
    %168 = vmatprep.subr.bf16.mxu0 0
    %169 = vmatpush2.bf16.msra.mxu0 0
    %170 = vmatprep.mubr.bf16.mxu0 0
    %171 = vmatmul.mubr.bf16.gmra.mxu0 %v111
    %v172 = vpop.f32.mrf.mxu0
    %v173 = vadd.f32 %v67, %v172
    %v174 = vpop.f32.mrf.mxu0
    %v175 = vpop.f32.mrf.mxu0
    %v176 = vadd.f32 %v67, %v175
    %v177 = vpop.f32.mrf.mxu0
    %178 = vmatprep.mubr.bf16.mxu0 0
    %179 = vmatmul.mubr.bf16.gmra.mxu0 %v114
    %v180 = vpop.f32.mrf.mxu0
    %v181 = vadd.f32 %v67, %v180
    %v182 = vpop.f32.mrf.mxu0
    %v183 = vpop.f32.mrf.mxu0
    %v184 = vadd.f32 %v67, %v183
    %v185 = vpop.f32.mrf.mxu0
    %186 = vmatprep.mubr.bf16.mxu0 0
    %187 = vmatmul.mubr.bf16.gmra.mxu0 %v117
    %v188 = vpop.f32.mrf.mxu0
    %v189 = vadd.f32 %v67, %v188
    %v190 = vpop.f32.mrf.mxu0
    %v191 = vpop.f32.mrf.mxu0
    %v192 = vadd.f32 %v67, %v191
    %v193 = vpop.f32.mrf.mxu0
    %194 = vmatprep.mubr.bf16.mxu0 0
    %195 = vmatmul.mubr.bf16.gmra.mxu0 %v120
    %v196 = vpop.f32.mrf.mxu0
    %v197 = vadd.f32 %v67, %v196
    %v198 = vpop.f32.mrf.mxu0
    %v199 = vpop.f32.mrf.mxu0
    %v200 = vadd.f32 %v67, %v199
    %v201 = vpop.f32.mrf.mxu0
    %202 = vmatprep.mubr.bf16.mxu0 0
    %203 = vmatmul.mubr.bf16.gmra.mxu0 %v123
    %v204 = vpop.f32.mrf.mxu0
    %v205 = vadd.f32 %v67, %v204
    %v206 = vpop.f32.mrf.mxu0
    %v207 = vpop.f32.mrf.mxu0
    %v208 = vadd.f32 %v67, %v207
    %v209 = vpop.f32.mrf.mxu0
    %210 = vmatprep.mubr.bf16.mxu0 0
    %211 = vmatmul.mubr.bf16.gmra.mxu0 %v126
    %v212 = vpop.f32.mrf.mxu0
    %v213 = vadd.f32 %v67, %v212
    %v214 = vpop.f32.mrf.mxu0
    %v215 = vpop.f32.mrf.mxu0
    %v216 = vadd.f32 %v67, %v215
    %v217 = vpop.f32.mrf.mxu0
    %218 = vmatprep.mubr.bf16.mxu0 0
    %219 = vmatmul.mubr.bf16.gmra.mxu0 %v129
    %v220 = vpop.f32.mrf.mxu0
    %v221 = vadd.f32 %v67, %v220
    %v222 = vpop.f32.mrf.mxu0
    %v223 = vpop.f32.mrf.mxu0
    %v224 = vadd.f32 %v67, %v223
    %v225 = vpop.f32.mrf.mxu0
    %226 = vmatprep.mubr.bf16.mxu0 0
    %227 = vmatmul.mubr.bf16.gmra.mxu0 %v132
    %v228 = vpop.f32.mrf.mxu0
    %v229 = vadd.f32 %v67, %v228
    %v230 = vpop.f32.mrf.mxu0
    %v231 = vpop.f32.mrf.mxu0
    %v232 = vadd.f32 %v67, %v231
    %v233 = vpop.f32.mrf.mxu0
    %234 = vdwg.mxu0
    %235 = vst [vmem:[#allocation2] sm:$0xff] %v173
    %236 = vst [vmem:[#allocation2 + $0x8] sm:$0xff] %v176
    %237 = vst [vmem:[#allocation2 + $0x10] sm:$0xff] %v181
    %238 = vst [vmem:[#allocation2 + $0x18] sm:$0xff] %v184
    %239 = vst [vmem:[#allocation2 + $0x20] sm:$0xff] %v189
    %240 = vst [vmem:[#allocation2 + $0x28] sm:$0xff] %v192
    %241 = vst [vmem:[#allocation2 + $0x30] sm:$0xff] %v197
    %242 = vst [vmem:[#allocation2 + $0x38] sm:$0xff] %v200
    %243 = vst [vmem:[#allocation2 + $0x40] sm:$0xff] %v205
    %244 = vst [vmem:[#allocation2 + $0x48] sm:$0xff] %v208
    %245 = vst [vmem:[#allocation2 + $0x50] sm:$0xff] %v213
    %246 = vst [vmem:[#allocation2 + $0x58] sm:$0xff] %v216
    %247 = vst [vmem:[#allocation2 + $0x60] sm:$0xff] %v221
    %248 = vst [vmem:[#allocation2 + $0x68] sm:$0xff] %v224
    %249 = vst [vmem:[#allocation2 + $0x70] sm:$0xff] %v229
    %250 = vst [vmem:[#allocation2 + $0x78] sm:$0xff] %v232
    %v251 = vld [vmem:[%s7] sm:$0x1]
    %v253 = vlaneseq
    %v254 = vshrl.u32 %v253, 7
    %v255 = vsub.s32 0, %v254
    %v256 = vrot.slane %v251, %v255
    %v258 = vld [vmem:[%s8] sm:$0x1]
    %v260 = vlaneseq
    %v261 = vshrl.u32 %v260, 7
    %v262 = vsub.s32 0, %v261
    %v263 = vrot.slane %v258, %v262
    %v264 = vld [vmem:[#allocation2] sm:$0xff]
    %v265 = vld [vmem:[#allocation2 + $0x8] sm:$0xff]
    %v266 = vpack.c.bf16 %v256, %v256
    %v271 = vunpack.c.l.b16 %v42
    %v272 = vunpack.c.l.b16 %v43
    %v273 = vunpack.c.l.b16 %v44
    %v274 = vunpack.c.l.b16 %v45
    %v275 = vpack.c.b16 %v272, %v271
    %v276 = vpack.c.b16 %v274, %v273
    %vm279 = vcmask 261120
    %v281 = vsel %vm279, %v266, 0
    %283 = vmatprep.subr.bf16.mxu0 0
    %284 = vmatpush1.bf16.msra.mxu0 0
    %285 = vmatprep.subr.bf16.mxu0 0
    %286 = vmatpush1.bf16.msra.mxu0 0
    %287 = vmatprep.subr.bf16.mxu0 0
    %288 = vmatpush1.bf16.msra.mxu0 0
    %289 = vmatprep.subr.bf16.mxu0 0
    %290 = vmatpush1.bf16.msra.mxu0 0
    %291 = vmatprep.subr.bf16.mxu0 0
    %292 = vmatpush1.bf16.msra.mxu0 0
    %293 = vmatprep.subr.bf16.mxu0 0
    %294 = vmatpush1.bf16.msra.mxu0 0
    %295 = vmatprep.subr.bf16.mxu0 0
    %296 = vmatpush1.bf16.msra.mxu0 %v276
    %297 = vmatprep.subr.bf16.mxu0 0
    %298 = vmatpush1.bf16.msra.mxu0 %v275
    %299 = vmatprep.subr.bf16.mxu0 0
    %300 = vmatpush2.bf16.msra.mxu0 0
    %301 = vmatprep.subr.bf16.mxu0 0
    %302 = vmatpush2.bf16.msra.mxu0 0
    %303 = vmatprep.subr.bf16.mxu0 0
    %304 = vmatpush2.bf16.msra.mxu0 0
    %305 = vmatprep.subr.bf16.mxu0 0
    %306 = vmatpush2.bf16.msra.mxu0 0
    %307 = vmatprep.subr.bf16.mxu0 0
    %308 = vmatpush2.bf16.msra.mxu0 0
    %309 = vmatprep.subr.bf16.mxu0 0
    %310 = vmatpush2.bf16.msra.mxu0 0
    %311 = vmatprep.subr.bf16.mxu0 0
    %312 = vmatpush2.bf16.msra.mxu0 0
    %313 = vmatprep.subr.bf16.mxu0 0
    %314 = vmatpush2.bf16.msra.mxu0 0
    %315 = vmatprep.mubr.bf16.mxu0 0
    %316 = vmatmul.mubr.bf16.gmra.mxu0 %v281
    %v317 = vpop.f32.mrf.mxu0
    %v318 = vadd.f32 0.0, %v317
    %v319 = vpop.f32.mrf.mxu0
    %v320 = vpop.f32.mrf.mxu0
    %v321 = vadd.f32 0.0, %v320
    %v322 = vpop.f32.mrf.mxu0
    %323 = vdwg.mxu0
    %v324 = vadd.f32 %v264, %v318
    %v325 = vadd.f32 %v265, %v321
    %v326 = vxor.u32 %v324, 2147483648
    %v327 = vxor.u32 %v325, 2147483648
    %v328 = vmul.f32 %v326, 1.442695
    %v329 = vpow.pop %v328
    %v330 = vmul.f32 %v327, 1.442695
    %v331 = vpow.pop %v330
    %v332 = vadd.f32 %v329, 1.0
    %v333 = vadd.f32 %v331, 1.0
    %v334 = vrcp.pop %v332
    %v335 = vmul.f32 1.0, %v334
    %v336 = vrcp.pop %v333
    %v337 = vmul.f32 1.0, %v336
    %v338 = vtanh.pop %v324
    %v339 = vtanh.pop %v325
    %340 = vrot.lane.b32.xlu0 %v263, 32
    %v341 = vpop.permute.xlu0 %340
    %v343 = vmul.f32 %v335, %v341
    %v344 = vmul.f32 %v337, %v341
    %347 = vrot.lane.b32.xlu0 %v338, 64
    %v348 = vpop.permute.xlu0 %347
    %349 = vrot.lane.b32.xlu0 %v339, 64
    %v350 = vpop.permute.xlu0 %349
    %v353 = vmul.f32 %v335, %v348
    %v354 = vmul.f32 %v337, %v350
    %357 = vrot.lane.b32.xlu0 %v353, 32
    %v358 = vpop.permute.xlu0 %357
    %359 = vrot.lane.b32.xlu0 %v354, 32
    %v360 = vpop.permute.xlu0 %359
    %v363 = vadd.f32 %v343, %v358
    %v364 = vadd.f32 %v344, %v360
    %v365 = vtanh.pop %v363
    %v366 = vtanh.pop %v364
    %369 = vrot.lane.b32.xlu0 %v365, 64
    %v370 = vpop.permute.xlu0 %369
    %371 = vrot.lane.b32.xlu0 %v366, 64
    %v372 = vpop.permute.xlu0 %371
    %v375 = vmul.f32 %v335, %v370
    %v376 = vmul.f32 %v337, %v372
    %v377 = vpack.c.bf16 %v376, %v375
    %v378 = vld [vmem:[#allocation2 + $0x10] sm:$0xff]
    %v379 = vld [vmem:[#allocation2 + $0x18] sm:$0xff]
    %381 = vrot.lane.b32.xlu0 %v377, 32
    %v382 = vpop.permute.xlu0 %381
    %v384 = vsel %vm279, %v382, 0
    %386 = vmatprep.subr.bf16.mxu0 0
    %387 = vmatpush1.bf16.msra.mxu0 0
    %388 = vmatprep.subr.bf16.mxu0 0
    %389 = vmatpush1.bf16.msra.mxu0 0
    %390 = vmatprep.subr.bf16.mxu0 0
    %391 = vmatpush1.bf16.msra.mxu0 0
    %392 = vmatprep.subr.bf16.mxu0 0
    %393 = vmatpush1.bf16.msra.mxu0 0
    %394 = vmatprep.subr.bf16.mxu0 0
    %395 = vmatpush1.bf16.msra.mxu0 0
    %396 = vmatprep.subr.bf16.mxu0 0
    %397 = vmatpush1.bf16.msra.mxu0 0
    %398 = vmatprep.subr.bf16.mxu0 0
    %399 = vmatpush1.bf16.msra.mxu0 %v276
    %400 = vmatprep.subr.bf16.mxu0 0
    %401 = vmatpush1.bf16.msra.mxu0 %v275
    %402 = vmatprep.subr.bf16.mxu0 0
    %403 = vmatpush2.bf16.msra.mxu0 0
    %404 = vmatprep.subr.bf16.mxu0 0
    %405 = vmatpush2.bf16.msra.mxu0 0
    %406 = vmatprep.subr.bf16.mxu0 0
    %407 = vmatpush2.bf16.msra.mxu0 0
    %408 = vmatprep.subr.bf16.mxu0 0
    %409 = vmatpush2.bf16.msra.mxu0 0
    %410 = vmatprep.subr.bf16.mxu0 0
    %411 = vmatpush2.bf16.msra.mxu0 0
    %412 = vmatprep.subr.bf16.mxu0 0
    %413 = vmatpush2.bf16.msra.mxu0 0
    %414 = vmatprep.subr.bf16.mxu0 0
    %415 = vmatpush2.bf16.msra.mxu0 0
    %416 = vmatprep.subr.bf16.mxu0 0
    %417 = vmatpush2.bf16.msra.mxu0 0
    %418 = vmatprep.mubr.bf16.mxu0 0
    %419 = vmatmul.mubr.bf16.gmra.mxu0 %v384
    %v420 = vpop.f32.mrf.mxu0
    %v421 = vadd.f32 0.0, %v420
    %v422 = vpop.f32.mrf.mxu0
    %v423 = vpop.f32.mrf.mxu0
    %v424 = vadd.f32 0.0, %v423
    %v425 = vpop.f32.mrf.mxu0
    %426 = vdwg.mxu0
    %v427 = vadd.f32 %v378, %v421
    %v428 = vadd.f32 %v379, %v424
    %v429 = vxor.u32 %v427, 2147483648
    %v430 = vxor.u32 %v428, 2147483648
    %v431 = vmul.f32 %v429, 1.442695
    %v432 = vpow.pop %v431
    %v433 = vmul.f32 %v430, 1.442695
    %v434 = vpow.pop %v433
    %v435 = vadd.f32 %v432, 1.0
    %v436 = vadd.f32 %v434, 1.0
    %v437 = vrcp.pop %v435
    %v438 = vmul.f32 1.0, %v437
    %v439 = vrcp.pop %v436
    %v440 = vmul.f32 1.0, %v439
    %v441 = vtanh.pop %v427
    %v442 = vtanh.pop %v428
    %v443 = vmul.f32 %v438, %v363
    %v444 = vmul.f32 %v440, %v364
    %447 = vrot.lane.b32.xlu0 %v441, 64
    %v448 = vpop.permute.xlu0 %447
    %449 = vrot.lane.b32.xlu0 %v442, 64
    %v450 = vpop.permute.xlu0 %449
    %v453 = vmul.f32 %v438, %v448
    %v454 = vmul.f32 %v440, %v450
    %457 = vrot.lane.b32.xlu0 %v453, 32
    %v458 = vpop.permute.xlu0 %457
    %459 = vrot.lane.b32.xlu0 %v454, 32
    %v460 = vpop.permute.xlu0 %459
    %v463 = vadd.f32 %v443, %v458
    %v464 = vadd.f32 %v444, %v460
    %v465 = vtanh.pop %v463
    %v466 = vtanh.pop %v464
    %469 = vrot.lane.b32.xlu0 %v465, 64
    %v470 = vpop.permute.xlu0 %469
    %471 = vrot.lane.b32.xlu0 %v466, 64
    %v472 = vpop.permute.xlu0 %471
    %v475 = vmul.f32 %v438, %v470
    %v476 = vmul.f32 %v440, %v472
    %v477 = vpack.c.bf16 %v476, %v475
    %v478 = vld [vmem:[#allocation2 + $0x20] sm:$0xff]
    %v479 = vld [vmem:[#allocation2 + $0x28] sm:$0xff]
    %481 = vrot.lane.b32.xlu0 %v477, 32
    %v482 = vpop.permute.xlu0 %481
    %v484 = vsel %vm279, %v482, 0
    %486 = vmatprep.subr.bf16.mxu0 0
    %487 = vmatpush1.bf16.msra.mxu0 0
    %488 = vmatprep.subr.bf16.mxu0 0
    %489 = vmatpush1.bf16.msra.mxu0 0
    %490 = vmatprep.subr.bf16.mxu0 0
    %491 = vmatpush1.bf16.msra.mxu0 0
    %492 = vmatprep.subr.bf16.mxu0 0
    %493 = vmatpush1.bf16.msra.mxu0 0
    %494 = vmatprep.subr.bf16.mxu0 0
    %495 = vmatpush1.bf16.msra.mxu0 0
    %496 = vmatprep.subr.bf16.mxu0 0
    %497 = vmatpush1.bf16.msra.mxu0 0
    %498 = vmatprep.subr.bf16.mxu0 0
    %499 = vmatpush1.bf16.msra.mxu0 %v276
    %500 = vmatprep.subr.bf16.mxu0 0
    %501 = vmatpush1.bf16.msra.mxu0 %v275
    %502 = vmatprep.subr.bf16.mxu0 0
    %503 = vmatpush2.bf16.msra.mxu0 0
    %504 = vmatprep.subr.bf16.mxu0 0
    %505 = vmatpush2.bf16.msra.mxu0 0
    %506 = vmatprep.subr.bf16.mxu0 0
    %507 = vmatpush2.bf16.msra.mxu0 0
    %508 = vmatprep.subr.bf16.mxu0 0
    %509 = vmatpush2.bf16.msra.mxu0 0
    %510 = vmatprep.subr.bf16.mxu0 0
    %511 = vmatpush2.bf16.msra.mxu0 0
    %512 = vmatprep.subr.bf16.mxu0 0
    %513 = vmatpush2.bf16.msra.mxu0 0
    %514 = vmatprep.subr.bf16.mxu0 0
    %515 = vmatpush2.bf16.msra.mxu0 0
    %516 = vmatprep.subr.bf16.mxu0 0
    %517 = vmatpush2.bf16.msra.mxu0 0
    %518 = vmatprep.mubr.bf16.mxu0 0
    %519 = vmatmul.mubr.bf16.gmra.mxu0 %v484
    %v520 = vpop.f32.mrf.mxu0
    %v521 = vadd.f32 0.0, %v520
    %v522 = vpop.f32.mrf.mxu0
    %v523 = vpop.f32.mrf.mxu0
    %v524 = vadd.f32 0.0, %v523
    %v525 = vpop.f32.mrf.mxu0
    %526 = vdwg.mxu0
    %v527 = vadd.f32 %v478, %v521
    %v528 = vadd.f32 %v479, %v524
    %v529 = vxor.u32 %v527, 2147483648
    %v530 = vxor.u32 %v528, 2147483648
    %v531 = vmul.f32 %v529, 1.442695
    %v532 = vpow.pop %v531
    %v533 = vmul.f32 %v530, 1.442695
    %v534 = vpow.pop %v533
    %v535 = vadd.f32 %v532, 1.0
    %v536 = vadd.f32 %v534, 1.0
    %v537 = vrcp.pop %v535
    %v538 = vmul.f32 1.0, %v537
    %v539 = vrcp.pop %v536
    %v540 = vmul.f32 1.0, %v539
    %v541 = vtanh.pop %v527
    %v542 = vtanh.pop %v528
    %v543 = vmul.f32 %v538, %v463
    %v544 = vmul.f32 %v540, %v464
    %547 = vrot.lane.b32.xlu0 %v541, 64
    %v548 = vpop.permute.xlu0 %547
    %549 = vrot.lane.b32.xlu0 %v542, 64
    %v550 = vpop.permute.xlu0 %549
    %v553 = vmul.f32 %v538, %v548
    %v554 = vmul.f32 %v540, %v550
    %557 = vrot.lane.b32.xlu0 %v553, 32
    %v558 = vpop.permute.xlu0 %557
    %559 = vrot.lane.b32.xlu0 %v554, 32
    %v560 = vpop.permute.xlu0 %559
    %v563 = vadd.f32 %v543, %v558
    %v564 = vadd.f32 %v544, %v560
    %v565 = vtanh.pop %v563
    %v566 = vtanh.pop %v564
    %569 = vrot.lane.b32.xlu0 %v565, 64
    %v570 = vpop.permute.xlu0 %569
    %571 = vrot.lane.b32.xlu0 %v566, 64
    %v572 = vpop.permute.xlu0 %571
    %v575 = vmul.f32 %v538, %v570
    %v576 = vmul.f32 %v540, %v572
    %v577 = vpack.c.bf16 %v576, %v575
    %v578 = vld [vmem:[#allocation2 + $0x30] sm:$0xff]
    %v579 = vld [vmem:[#allocation2 + $0x38] sm:$0xff]
    %581 = vrot.lane.b32.xlu0 %v577, 32
    %v582 = vpop.permute.xlu0 %581
    %v584 = vsel %vm279, %v582, 0
    %586 = vmatprep.subr.bf16.mxu0 0
    %587 = vmatpush1.bf16.msra.mxu0 0
    %588 = vmatprep.subr.bf16.mxu0 0
    %589 = vmatpush1.bf16.msra.mxu0 0
    %590 = vmatprep.subr.bf16.mxu0 0
    %591 = vmatpush1.bf16.msra.mxu0 0
    %592 = vmatprep.subr.bf16.mxu0 0
    %593 = vmatpush1.bf16.msra.mxu0 0
    %594 = vmatprep.subr.bf16.mxu0 0
    %595 = vmatpush1.bf16.msra.mxu0 0
    %596 = vmatprep.subr.bf16.mxu0 0
    %597 = vmatpush1.bf16.msra.mxu0 0
    %598 = vmatprep.subr.bf16.mxu0 0
    %599 = vmatpush1.bf16.msra.mxu0 %v276
    %600 = vmatprep.subr.bf16.mxu0 0
    %601 = vmatpush1.bf16.msra.mxu0 %v275
    %602 = vmatprep.subr.bf16.mxu0 0
    %603 = vmatpush2.bf16.msra.mxu0 0
    %604 = vmatprep.subr.bf16.mxu0 0
    %605 = vmatpush2.bf16.msra.mxu0 0
    %606 = vmatprep.subr.bf16.mxu0 0
    %607 = vmatpush2.bf16.msra.mxu0 0
    %608 = vmatprep.subr.bf16.mxu0 0
    %609 = vmatpush2.bf16.msra.mxu0 0
    %610 = vmatprep.subr.bf16.mxu0 0
    %611 = vmatpush2.bf16.msra.mxu0 0
    %612 = vmatprep.subr.bf16.mxu0 0
    %613 = vmatpush2.bf16.msra.mxu0 0
    %614 = vmatprep.subr.bf16.mxu0 0
    %615 = vmatpush2.bf16.msra.mxu0 0
    %616 = vmatprep.subr.bf16.mxu0 0
    %617 = vmatpush2.bf16.msra.mxu0 0
    %618 = vmatprep.mubr.bf16.mxu0 0
    %619 = vmatmul.mubr.bf16.gmra.mxu0 %v584
    %v620 = vpop.f32.mrf.mxu0
    %v621 = vadd.f32 0.0, %v620
    %v622 = vpop.f32.mrf.mxu0
    %v623 = vpop.f32.mrf.mxu0
    %v624 = vadd.f32 0.0, %v623
    %v625 = vpop.f32.mrf.mxu0
    %626 = vdwg.mxu0
    %v627 = vadd.f32 %v578, %v621
    %v628 = vadd.f32 %v579, %v624
    %v629 = vxor.u32 %v627, 2147483648
    %v630 = vxor.u32 %v628, 2147483648
    %v631 = vmul.f32 %v629, 1.442695
    %v632 = vpow.pop %v631
    %v633 = vmul.f32 %v630, 1.442695
    %v634 = vpow.pop %v633
    %v635 = vadd.f32 %v632, 1.0
    %v636 = vadd.f32 %v634, 1.0
    %v637 = vrcp.pop %v635
    %v638 = vmul.f32 1.0, %v637
    %v639 = vrcp.pop %v636
    %v640 = vmul.f32 1.0, %v639
    %v641 = vtanh.pop %v627
    %v642 = vtanh.pop %v628
    %v643 = vmul.f32 %v638, %v563
    %v644 = vmul.f32 %v640, %v564
    %647 = vrot.lane.b32.xlu0 %v641, 64
    %v648 = vpop.permute.xlu0 %647
    %649 = vrot.lane.b32.xlu0 %v642, 64
    %v650 = vpop.permute.xlu0 %649
    %v653 = vmul.f32 %v638, %v648
    %v654 = vmul.f32 %v640, %v650
    %657 = vrot.lane.b32.xlu0 %v653, 32
    %v658 = vpop.permute.xlu0 %657
    %659 = vrot.lane.b32.xlu0 %v654, 32
    %v660 = vpop.permute.xlu0 %659
    %v663 = vadd.f32 %v643, %v658
    %v664 = vadd.f32 %v644, %v660
    %v665 = vtanh.pop %v663
    %v666 = vtanh.pop %v664
    %669 = vrot.lane.b32.xlu0 %v665, 64
    %v670 = vpop.permute.xlu0 %669
    %671 = vrot.lane.b32.xlu0 %v666, 64
    %v672 = vpop.permute.xlu0 %671
    %v675 = vmul.f32 %v638, %v670
    %v676 = vmul.f32 %v640, %v672
    %v677 = vpack.c.bf16 %v676, %v675
    %v678 = vld [vmem:[#allocation2 + $0x40] sm:$0xff]
    %v679 = vld [vmem:[#allocation2 + $0x48] sm:$0xff]
    %681 = vrot.lane.b32.xlu0 %v677, 32
    %v682 = vpop.permute.xlu0 %681
    %v684 = vsel %vm279, %v682, 0
    %686 = vmatprep.subr.bf16.mxu0 0
    %687 = vmatpush1.bf16.msra.mxu0 0
    %688 = vmatprep.subr.bf16.mxu0 0
    %689 = vmatpush1.bf16.msra.mxu0 0
    %690 = vmatprep.subr.bf16.mxu0 0
    %691 = vmatpush1.bf16.msra.mxu0 0
    %692 = vmatprep.subr.bf16.mxu0 0
    %693 = vmatpush1.bf16.msra.mxu0 0
    %694 = vmatprep.subr.bf16.mxu0 0
    %695 = vmatpush1.bf16.msra.mxu0 0
    %696 = vmatprep.subr.bf16.mxu0 0
    %697 = vmatpush1.bf16.msra.mxu0 0
    %698 = vmatprep.subr.bf16.mxu0 0
    %699 = vmatpush1.bf16.msra.mxu0 %v276
    %700 = vmatprep.subr.bf16.mxu0 0
    %701 = vmatpush1.bf16.msra.mxu0 %v275
    %702 = vmatprep.subr.bf16.mxu0 0
    %703 = vmatpush2.bf16.msra.mxu0 0
    %704 = vmatprep.subr.bf16.mxu0 0
    %705 = vmatpush2.bf16.msra.mxu0 0
    %706 = vmatprep.subr.bf16.mxu0 0
    %707 = vmatpush2.bf16.msra.mxu0 0
    %708 = vmatprep.subr.bf16.mxu0 0
    %709 = vmatpush2.bf16.msra.mxu0 0
    %710 = vmatprep.subr.bf16.mxu0 0
    %711 = vmatpush2.bf16.msra.mxu0 0
    %712 = vmatprep.subr.bf16.mxu0 0
    %713 = vmatpush2.bf16.msra.mxu0 0
    %714 = vmatprep.subr.bf16.mxu0 0
    %715 = vmatpush2.bf16.msra.mxu0 0
    %716 = vmatprep.subr.bf16.mxu0 0
    %717 = vmatpush2.bf16.msra.mxu0 0
    %718 = vmatprep.mubr.bf16.mxu0 0
    %719 = vmatmul.mubr.bf16.gmra.mxu0 %v684
    %v720 = vpop.f32.mrf.mxu0
    %v721 = vadd.f32 0.0, %v720
    %v722 = vpop.f32.mrf.mxu0
    %v723 = vpop.f32.mrf.mxu0
    %v724 = vadd.f32 0.0, %v723
    %v725 = vpop.f32.mrf.mxu0
    %726 = vdwg.mxu0
    %v727 = vadd.f32 %v678, %v721
    %v728 = vadd.f32 %v679, %v724
    %v729 = vxor.u32 %v727, 2147483648
    %v730 = vxor.u32 %v728, 2147483648
    %v731 = vmul.f32 %v729, 1.442695
    %v732 = vpow.pop %v731
    %v733 = vmul.f32 %v730, 1.442695
    %v734 = vpow.pop %v733
    %v735 = vadd.f32 %v732, 1.0
    %v736 = vadd.f32 %v734, 1.0
    %v737 = vrcp.pop %v735
    %v738 = vmul.f32 1.0, %v737
    %v739 = vrcp.pop %v736
    %v740 = vmul.f32 1.0, %v739
    %v741 = vtanh.pop %v727
    %v742 = vtanh.pop %v728
    %v743 = vmul.f32 %v738, %v663
    %v744 = vmul.f32 %v740, %v664
    %747 = vrot.lane.b32.xlu0 %v741, 64
    %v748 = vpop.permute.xlu0 %747
    %749 = vrot.lane.b32.xlu0 %v742, 64
    %v750 = vpop.permute.xlu0 %749
    %v753 = vmul.f32 %v738, %v748
    %v754 = vmul.f32 %v740, %v750
    %757 = vrot.lane.b32.xlu0 %v753, 32
    %v758 = vpop.permute.xlu0 %757
    %759 = vrot.lane.b32.xlu0 %v754, 32
    %v760 = vpop.permute.xlu0 %759
    %v763 = vadd.f32 %v743, %v758
    %v764 = vadd.f32 %v744, %v760
    %v765 = vtanh.pop %v763
    %v766 = vtanh.pop %v764
    %769 = vrot.lane.b32.xlu0 %v765, 64
    %v770 = vpop.permute.xlu0 %769
    %771 = vrot.lane.b32.xlu0 %v766, 64
    %v772 = vpop.permute.xlu0 %771
    %v775 = vmul.f32 %v738, %v770
    %v776 = vmul.f32 %v740, %v772
    %v777 = vpack.c.bf16 %v776, %v775
    %v778 = vld [vmem:[#allocation2 + $0x50] sm:$0xff]
    %v779 = vld [vmem:[#allocation2 + $0x58] sm:$0xff]
    %781 = vrot.lane.b32.xlu0 %v777, 32
    %v782 = vpop.permute.xlu0 %781
    %v784 = vsel %vm279, %v782, 0
    %786 = vmatprep.subr.bf16.mxu0 0
    %787 = vmatpush1.bf16.msra.mxu0 0
    %788 = vmatprep.subr.bf16.mxu0 0
    %789 = vmatpush1.bf16.msra.mxu0 0
    %790 = vmatprep.subr.bf16.mxu0 0
    %791 = vmatpush1.bf16.msra.mxu0 0
    %792 = vmatprep.subr.bf16.mxu0 0
    %793 = vmatpush1.bf16.msra.mxu0 0
    %794 = vmatprep.subr.bf16.mxu0 0
    %795 = vmatpush1.bf16.msra.mxu0 0
    %796 = vmatprep.subr.bf16.mxu0 0
    %797 = vmatpush1.bf16.msra.mxu0 0
    %798 = vmatprep.subr.bf16.mxu0 0
    %799 = vmatpush1.bf16.msra.mxu0 %v276
    %800 = vmatprep.subr.bf16.mxu0 0
    %801 = vmatpush1.bf16.msra.mxu0 %v275
    %802 = vmatprep.subr.bf16.mxu0 0
    %803 = vmatpush2.bf16.msra.mxu0 0
    %804 = vmatprep.subr.bf16.mxu0 0
    %805 = vmatpush2.bf16.msra.mxu0 0
    %806 = vmatprep.subr.bf16.mxu0 0
    %807 = vmatpush2.bf16.msra.mxu0 0
    %808 = vmatprep.subr.bf16.mxu0 0
    %809 = vmatpush2.bf16.msra.mxu0 0
    %810 = vmatprep.subr.bf16.mxu0 0
    %811 = vmatpush2.bf16.msra.mxu0 0
    %812 = vmatprep.subr.bf16.mxu0 0
    %813 = vmatpush2.bf16.msra.mxu0 0
    %814 = vmatprep.subr.bf16.mxu0 0
    %815 = vmatpush2.bf16.msra.mxu0 0
    %816 = vmatprep.subr.bf16.mxu0 0
    %817 = vmatpush2.bf16.msra.mxu0 0
    %818 = vmatprep.mubr.bf16.mxu0 0
    %819 = vmatmul.mubr.bf16.gmra.mxu0 %v784
    %v820 = vpop.f32.mrf.mxu0
    %v821 = vadd.f32 0.0, %v820
    %v822 = vpop.f32.mrf.mxu0
    %v823 = vpop.f32.mrf.mxu0
    %v824 = vadd.f32 0.0, %v823
    %v825 = vpop.f32.mrf.mxu0
    %826 = vdwg.mxu0
    %v827 = vadd.f32 %v778, %v821
    %v828 = vadd.f32 %v779, %v824
    %v829 = vxor.u32 %v827, 2147483648
    %v830 = vxor.u32 %v828, 2147483648
    %v831 = vmul.f32 %v829, 1.442695
    %v832 = vpow.pop %v831
    %v833 = vmul.f32 %v830, 1.442695
    %v834 = vpow.pop %v833
    %v835 = vadd.f32 %v832, 1.0
    %v836 = vadd.f32 %v834, 1.0
    %v837 = vrcp.pop %v835
    %v838 = vmul.f32 1.0, %v837
    %v839 = vrcp.pop %v836
    %v840 = vmul.f32 1.0, %v839
    %v841 = vtanh.pop %v827
    %v842 = vtanh.pop %v828
    %v843 = vmul.f32 %v838, %v763
    %v844 = vmul.f32 %v840, %v764
    %847 = vrot.lane.b32.xlu0 %v841, 64
    %v848 = vpop.permute.xlu0 %847
    %849 = vrot.lane.b32.xlu0 %v842, 64
    %v850 = vpop.permute.xlu0 %849
    %v853 = vmul.f32 %v838, %v848
    %v854 = vmul.f32 %v840, %v850
    %857 = vrot.lane.b32.xlu0 %v853, 32
    %v858 = vpop.permute.xlu0 %857
    %859 = vrot.lane.b32.xlu0 %v854, 32
    %v860 = vpop.permute.xlu0 %859
    %v863 = vadd.f32 %v843, %v858
    %v864 = vadd.f32 %v844, %v860
    %v865 = vtanh.pop %v863
    %v866 = vtanh.pop %v864
    %869 = vrot.lane.b32.xlu0 %v865, 64
    %v870 = vpop.permute.xlu0 %869
    %871 = vrot.lane.b32.xlu0 %v866, 64
    %v872 = vpop.permute.xlu0 %871
    %v875 = vmul.f32 %v838, %v870
    %v876 = vmul.f32 %v840, %v872
    %v877 = vpack.c.bf16 %v876, %v875
    %v878 = vld [vmem:[#allocation2 + $0x60] sm:$0xff]
    %v879 = vld [vmem:[#allocation2 + $0x68] sm:$0xff]
    %881 = vrot.lane.b32.xlu0 %v877, 32
    %v882 = vpop.permute.xlu0 %881
    %v884 = vsel %vm279, %v882, 0
    %886 = vmatprep.subr.bf16.mxu0 0
    %887 = vmatpush1.bf16.msra.mxu0 0
    %888 = vmatprep.subr.bf16.mxu0 0
    %889 = vmatpush1.bf16.msra.mxu0 0
    %890 = vmatprep.subr.bf16.mxu0 0
    %891 = vmatpush1.bf16.msra.mxu0 0
    %892 = vmatprep.subr.bf16.mxu0 0
    %893 = vmatpush1.bf16.msra.mxu0 0
    %894 = vmatprep.subr.bf16.mxu0 0
    %895 = vmatpush1.bf16.msra.mxu0 0
    %896 = vmatprep.subr.bf16.mxu0 0
    %897 = vmatpush1.bf16.msra.mxu0 0
    %898 = vmatprep.subr.bf16.mxu0 0
    %899 = vmatpush1.bf16.msra.mxu0 %v276
    %900 = vmatprep.subr.bf16.mxu0 0
    %901 = vmatpush1.bf16.msra.mxu0 %v275
    %902 = vmatprep.subr.bf16.mxu0 0
    %903 = vmatpush2.bf16.msra.mxu0 0
    %904 = vmatprep.subr.bf16.mxu0 0
    %905 = vmatpush2.bf16.msra.mxu0 0
    %906 = vmatprep.subr.bf16.mxu0 0
    %907 = vmatpush2.bf16.msra.mxu0 0
    %908 = vmatprep.subr.bf16.mxu0 0
    %909 = vmatpush2.bf16.msra.mxu0 0
    %910 = vmatprep.subr.bf16.mxu0 0
    %911 = vmatpush2.bf16.msra.mxu0 0
    %912 = vmatprep.subr.bf16.mxu0 0
    %913 = vmatpush2.bf16.msra.mxu0 0
    %914 = vmatprep.subr.bf16.mxu0 0
    %915 = vmatpush2.bf16.msra.mxu0 0
    %916 = vmatprep.subr.bf16.mxu0 0
    %917 = vmatpush2.bf16.msra.mxu0 0
    %918 = vmatprep.mubr.bf16.mxu0 0
    %919 = vmatmul.mubr.bf16.gmra.mxu0 %v884
    %v920 = vpop.f32.mrf.mxu0
    %v921 = vadd.f32 0.0, %v920
    %v922 = vpop.f32.mrf.mxu0
    %v923 = vpop.f32.mrf.mxu0
    %v924 = vadd.f32 0.0, %v923
    %v925 = vpop.f32.mrf.mxu0
    %926 = vdwg.mxu0
    %v927 = vadd.f32 %v878, %v921
    %v928 = vadd.f32 %v879, %v924
    %v929 = vxor.u32 %v927, 2147483648
    %v930 = vxor.u32 %v928, 2147483648
    %v931 = vmul.f32 %v929, 1.442695
    %v932 = vpow.pop %v931
    %v933 = vmul.f32 %v930, 1.442695
    %v934 = vpow.pop %v933
    %v935 = vadd.f32 %v932, 1.0
    %v936 = vadd.f32 %v934, 1.0
    %v937 = vrcp.pop %v935
    %v938 = vmul.f32 1.0, %v937
    %v939 = vrcp.pop %v936
    %v940 = vmul.f32 1.0, %v939
    %v941 = vtanh.pop %v927
    %v942 = vtanh.pop %v928
    %v943 = vmul.f32 %v938, %v863
    %v944 = vmul.f32 %v940, %v864
    %947 = vrot.lane.b32.xlu0 %v941, 64
    %v948 = vpop.permute.xlu0 %947
    %949 = vrot.lane.b32.xlu0 %v942, 64
    %v950 = vpop.permute.xlu0 %949
    %v953 = vmul.f32 %v938, %v948
    %v954 = vmul.f32 %v940, %v950
    %957 = vrot.lane.b32.xlu0 %v953, 32
    %v958 = vpop.permute.xlu0 %957
    %959 = vrot.lane.b32.xlu0 %v954, 32
    %v960 = vpop.permute.xlu0 %959
    %v963 = vadd.f32 %v943, %v958
    %v964 = vadd.f32 %v944, %v960
    %v965 = vtanh.pop %v963
    %v966 = vtanh.pop %v964
    %969 = vrot.lane.b32.xlu0 %v965, 64
    %v970 = vpop.permute.xlu0 %969
    %971 = vrot.lane.b32.xlu0 %v966, 64
    %v972 = vpop.permute.xlu0 %971
    %v975 = vmul.f32 %v938, %v970
    %v976 = vmul.f32 %v940, %v972
    %v977 = vpack.c.bf16 %v976, %v975
    %v978 = vld [vmem:[#allocation2 + $0x70] sm:$0xff]
    %v979 = vld [vmem:[#allocation2 + $0x78] sm:$0xff]
    %981 = vrot.lane.b32.xlu0 %v977, 32
    %v982 = vpop.permute.xlu0 %981
    %v984 = vsel %vm279, %v982, 0
    %986 = vmatprep.subr.bf16.mxu0 0
    %987 = vmatpush1.bf16.msra.mxu0 0
    %988 = vmatprep.subr.bf16.mxu0 0
    %989 = vmatpush1.bf16.msra.mxu0 0
    %990 = vmatprep.subr.bf16.mxu0 0
    %991 = vmatpush1.bf16.msra.mxu0 0
    %992 = vmatprep.subr.bf16.mxu0 0
    %993 = vmatpush1.bf16.msra.mxu0 0
    %994 = vmatprep.subr.bf16.mxu0 0
    %995 = vmatpush1.bf16.msra.mxu0 0
    %996 = vmatprep.subr.bf16.mxu0 0
    %997 = vmatpush1.bf16.msra.mxu0 0
    %998 = vmatprep.subr.bf16.mxu0 0
    %999 = vmatpush1.bf16.msra.mxu0 %v276
    %1000 = vmatprep.subr.bf16.mxu0 0
    %1001 = vmatpush1.bf16.msra.mxu0 %v275
    %1002 = vmatprep.subr.bf16.mxu0 0
    %1003 = vmatpush2.bf16.msra.mxu0 0
    %1004 = vmatprep.subr.bf16.mxu0 0
    %1005 = vmatpush2.bf16.msra.mxu0 0
    %1006 = vmatprep.subr.bf16.mxu0 0
    %1007 = vmatpush2.bf16.msra.mxu0 0
    %1008 = vmatprep.subr.bf16.mxu0 0
    %1009 = vmatpush2.bf16.msra.mxu0 0
    %1010 = vmatprep.subr.bf16.mxu0 0
    %1011 = vmatpush2.bf16.msra.mxu0 0
    %1012 = vmatprep.subr.bf16.mxu0 0
    %1013 = vmatpush2.bf16.msra.mxu0 0
    %1014 = vmatprep.subr.bf16.mxu0 0
    %1015 = vmatpush2.bf16.msra.mxu0 0
    %1016 = vmatprep.subr.bf16.mxu0 0
    %1017 = vmatpush2.bf16.msra.mxu0 0
    %1018 = vmatprep.mubr.bf16.mxu0 0
    %1019 = vmatmul.mubr.bf16.gmra.mxu0 %v984
    %v1020 = vpop.f32.mrf.mxu0
    %v1021 = vadd.f32 0.0, %v1020
    %v1022 = vpop.f32.mrf.mxu0
    %v1023 = vpop.f32.mrf.mxu0
    %v1024 = vadd.f32 0.0, %v1023
    %v1025 = vpop.f32.mrf.mxu0
    %1026 = vdwg.mxu0
    %v1027 = vadd.f32 %v978, %v1021
    %v1028 = vadd.f32 %v979, %v1024
    %v1029 = vxor.u32 %v1027, 2147483648
    %v1030 = vxor.u32 %v1028, 2147483648
    %v1031 = vmul.f32 %v1029, 1.442695
    %v1032 = vpow.pop %v1031
    %v1033 = vmul.f32 %v1030, 1.442695
    %v1034 = vpow.pop %v1033
    %v1035 = vadd.f32 %v1032, 1.0
    %v1036 = vadd.f32 %v1034, 1.0
    %v1037 = vrcp.pop %v1035
    %v1038 = vmul.f32 1.0, %v1037
    %v1039 = vrcp.pop %v1036
    %v1040 = vmul.f32 1.0, %v1039
    %v1041 = vtanh.pop %v1027
    %v1042 = vtanh.pop %v1028
    %v1043 = vmul.f32 %v1038, %v963
    %v1044 = vmul.f32 %v1040, %v964
    %1047 = vrot.lane.b32.xlu0 %v1041, 64
    %v1048 = vpop.permute.xlu0 %1047
    %1049 = vrot.lane.b32.xlu0 %v1042, 64
    %v1050 = vpop.permute.xlu0 %1049
    %v1053 = vmul.f32 %v1038, %v1048
    %v1054 = vmul.f32 %v1040, %v1050
    %1057 = vrot.lane.b32.xlu0 %v1053, 32
    %v1058 = vpop.permute.xlu0 %1057
    %1059 = vrot.lane.b32.xlu0 %v1054, 32
    %v1060 = vpop.permute.xlu0 %1059
    %v1063 = vadd.f32 %v1043, %v1058
    %v1064 = vadd.f32 %v1044, %v1060
    %v1065 = vtanh.pop %v1063
    %v1066 = vtanh.pop %v1064
    %1069 = vrot.lane.b32.xlu0 %v1065, 64
    %v1070 = vpop.permute.xlu0 %1069
    %1071 = vrot.lane.b32.xlu0 %v1066, 64
    %v1072 = vpop.permute.xlu0 %1071
    %v1075 = vmul.f32 %v1038, %v1070
    %v1076 = vmul.f32 %v1040, %v1072
    %v1077 = vpack.c.bf16 %v1076, %v1075
    %v1079 = vunpack.c.l.b16 %v377
    %v1080 = vunpack.c.h.b16 %v377
    %v1081 = vunpack.c.l.b16 %v477
    %v1082 = vunpack.c.h.b16 %v477
    %v1083 = vunpack.c.l.b16 %v577
    %v1084 = vunpack.c.h.b16 %v577
    %v1085 = vunpack.c.l.b16 %v677
    %v1086 = vunpack.c.h.b16 %v677
    %v1087 = vunpack.c.l.b16 %v777
    %v1088 = vunpack.c.h.b16 %v777
    %v1089 = vunpack.c.l.b16 %v877
    %v1090 = vunpack.c.h.b16 %v877
    %v1091 = vunpack.c.l.b16 %v977
    %v1092 = vunpack.c.h.b16 %v977
    %v1093 = vunpack.c.l.b16 %v1077
    %v1094 = vunpack.c.h.b16 %v1077
    %v1095 = vpack.c.b16 %v1079, %v1079
    %v1096 = vpack.c.b16 %v1080, %v1080
    %v1097 = vpack.c.b16 %v1081, %v1081
    %v1098 = vpack.c.b16 %v1082, %v1082
    %v1099 = vpack.c.b16 %v1083, %v1083
    %v1100 = vpack.c.b16 %v1084, %v1084
    %v1101 = vpack.c.b16 %v1085, %v1085
    %v1102 = vpack.c.b16 %v1086, %v1086
    %v1103 = vpack.c.b16 %v1087, %v1087
    %v1104 = vpack.c.b16 %v1088, %v1088
    %v1105 = vpack.c.b16 %v1089, %v1089
    %v1106 = vpack.c.b16 %v1090, %v1090
    %v1107 = vpack.c.b16 %v1091, %v1091
    %v1108 = vpack.c.b16 %v1092, %v1092
    %v1109 = vpack.c.b16 %v1093, %v1093
    %v1110 = vpack.c.b16 %v1094, %v1094
    %1111 = vrot.lane.b32.xlu0 %v1095, 32
    %v1112 = vpop.permute.xlu0 %1111
    %1113 = vrot.lane.b32.xlu0 %v1096, 32
    %v1114 = vpop.permute.xlu0 %1113
    %1115 = vrot.lane.b32.xlu0 %v1097, 32
    %v1116 = vpop.permute.xlu0 %1115
    %1117 = vrot.lane.b32.xlu0 %v1098, 32
    %v1118 = vpop.permute.xlu0 %1117
    %1119 = vrot.lane.b32.xlu0 %v1099, 32
    %v1120 = vpop.permute.xlu0 %1119
    %1121 = vrot.lane.b32.xlu0 %v1100, 32
    %v1122 = vpop.permute.xlu0 %1121
    %1123 = vrot.lane.b32.xlu0 %v1101, 32
    %v1124 = vpop.permute.xlu0 %1123
    %1125 = vrot.lane.b32.xlu0 %v1102, 32
    %v1126 = vpop.permute.xlu0 %1125
    %1127 = vrot.lane.b32.xlu0 %v1103, 32
    %v1128 = vpop.permute.xlu0 %1127
    %1129 = vrot.lane.b32.xlu0 %v1104, 32
    %v1130 = vpop.permute.xlu0 %1129
    %1131 = vrot.lane.b32.xlu0 %v1105, 32
    %v1132 = vpop.permute.xlu0 %1131
    %1133 = vrot.lane.b32.xlu0 %v1106, 32
    %v1134 = vpop.permute.xlu0 %1133
    %1135 = vrot.lane.b32.xlu0 %v1107, 32
    %v1136 = vpop.permute.xlu0 %1135
    %1137 = vrot.lane.b32.xlu0 %v1108, 32
    %v1138 = vpop.permute.xlu0 %1137
    %1139 = vrot.lane.b32.xlu0 %v1109, 32
    %v1140 = vpop.permute.xlu0 %1139
    %1141 = vrot.lane.b32.xlu0 %v1110, 32
    %v1142 = vpop.permute.xlu0 %1141
    %vm1159 = vcmask 257024
    %1160 = vst.msk [vmem:[#allocation3] sm:$0xf] %vm1159, %v1112
    %1161 = vst.msk [vmem:[#allocation3 + $0x4] sm:$0xf] %vm1159, %v1114
    %1162 = vst.msk [vmem:[#allocation3 + $0x8] sm:$0xf] %vm1159, %v1116
    %1163 = vst.msk [vmem:[#allocation3 + $0xc] sm:$0xf] %vm1159, %v1118
    %1164 = vst.msk [vmem:[#allocation3 + $0x10] sm:$0xf] %vm1159, %v1120
    %1165 = vst.msk [vmem:[#allocation3 + $0x14] sm:$0xf] %vm1159, %v1122
    %1166 = vst.msk [vmem:[#allocation3 + $0x18] sm:$0xf] %vm1159, %v1124
    %1167 = vst.msk [vmem:[#allocation3 + $0x1c] sm:$0xf] %vm1159, %v1126
    %1168 = vst.msk [vmem:[#allocation3 + $0x20] sm:$0xf] %vm1159, %v1128
    %1169 = vst.msk [vmem:[#allocation3 + $0x24] sm:$0xf] %vm1159, %v1130
    %1170 = vst.msk [vmem:[#allocation3 + $0x28] sm:$0xf] %vm1159, %v1132
    %1171 = vst.msk [vmem:[#allocation3 + $0x2c] sm:$0xf] %vm1159, %v1134
    %1172 = vst.msk [vmem:[#allocation3 + $0x30] sm:$0xf] %vm1159, %v1136
    %1173 = vst.msk [vmem:[#allocation3 + $0x34] sm:$0xf] %vm1159, %v1138
    %1174 = vst.msk [vmem:[#allocation3 + $0x38] sm:$0xf] %vm1159, %v1140
    %1175 = vst.msk [vmem:[#allocation3 + $0x3c] sm:$0xf] %vm1159, %v1142
    %v1176 = vld [vmem:[%s4] sm:$0xf]
    %v1177 = vld [vmem:[%s4 + $0x4] sm:$0xf]
    %v1178 = vld [vmem:[%s4 + $0x8] sm:$0xf]
    %v1179 = vld [vmem:[%s4 + $0xc] sm:$0xf]
    %v1180 = vld [vmem:[%s5] sm:$0xf]
    %v1181 = vld [vmem:[%s5 + $0x4] sm:$0xf]
    %v1182 = vld [vmem:[%s5 + $0x8] sm:$0xf]
    %v1183 = vld [vmem:[%s5 + $0xc] sm:$0xf]
    %v1184 = vld [vmem:[%s6] sm:$0x1]
    %v1185 = vld [vmem:[#allocation3] sm:$0xf]
    %v1186 = vld [vmem:[#allocation3 + $0x4] sm:$0xf]
    %v1187 = vld [vmem:[#allocation3 + $0x8] sm:$0xf]
    %v1188 = vld [vmem:[#allocation3 + $0xc] sm:$0xf]
    %v1189 = vld [vmem:[#allocation3 + $0x10] sm:$0xf]
    %v1190 = vld [vmem:[#allocation3 + $0x14] sm:$0xf]
    %v1191 = vld [vmem:[#allocation3 + $0x18] sm:$0xf]
    %v1192 = vld [vmem:[#allocation3 + $0x1c] sm:$0xf]
    %v1193 = vld [vmem:[#allocation3 + $0x20] sm:$0xf]
    %v1194 = vld [vmem:[#allocation3 + $0x24] sm:$0xf]
    %v1195 = vld [vmem:[#allocation3 + $0x28] sm:$0xf]
    %v1196 = vld [vmem:[#allocation3 + $0x2c] sm:$0xf]
    %v1197 = vld [vmem:[#allocation3 + $0x30] sm:$0xf]
    %v1198 = vld [vmem:[#allocation3 + $0x34] sm:$0xf]
    %v1199 = vld [vmem:[#allocation3 + $0x38] sm:$0xf]
    %v1200 = vld [vmem:[#allocation3 + $0x3c] sm:$0xf]
    %v1202 = vlaneseq
    %v1203 = vshrl.u32 %v1202, 7
    %v1204 = vsub.s32 0, %v1203
    %v1205 = vrot.slane %v1184, %v1204
    %v1223 = vunpack.c.l.b16 %v1185
    %v1224 = vunpack.c.l.b16 %v1186
    %v1225 = vunpack.c.l.b16 %v1187
    %v1226 = vunpack.c.l.b16 %v1188
    %v1227 = vunpack.c.l.b16 %v1189
    %v1228 = vunpack.c.l.b16 %v1190
    %v1229 = vunpack.c.l.b16 %v1191
    %v1230 = vunpack.c.l.b16 %v1192
    %v1231 = vunpack.c.l.b16 %v1193
    %v1232 = vunpack.c.l.b16 %v1194
    %v1233 = vunpack.c.l.b16 %v1195
    %v1234 = vunpack.c.l.b16 %v1196
    %v1235 = vunpack.c.l.b16 %v1197
    %v1236 = vunpack.c.l.b16 %v1198
    %v1237 = vunpack.c.l.b16 %v1199
    %v1238 = vunpack.c.l.b16 %v1200
    %v1239 = vpack.c.b16 %v1224, %v1223
    %v1240 = vpack.c.b16 %v1226, %v1225
    %v1241 = vpack.c.b16 %v1228, %v1227
    %v1242 = vpack.c.b16 %v1230, %v1229
    %v1243 = vpack.c.b16 %v1232, %v1231
    %v1244 = vpack.c.b16 %v1234, %v1233
    %v1245 = vpack.c.b16 %v1236, %v1235
    %v1246 = vpack.c.b16 %v1238, %v1237
    %v1251 = vunpack.c.l.b16 %v1176
    %v1252 = vunpack.c.l.b16 %v1177
    %v1253 = vunpack.c.l.b16 %v1178
    %v1254 = vunpack.c.l.b16 %v1179
    %v1255 = vpack.c.b16 %v1252, %v1251
    %v1256 = vpack.c.b16 %v1254, %v1253
    %v1260 = vsel %vm279, %v1239, 0
    %v1263 = vsel %vm279, %v1240, 0
    %v1266 = vsel %vm279, %v1241, 0
    %v1269 = vsel %vm279, %v1242, 0
    %v1272 = vsel %vm279, %v1243, 0
    %v1275 = vsel %vm279, %v1244, 0
    %v1278 = vsel %vm279, %v1245, 0
    %v1281 = vsel %vm279, %v1246, 0
    %1283 = vmatprep.subr.bf16.mxu0 0
    %1284 = vmatpush1.bf16.msra.mxu0 0
    %1285 = vmatprep.subr.bf16.mxu0 0
    %1286 = vmatpush1.bf16.msra.mxu0 0
    %1287 = vmatprep.subr.bf16.mxu0 0
    %1288 = vmatpush1.bf16.msra.mxu0 0
    %1289 = vmatprep.subr.bf16.mxu0 0
    %1290 = vmatpush1.bf16.msra.mxu0 0
    %1291 = vmatprep.subr.bf16.mxu0 0
    %1292 = vmatpush1.bf16.msra.mxu0 0
    %1293 = vmatprep.subr.bf16.mxu0 0
    %1294 = vmatpush1.bf16.msra.mxu0 0
    %1295 = vmatprep.subr.bf16.mxu0 0
    %1296 = vmatpush1.bf16.msra.mxu0 %v1256
    %1297 = vmatprep.subr.bf16.mxu0 0
    %1298 = vmatpush1.bf16.msra.mxu0 %v1255
    %1299 = vmatprep.subr.bf16.mxu0 0
    %1300 = vmatpush2.bf16.msra.mxu0 0
    %1301 = vmatprep.subr.bf16.mxu0 0
    %1302 = vmatpush2.bf16.msra.mxu0 0
    %1303 = vmatprep.subr.bf16.mxu0 0
    %1304 = vmatpush2.bf16.msra.mxu0 0
    %1305 = vmatprep.subr.bf16.mxu0 0
    %1306 = vmatpush2.bf16.msra.mxu0 0
    %1307 = vmatprep.subr.bf16.mxu0 0
    %1308 = vmatpush2.bf16.msra.mxu0 0
    %1309 = vmatprep.subr.bf16.mxu0 0
    %1310 = vmatpush2.bf16.msra.mxu0 0
    %1311 = vmatprep.subr.bf16.mxu0 0
    %1312 = vmatpush2.bf16.msra.mxu0 0
    %1313 = vmatprep.subr.bf16.mxu0 0
    %1314 = vmatpush2.bf16.msra.mxu0 0
    %1315 = vmatprep.mubr.bf16.mxu0 0
    %1316 = vmatmul.mubr.bf16.gmra.mxu0 %v1260
    %v1317 = vpop.f32.mrf.mxu0
    %v1318 = vadd.f32 %v1205, %v1317
    %v1319 = vpop.f32.mrf.mxu0
    %v1320 = vpop.f32.mrf.mxu0
    %v1321 = vadd.f32 %v1205, %v1320
    %v1322 = vpop.f32.mrf.mxu0
    %1323 = vmatprep.mubr.bf16.mxu0 0
    %1324 = vmatmul.mubr.bf16.gmra.mxu0 %v1263
    %v1325 = vpop.f32.mrf.mxu0
    %v1326 = vadd.f32 %v1205, %v1325
    %v1327 = vpop.f32.mrf.mxu0
    %v1328 = vpop.f32.mrf.mxu0
    %v1329 = vadd.f32 %v1205, %v1328
    %v1330 = vpop.f32.mrf.mxu0
    %1331 = vmatprep.mubr.bf16.mxu0 0
    %1332 = vmatmul.mubr.bf16.gmra.mxu0 %v1266
    %v1333 = vpop.f32.mrf.mxu0
    %v1334 = vadd.f32 %v1205, %v1333
    %v1335 = vpop.f32.mrf.mxu0
    %v1336 = vpop.f32.mrf.mxu0
    %v1337 = vadd.f32 %v1205, %v1336
    %v1338 = vpop.f32.mrf.mxu0
    %1339 = vmatprep.mubr.bf16.mxu0 0
    %1340 = vmatmul.mubr.bf16.gmra.mxu0 %v1269
    %v1341 = vpop.f32.mrf.mxu0
    %v1342 = vadd.f32 %v1205, %v1341
    %v1343 = vpop.f32.mrf.mxu0
    %v1344 = vpop.f32.mrf.mxu0
    %v1345 = vadd.f32 %v1205, %v1344
    %v1346 = vpop.f32.mrf.mxu0
    %1347 = vmatprep.mubr.bf16.mxu0 0
    %1348 = vmatmul.mubr.bf16.gmra.mxu0 %v1272
    %v1349 = vpop.f32.mrf.mxu0
    %v1350 = vadd.f32 %v1205, %v1349
    %v1351 = vpop.f32.mrf.mxu0
    %v1352 = vpop.f32.mrf.mxu0
    %v1353 = vadd.f32 %v1205, %v1352
    %v1354 = vpop.f32.mrf.mxu0
    %1355 = vmatprep.mubr.bf16.mxu0 0
    %1356 = vmatmul.mubr.bf16.gmra.mxu0 %v1275
    %v1357 = vpop.f32.mrf.mxu0
    %v1358 = vadd.f32 %v1205, %v1357
    %v1359 = vpop.f32.mrf.mxu0
    %v1360 = vpop.f32.mrf.mxu0
    %v1361 = vadd.f32 %v1205, %v1360
    %v1362 = vpop.f32.mrf.mxu0
    %1363 = vmatprep.mubr.bf16.mxu0 0
    %1364 = vmatmul.mubr.bf16.gmra.mxu0 %v1278
    %v1365 = vpop.f32.mrf.mxu0
    %v1366 = vadd.f32 %v1205, %v1365
    %v1367 = vpop.f32.mrf.mxu0
    %v1368 = vpop.f32.mrf.mxu0
    %v1369 = vadd.f32 %v1205, %v1368
    %v1370 = vpop.f32.mrf.mxu0
    %1371 = vmatprep.mubr.bf16.mxu0 0
    %1372 = vmatmul.mubr.bf16.gmra.mxu0 %v1281
    %v1373 = vpop.f32.mrf.mxu0
    %v1374 = vadd.f32 %v1205, %v1373
    %v1375 = vpop.f32.mrf.mxu0
    %v1376 = vpop.f32.mrf.mxu0
    %v1377 = vadd.f32 %v1205, %v1376
    %v1378 = vpop.f32.mrf.mxu0
    %1379 = vdwg.mxu0
    %1380 = vst [vmem:[#allocation2] sm:$0xff] %v1318
    %1381 = vst [vmem:[#allocation2 + $0x8] sm:$0xff] %v1321
    %1382 = vst [vmem:[#allocation2 + $0x10] sm:$0xff] %v1326
    %1383 = vst [vmem:[#allocation2 + $0x18] sm:$0xff] %v1329
    %1384 = vst [vmem:[#allocation2 + $0x20] sm:$0xff] %v1334
    %1385 = vst [vmem:[#allocation2 + $0x28] sm:$0xff] %v1337
    %1386 = vst [vmem:[#allocation2 + $0x30] sm:$0xff] %v1342
    %1387 = vst [vmem:[#allocation2 + $0x38] sm:$0xff] %v1345
    %1388 = vst [vmem:[#allocation2 + $0x40] sm:$0xff] %v1350
    %1389 = vst [vmem:[#allocation2 + $0x48] sm:$0xff] %v1353
    %1390 = vst [vmem:[#allocation2 + $0x50] sm:$0xff] %v1358
    %1391 = vst [vmem:[#allocation2 + $0x58] sm:$0xff] %v1361
    %1392 = vst [vmem:[#allocation2 + $0x60] sm:$0xff] %v1366
    %1393 = vst [vmem:[#allocation2 + $0x68] sm:$0xff] %v1369
    %1394 = vst [vmem:[#allocation2 + $0x70] sm:$0xff] %v1374
    %1395 = vst [vmem:[#allocation2 + $0x78] sm:$0xff] %v1377
    %s1396 = scalar_lea.vmem %s7, 1
    %v1397 = vld [vmem:[%s1396] sm:$0x1]
    %v1399 = vlaneseq
    %v1400 = vshrl.u32 %v1399, 7
    %v1401 = vsub.s32 0, %v1400
    %v1402 = vrot.slane %v1397, %v1401
    %v1404 = vpack.c.bf16 %v1402, %v1402
    %v1406 = vunpack.c.l.b16 %v1404
    %v1407 = vpack.c.b16 %v1406, %v1406
    %1409 = vst.msk [vmem:[#allocation3] sm:$0xf] %vm1159, %v1407
    %1410 = vst.msk [vmem:[#allocation3 + $0x4] sm:$0xf] %vm1159, %v1407
    %v1411 = vld [vmem:[%s1396] sm:$0x1]
    %v1413 = vlaneseq
    %v1414 = vshrl.u32 %v1413, 7
    %v1415 = vsub.s32 0, %v1414
    %v1416 = vrot.slane %v1411, %v1415
    %s1418 = scalar_lea.vmem %s8, 1
    %v1419 = vld [vmem:[%s1418] sm:$0x1]
    %v1421 = vlaneseq
    %v1422 = vshrl.u32 %v1421, 7
    %v1423 = vsub.s32 0, %v1422
    %v1424 = vrot.slane %v1419, %v1423
    %v1425 = vld [vmem:[#allocation2] sm:$0xff]
    %v1426 = vld [vmem:[#allocation2 + $0x8] sm:$0xff]
    %v1427 = vpack.c.bf16 %v1416, %v1416
    %v1432 = vunpack.c.l.b16 %v1180
    %v1433 = vunpack.c.l.b16 %v1181
    %v1434 = vunpack.c.l.b16 %v1182
    %v1435 = vunpack.c.l.b16 %v1183
    %v1436 = vpack.c.b16 %v1433, %v1432
    %v1437 = vpack.c.b16 %v1435, %v1434
    %v1441 = vsel %vm279, %v1427, 0
    %1443 = vmatprep.subr.bf16.mxu0 0
    %1444 = vmatpush1.bf16.msra.mxu0 0
    %1445 = vmatprep.subr.bf16.mxu0 0
    %1446 = vmatpush1.bf16.msra.mxu0 0
    %1447 = vmatprep.subr.bf16.mxu0 0
    %1448 = vmatpush1.bf16.msra.mxu0 0
    %1449 = vmatprep.subr.bf16.mxu0 0
    %1450 = vmatpush1.bf16.msra.mxu0 0
    %1451 = vmatprep.subr.bf16.mxu0 0
    %1452 = vmatpush1.bf16.msra.mxu0 0
    %1453 = vmatprep.subr.bf16.mxu0 0
    %1454 = vmatpush1.bf16.msra.mxu0 0
    %1455 = vmatprep.subr.bf16.mxu0 0
    %1456 = vmatpush1.bf16.msra.mxu0 %v1437
    %1457 = vmatprep.subr.bf16.mxu0 0
    %1458 = vmatpush1.bf16.msra.mxu0 %v1436
    %1459 = vmatprep.subr.bf16.mxu0 0
    %1460 = vmatpush2.bf16.msra.mxu0 0
    %1461 = vmatprep.subr.bf16.mxu0 0
    %1462 = vmatpush2.bf16.msra.mxu0 0
    %1463 = vmatprep.subr.bf16.mxu0 0
    %1464 = vmatpush2.bf16.msra.mxu0 0
    %1465 = vmatprep.subr.bf16.mxu0 0
    %1466 = vmatpush2.bf16.msra.mxu0 0
    %1467 = vmatprep.subr.bf16.mxu0 0
    %1468 = vmatpush2.bf16.msra.mxu0 0
    %1469 = vmatprep.subr.bf16.mxu0 0
    %1470 = vmatpush2.bf16.msra.mxu0 0
    %1471 = vmatprep.subr.bf16.mxu0 0
    %1472 = vmatpush2.bf16.msra.mxu0 0
    %1473 = vmatprep.subr.bf16.mxu0 0
    %1474 = vmatpush2.bf16.msra.mxu0 0
    %1475 = vmatprep.mubr.bf16.mxu0 0
    %1476 = vmatmul.mubr.bf16.gmra.mxu0 %v1441
    %v1477 = vpop.f32.mrf.mxu0
    %v1478 = vadd.f32 0.0, %v1477
    %v1479 = vpop.f32.mrf.mxu0
    %v1480 = vpop.f32.mrf.mxu0
    %v1481 = vadd.f32 0.0, %v1480
    %v1482 = vpop.f32.mrf.mxu0
    %1483 = vdwg.mxu0
    %v1484 = vadd.f32 %v1425, %v1478
    %v1485 = vadd.f32 %v1426, %v1481
    %v1486 = vxor.u32 %v1484, 2147483648
    %v1487 = vxor.u32 %v1485, 2147483648
    %v1488 = vmul.f32 %v1486, 1.442695
    %v1489 = vpow.pop %v1488
    %v1490 = vmul.f32 %v1487, 1.442695
    %v1491 = vpow.pop %v1490
    %v1492 = vadd.f32 %v1489, 1.0
    %v1493 = vadd.f32 %v1491, 1.0
    %v1494 = vrcp.pop %v1492
    %v1495 = vmul.f32 1.0, %v1494
    %v1496 = vrcp.pop %v1493
    %v1497 = vmul.f32 1.0, %v1496
    %v1498 = vtanh.pop %v1484
    %v1499 = vtanh.pop %v1485
    %1500 = vrot.lane.b32.xlu0 %v1424, 32
    %v1501 = vpop.permute.xlu0 %1500
    %v1503 = vmul.f32 %v1495, %v1501
    %v1504 = vmul.f32 %v1497, %v1501
    %1507 = vrot.lane.b32.xlu0 %v1498, 64
    %v1508 = vpop.permute.xlu0 %1507
    %1509 = vrot.lane.b32.xlu0 %v1499, 64
    %v1510 = vpop.permute.xlu0 %1509
    %v1513 = vmul.f32 %v1495, %v1508
    %v1514 = vmul.f32 %v1497, %v1510
    %1517 = vrot.lane.b32.xlu0 %v1513, 32
    %v1518 = vpop.permute.xlu0 %1517
    %1519 = vrot.lane.b32.xlu0 %v1514, 32
    %v1520 = vpop.permute.xlu0 %1519
    %v1523 = vadd.f32 %v1503, %v1518
    %v1524 = vadd.f32 %v1504, %v1520
    %v1525 = vtanh.pop %v1523
    %v1526 = vtanh.pop %v1524
    %1529 = vrot.lane.b32.xlu0 %v1525, 64
    %v1530 = vpop.permute.xlu0 %1529
    %1531 = vrot.lane.b32.xlu0 %v1526, 64
    %v1532 = vpop.permute.xlu0 %1531
    %v1535 = vmul.f32 %v1495, %v1530
    %v1536 = vmul.f32 %v1497, %v1532
    %v1537 = vpack.c.bf16 %v1536, %v1535
    %v1538 = vld [vmem:[#allocation2 + $0x10] sm:$0xff]
    %v1539 = vld [vmem:[#allocation2 + $0x18] sm:$0xff]
    %1541 = vrot.lane.b32.xlu0 %v1537, 32
    %v1542 = vpop.permute.xlu0 %1541
    %v1544 = vsel %vm279, %v1542, 0
    %1546 = vmatprep.subr.bf16.mxu0 0
    %1547 = vmatpush1.bf16.msra.mxu0 0
    %1548 = vmatprep.subr.bf16.mxu0 0
    %1549 = vmatpush1.bf16.msra.mxu0 0
    %1550 = vmatprep.subr.bf16.mxu0 0
    %1551 = vmatpush1.bf16.msra.mxu0 0
    %1552 = vmatprep.subr.bf16.mxu0 0
    %1553 = vmatpush1.bf16.msra.mxu0 0
    %1554 = vmatprep.subr.bf16.mxu0 0
    %1555 = vmatpush1.bf16.msra.mxu0 0
    %1556 = vmatprep.subr.bf16.mxu0 0
    %1557 = vmatpush1.bf16.msra.mxu0 0
    %1558 = vmatprep.subr.bf16.mxu0 0
    %1559 = vmatpush1.bf16.msra.mxu0 %v1437
    %1560 = vmatprep.subr.bf16.mxu0 0
    %1561 = vmatpush1.bf16.msra.mxu0 %v1436
    %1562 = vmatprep.subr.bf16.mxu0 0
    %1563 = vmatpush2.bf16.msra.mxu0 0
    %1564 = vmatprep.subr.bf16.mxu0 0
    %1565 = vmatpush2.bf16.msra.mxu0 0
    %1566 = vmatprep.subr.bf16.mxu0 0
    %1567 = vmatpush2.bf16.msra.mxu0 0
    %1568 = vmatprep.subr.bf16.mxu0 0
    %1569 = vmatpush2.bf16.msra.mxu0 0
    %1570 = vmatprep.subr.bf16.mxu0 0
    %1571 = vmatpush2.bf16.msra.mxu0 0
    %1572 = vmatprep.subr.bf16.mxu0 0
    %1573 = vmatpush2.bf16.msra.mxu0 0
    %1574 = vmatprep.subr.bf16.mxu0 0
    %1575 = vmatpush2.bf16.msra.mxu0 0
    %1576 = vmatprep.subr.bf16.mxu0 0
    %1577 = vmatpush2.bf16.msra.mxu0 0
    %1578 = vmatprep.mubr.bf16.mxu0 0
    %1579 = vmatmul.mubr.bf16.gmra.mxu0 %v1544
    %v1580 = vpop.f32.mrf.mxu0
    %v1581 = vadd.f32 0.0, %v1580
    %v1582 = vpop.f32.mrf.mxu0
    %v1583 = vpop.f32.mrf.mxu0
    %v1584 = vadd.f32 0.0, %v1583
    %v1585 = vpop.f32.mrf.mxu0
    %1586 = vdwg.mxu0
    %v1587 = vadd.f32 %v1538, %v1581
    %v1588 = vadd.f32 %v1539, %v1584
    %v1589 = vxor.u32 %v1587, 2147483648
    %v1590 = vxor.u32 %v1588, 2147483648
    %v1591 = vmul.f32 %v1589, 1.442695
    %v1592 = vpow.pop %v1591
    %v1593 = vmul.f32 %v1590, 1.442695
    %v1594 = vpow.pop %v1593
    %v1595 = vadd.f32 %v1592, 1.0
    %v1596 = vadd.f32 %v1594, 1.0
    %v1597 = vrcp.pop %v1595
    %v1598 = vmul.f32 1.0, %v1597
    %v1599 = vrcp.pop %v1596
    %v1600 = vmul.f32 1.0, %v1599
    %v1601 = vtanh.pop %v1587
    %v1602 = vtanh.pop %v1588
    %v1603 = vmul.f32 %v1598, %v1523
    %v1604 = vmul.f32 %v1600, %v1524
    %1607 = vrot.lane.b32.xlu0 %v1601, 64
    %v1608 = vpop.permute.xlu0 %1607
    %1609 = vrot.lane.b32.xlu0 %v1602, 64
    %v1610 = vpop.permute.xlu0 %1609
    %v1613 = vmul.f32 %v1598, %v1608
    %v1614 = vmul.f32 %v1600, %v1610
    %1617 = vrot.lane.b32.xlu0 %v1613, 32
    %v1618 = vpop.permute.xlu0 %1617
    %1619 = vrot.lane.b32.xlu0 %v1614, 32
    %v1620 = vpop.permute.xlu0 %1619
    %v1623 = vadd.f32 %v1603, %v1618
    %v1624 = vadd.f32 %v1604, %v1620
    %v1625 = vtanh.pop %v1623
    %v1626 = vtanh.pop %v1624
    %1629 = vrot.lane.b32.xlu0 %v1625, 64
    %v1630 = vpop.permute.xlu0 %1629
    %1631 = vrot.lane.b32.xlu0 %v1626, 64
    %v1632 = vpop.permute.xlu0 %1631
    %v1635 = vmul.f32 %v1598, %v1630
    %v1636 = vmul.f32 %v1600, %v1632
    %v1637 = vpack.c.bf16 %v1636, %v1635
    %v1638 = vld [vmem:[#allocation2 + $0x20] sm:$0xff]
    %v1639 = vld [vmem:[#allocation2 + $0x28] sm:$0xff]
    %1641 = vrot.lane.b32.xlu0 %v1637, 32
    %v1642 = vpop.permute.xlu0 %1641
    %v1644 = vsel %vm279, %v1642, 0
    %1646 = vmatprep.subr.bf16.mxu0 0
    %1647 = vmatpush1.bf16.msra.mxu0 0
    %1648 = vmatprep.subr.bf16.mxu0 0
    %1649 = vmatpush1.bf16.msra.mxu0 0
    %1650 = vmatprep.subr.bf16.mxu0 0
    %1651 = vmatpush1.bf16.msra.mxu0 0
    %1652 = vmatprep.subr.bf16.mxu0 0
    %1653 = vmatpush1.bf16.msra.mxu0 0
    %1654 = vmatprep.subr.bf16.mxu0 0
    %1655 = vmatpush1.bf16.msra.mxu0 0
    %1656 = vmatprep.subr.bf16.mxu0 0
    %1657 = vmatpush1.bf16.msra.mxu0 0
    %1658 = vmatprep.subr.bf16.mxu0 0
    %1659 = vmatpush1.bf16.msra.mxu0 %v1437
    %1660 = vmatprep.subr.bf16.mxu0 0
    %1661 = vmatpush1.bf16.msra.mxu0 %v1436
    %1662 = vmatprep.subr.bf16.mxu0 0
    %1663 = vmatpush2.bf16.msra.mxu0 0
    %1664 = vmatprep.subr.bf16.mxu0 0
    %1665 = vmatpush2.bf16.msra.mxu0 0
    %1666 = vmatprep.subr.bf16.mxu0 0
    %1667 = vmatpush2.bf16.msra.mxu0 0
    %1668 = vmatprep.subr.bf16.mxu0 0
    %1669 = vmatpush2.bf16.msra.mxu0 0
    %1670 = vmatprep.subr.bf16.mxu0 0
    %1671 = vmatpush2.bf16.msra.mxu0 0
    %1672 = vmatprep.subr.bf16.mxu0 0
    %1673 = vmatpush2.bf16.msra.mxu0 0
    %1674 = vmatprep.subr.bf16.mxu0 0
    %1675 = vmatpush2.bf16.msra.mxu0 0
    %1676 = vmatprep.subr.bf16.mxu0 0
    %1677 = vmatpush2.bf16.msra.mxu0 0
    %1678 = vmatprep.mubr.bf16.mxu0 0
    %1679 = vmatmul.mubr.bf16.gmra.mxu0 %v1644
    %v1680 = vpop.f32.mrf.mxu0
    %v1681 = vadd.f32 0.0, %v1680
    %v1682 = vpop.f32.mrf.mxu0
    %v1683 = vpop.f32.mrf.mxu0
    %v1684 = vadd.f32 0.0, %v1683
    %v1685 = vpop.f32.mrf.mxu0
    %1686 = vdwg.mxu0
    %v1687 = vadd.f32 %v1638, %v1681
    %v1688 = vadd.f32 %v1639, %v1684
    %v1689 = vxor.u32 %v1687, 2147483648
    %v1690 = vxor.u32 %v1688, 2147483648
    %v1691 = vmul.f32 %v1689, 1.442695
    %v1692 = vpow.pop %v1691
    %v1693 = vmul.f32 %v1690, 1.442695
    %v1694 = vpow.pop %v1693
    %v1695 = vadd.f32 %v1692, 1.0
    %v1696 = vadd.f32 %v1694, 1.0
    %v1697 = vrcp.pop %v1695
    %v1698 = vmul.f32 1.0, %v1697
    %v1699 = vrcp.pop %v1696
    %v1700 = vmul.f32 1.0, %v1699
    %v1701 = vtanh.pop %v1687
    %v1702 = vtanh.pop %v1688
    %v1703 = vmul.f32 %v1698, %v1623
    %v1704 = vmul.f32 %v1700, %v1624
    %1707 = vrot.lane.b32.xlu0 %v1701, 64
    %v1708 = vpop.permute.xlu0 %1707
    %1709 = vrot.lane.b32.xlu0 %v1702, 64
    %v1710 = vpop.permute.xlu0 %1709
    %v1713 = vmul.f32 %v1698, %v1708
    %v1714 = vmul.f32 %v1700, %v1710
    %1717 = vrot.lane.b32.xlu0 %v1713, 32
    %v1718 = vpop.permute.xlu0 %1717
    %1719 = vrot.lane.b32.xlu0 %v1714, 32
    %v1720 = vpop.permute.xlu0 %1719
    %v1723 = vadd.f32 %v1703, %v1718
    %v1724 = vadd.f32 %v1704, %v1720
    %v1725 = vtanh.pop %v1723
    %v1726 = vtanh.pop %v1724
    %1729 = vrot.lane.b32.xlu0 %v1725, 64
    %v1730 = vpop.permute.xlu0 %1729
    %1731 = vrot.lane.b32.xlu0 %v1726, 64
    %v1732 = vpop.permute.xlu0 %1731
    %v1735 = vmul.f32 %v1698, %v1730
    %v1736 = vmul.f32 %v1700, %v1732
    %v1737 = vpack.c.bf16 %v1736, %v1735
    %v1738 = vld [vmem:[#allocation2 + $0x30] sm:$0xff]
    %v1739 = vld [vmem:[#allocation2 + $0x38] sm:$0xff]
    %1741 = vrot.lane.b32.xlu0 %v1737, 32
    %v1742 = vpop.permute.xlu0 %1741
    %v1744 = vsel %vm279, %v1742, 0
    %1746 = vmatprep.subr.bf16.mxu0 0
    %1747 = vmatpush1.bf16.msra.mxu0 0
    %1748 = vmatprep.subr.bf16.mxu0 0
    %1749 = vmatpush1.bf16.msra.mxu0 0
    %1750 = vmatprep.subr.bf16.mxu0 0
    %1751 = vmatpush1.bf16.msra.mxu0 0
    %1752 = vmatprep.subr.bf16.mxu0 0
    %1753 = vmatpush1.bf16.msra.mxu0 0
    %1754 = vmatprep.subr.bf16.mxu0 0
    %1755 = vmatpush1.bf16.msra.mxu0 0
    %1756 = vmatprep.subr.bf16.mxu0 0
    %1757 = vmatpush1.bf16.msra.mxu0 0
    %1758 = vmatprep.subr.bf16.mxu0 0
    %1759 = vmatpush1.bf16.msra.mxu0 %v1437
    %1760 = vmatprep.subr.bf16.mxu0 0
    %1761 = vmatpush1.bf16.msra.mxu0 %v1436
    %1762 = vmatprep.subr.bf16.mxu0 0
    %1763 = vmatpush2.bf16.msra.mxu0 0
    %1764 = vmatprep.subr.bf16.mxu0 0
    %1765 = vmatpush2.bf16.msra.mxu0 0
    %1766 = vmatprep.subr.bf16.mxu0 0
    %1767 = vmatpush2.bf16.msra.mxu0 0
    %1768 = vmatprep.subr.bf16.mxu0 0
    %1769 = vmatpush2.bf16.msra.mxu0 0
    %1770 = vmatprep.subr.bf16.mxu0 0
    %1771 = vmatpush2.bf16.msra.mxu0 0
    %1772 = vmatprep.subr.bf16.mxu0 0
    %1773 = vmatpush2.bf16.msra.mxu0 0
    %1774 = vmatprep.subr.bf16.mxu0 0
    %1775 = vmatpush2.bf16.msra.mxu0 0
    %1776 = vmatprep.subr.bf16.mxu0 0
    %1777 = vmatpush2.bf16.msra.mxu0 0
    %1778 = vmatprep.mubr.bf16.mxu0 0
    %1779 = vmatmul.mubr.bf16.gmra.mxu0 %v1744
    %v1780 = vpop.f32.mrf.mxu0
    %v1781 = vadd.f32 0.0, %v1780
    %v1782 = vpop.f32.mrf.mxu0
    %v1783 = vpop.f32.mrf.mxu0
    %v1784 = vadd.f32 0.0, %v1783
    %v1785 = vpop.f32.mrf.mxu0
    %1786 = vdwg.mxu0
    %v1787 = vadd.f32 %v1738, %v1781
    %v1788 = vadd.f32 %v1739, %v1784
    %v1789 = vxor.u32 %v1787, 2147483648
    %v1790 = vxor.u32 %v1788, 2147483648
    %v1791 = vmul.f32 %v1789, 1.442695
    %v1792 = vpow.pop %v1791
    %v1793 = vmul.f32 %v1790, 1.442695
    %v1794 = vpow.pop %v1793
    %v1795 = vadd.f32 %v1792, 1.0
    %v1796 = vadd.f32 %v1794, 1.0
    %v1797 = vrcp.pop %v1795
    %v1798 = vmul.f32 1.0, %v1797
    %v1799 = vrcp.pop %v1796
    %v1800 = vmul.f32 1.0, %v1799
    %v1801 = vtanh.pop %v1787
    %v1802 = vtanh.pop %v1788
    %v1803 = vmul.f32 %v1798, %v1723
    %v1804 = vmul.f32 %v1800, %v1724
    %1807 = vrot.lane.b32.xlu0 %v1801, 64
    %v1808 = vpop.permute.xlu0 %1807
    %1809 = vrot.lane.b32.xlu0 %v1802, 64
    %v1810 = vpop.permute.xlu0 %1809
    %v1813 = vmul.f32 %v1798, %v1808
    %v1814 = vmul.f32 %v1800, %v1810
    %1817 = vrot.lane.b32.xlu0 %v1813, 32
    %v1818 = vpop.permute.xlu0 %1817
    %1819 = vrot.lane.b32.xlu0 %v1814, 32
    %v1820 = vpop.permute.xlu0 %1819
    %v1823 = vadd.f32 %v1803, %v1818
    %v1824 = vadd.f32 %v1804, %v1820
    %v1825 = vtanh.pop %v1823
    %v1826 = vtanh.pop %v1824
    %1829 = vrot.lane.b32.xlu0 %v1825, 64
    %v1830 = vpop.permute.xlu0 %1829
    %1831 = vrot.lane.b32.xlu0 %v1826, 64
    %v1832 = vpop.permute.xlu0 %1831
    %v1835 = vmul.f32 %v1798, %v1830
    %v1836 = vmul.f32 %v1800, %v1832
    %v1837 = vpack.c.bf16 %v1836, %v1835
    %v1838 = vld [vmem:[#allocation2 + $0x40] sm:$0xff]
    %v1839 = vld [vmem:[#allocation2 + $0x48] sm:$0xff]
    %1841 = vrot.lane.b32.xlu0 %v1837, 32
    %v1842 = vpop.permute.xlu0 %1841
    %v1844 = vsel %vm279, %v1842, 0
    %1846 = vmatprep.subr.bf16.mxu0 0
    %1847 = vmatpush1.bf16.msra.mxu0 0
    %1848 = vmatprep.subr.bf16.mxu0 0
    %1849 = vmatpush1.bf16.msra.mxu0 0
    %1850 = vmatprep.subr.bf16.mxu0 0
    %1851 = vmatpush1.bf16.msra.mxu0 0
    %1852 = vmatprep.subr.bf16.mxu0 0
    %1853 = vmatpush1.bf16.msra.mxu0 0
    %1854 = vmatprep.subr.bf16.mxu0 0
    %1855 = vmatpush1.bf16.msra.mxu0 0
    %1856 = vmatprep.subr.bf16.mxu0 0
    %1857 = vmatpush1.bf16.msra.mxu0 0
    %1858 = vmatprep.subr.bf16.mxu0 0
    %1859 = vmatpush1.bf16.msra.mxu0 %v1437
    %1860 = vmatprep.subr.bf16.mxu0 0
    %1861 = vmatpush1.bf16.msra.mxu0 %v1436
    %1862 = vmatprep.subr.bf16.mxu0 0
    %1863 = vmatpush2.bf16.msra.mxu0 0
    %1864 = vmatprep.subr.bf16.mxu0 0
    %1865 = vmatpush2.bf16.msra.mxu0 0
    %1866 = vmatprep.subr.bf16.mxu0 0
    %1867 = vmatpush2.bf16.msra.mxu0 0
    %1868 = vmatprep.subr.bf16.mxu0 0
    %1869 = vmatpush2.bf16.msra.mxu0 0
    %1870 = vmatprep.subr.bf16.mxu0 0
    %1871 = vmatpush2.bf16.msra.mxu0 0
    %1872 = vmatprep.subr.bf16.mxu0 0
    %1873 = vmatpush2.bf16.msra.mxu0 0
    %1874 = vmatprep.subr.bf16.mxu0 0
    %1875 = vmatpush2.bf16.msra.mxu0 0
    %1876 = vmatprep.subr.bf16.mxu0 0
    %1877 = vmatpush2.bf16.msra.mxu0 0
    %1878 = vmatprep.mubr.bf16.mxu0 0
    %1879 = vmatmul.mubr.bf16.gmra.mxu0 %v1844
    %v1880 = vpop.f32.mrf.mxu0
    %v1881 = vadd.f32 0.0, %v1880
    %v1882 = vpop.f32.mrf.mxu0
    %v1883 = vpop.f32.mrf.mxu0
    %v1884 = vadd.f32 0.0, %v1883
    %v1885 = vpop.f32.mrf.mxu0
    %1886 = vdwg.mxu0
    %v1887 = vadd.f32 %v1838, %v1881
    %v1888 = vadd.f32 %v1839, %v1884
    %v1889 = vxor.u32 %v1887, 2147483648
    %v1890 = vxor.u32 %v1888, 2147483648
    %v1891 = vmul.f32 %v1889, 1.442695
    %v1892 = vpow.pop %v1891
    %v1893 = vmul.f32 %v1890, 1.442695
    %v1894 = vpow.pop %v1893
    %v1895 = vadd.f32 %v1892, 1.0
    %v1896 = vadd.f32 %v1894, 1.0
    %v1897 = vrcp.pop %v1895
    %v1898 = vmul.f32 1.0, %v1897
    %v1899 = vrcp.pop %v1896
    %v1900 = vmul.f32 1.0, %v1899
    %v1901 = vtanh.pop %v1887
    %v1902 = vtanh.pop %v1888
    %v1903 = vmul.f32 %v1898, %v1823
    %v1904 = vmul.f32 %v1900, %v1824
    %1907 = vrot.lane.b32.xlu0 %v1901, 64
    %v1908 = vpop.permute.xlu0 %1907
    %1909 = vrot.lane.b32.xlu0 %v1902, 64
    %v1910 = vpop.permute.xlu0 %1909
    %v1913 = vmul.f32 %v1898, %v1908
    %v1914 = vmul.f32 %v1900, %v1910
    %1917 = vrot.lane.b32.xlu0 %v1913, 32
    %v1918 = vpop.permute.xlu0 %1917
    %1919 = vrot.lane.b32.xlu0 %v1914, 32
    %v1920 = vpop.permute.xlu0 %1919
    %v1923 = vadd.f32 %v1903, %v1918
    %v1924 = vadd.f32 %v1904, %v1920
    %v1925 = vtanh.pop %v1923
    %v1926 = vtanh.pop %v1924
    %1929 = vrot.lane.b32.xlu0 %v1925, 64
    %v1930 = vpop.permute.xlu0 %1929
    %1931 = vrot.lane.b32.xlu0 %v1926, 64
    %v1932 = vpop.permute.xlu0 %1931
    %v1935 = vmul.f32 %v1898, %v1930
    %v1936 = vmul.f32 %v1900, %v1932
    %v1937 = vpack.c.bf16 %v1936, %v1935
    %v1938 = vld [vmem:[#allocation2 + $0x50] sm:$0xff]
    %v1939 = vld [vmem:[#allocation2 + $0x58] sm:$0xff]
    %1941 = vrot.lane.b32.xlu0 %v1937, 32
    %v1942 = vpop.permute.xlu0 %1941
    %v1944 = vsel %vm279, %v1942, 0
    %1946 = vmatprep.subr.bf16.mxu0 0
    %1947 = vmatpush1.bf16.msra.mxu0 0
    %1948 = vmatprep.subr.bf16.mxu0 0
    %1949 = vmatpush1.bf16.msra.mxu0 0
    %1950 = vmatprep.subr.bf16.mxu0 0
    %1951 = vmatpush1.bf16.msra.mxu0 0
    %1952 = vmatprep.subr.bf16.mxu0 0
    %1953 = vmatpush1.bf16.msra.mxu0 0
    %1954 = vmatprep.subr.bf16.mxu0 0
    %1955 = vmatpush1.bf16.msra.mxu0 0
    %1956 = vmatprep.subr.bf16.mxu0 0
    %1957 = vmatpush1.bf16.msra.mxu0 0
    %1958 = vmatprep.subr.bf16.mxu0 0
    %1959 = vmatpush1.bf16.msra.mxu0 %v1437
    %1960 = vmatprep.subr.bf16.mxu0 0
    %1961 = vmatpush1.bf16.msra.mxu0 %v1436
    %1962 = vmatprep.subr.bf16.mxu0 0
    %1963 = vmatpush2.bf16.msra.mxu0 0
    %1964 = vmatprep.subr.bf16.mxu0 0
    %1965 = vmatpush2.bf16.msra.mxu0 0
    %1966 = vmatprep.subr.bf16.mxu0 0
    %1967 = vmatpush2.bf16.msra.mxu0 0
    %1968 = vmatprep.subr.bf16.mxu0 0
    %1969 = vmatpush2.bf16.msra.mxu0 0
    %1970 = vmatprep.subr.bf16.mxu0 0
    %1971 = vmatpush2.bf16.msra.mxu0 0
    %1972 = vmatprep.subr.bf16.mxu0 0
    %1973 = vmatpush2.bf16.msra.mxu0 0
    %1974 = vmatprep.subr.bf16.mxu0 0
    %1975 = vmatpush2.bf16.msra.mxu0 0
    %1976 = vmatprep.subr.bf16.mxu0 0
    %1977 = vmatpush2.bf16.msra.mxu0 0
    %1978 = vmatprep.mubr.bf16.mxu0 0
    %1979 = vmatmul.mubr.bf16.gmra.mxu0 %v1944
    %v1980 = vpop.f32.mrf.mxu0
    %v1981 = vadd.f32 0.0, %v1980
    %v1982 = vpop.f32.mrf.mxu0
    %v1983 = vpop.f32.mrf.mxu0
    %v1984 = vadd.f32 0.0, %v1983
    %v1985 = vpop.f32.mrf.mxu0
    %1986 = vdwg.mxu0
    %v1987 = vadd.f32 %v1938, %v1981
    %v1988 = vadd.f32 %v1939, %v1984
    %v1989 = vxor.u32 %v1987, 2147483648
    %v1990 = vxor.u32 %v1988, 2147483648
    %v1991 = vmul.f32 %v1989, 1.442695
    %v1992 = vpow.pop %v1991
    %v1993 = vmul.f32 %v1990, 1.442695
    %v1994 = vpow.pop %v1993
    %v1995 = vadd.f32 %v1992, 1.0
    %v1996 = vadd.f32 %v1994, 1.0
    %v1997 = vrcp.pop %v1995
    %v1998 = vmul.f32 1.0, %v1997
    %v1999 = vrcp.pop %v1996
    %v2000 = vmul.f32 1.0, %v1999
    %v2001 = vtanh.pop %v1987
    %v2002 = vtanh.pop %v1988
    %v2003 = vmul.f32 %v1998, %v1923
    %v2004 = vmul.f32 %v2000, %v1924
    %2007 = vrot.lane.b32.xlu0 %v2001, 64
    %v2008 = vpop.permute.xlu0 %2007
    %2009 = vrot.lane.b32.xlu0 %v2002, 64
    %v2010 = vpop.permute.xlu0 %2009
    %v2013 = vmul.f32 %v1998, %v2008
    %v2014 = vmul.f32 %v2000, %v2010
    %2017 = vrot.lane.b32.xlu0 %v2013, 32
    %v2018 = vpop.permute.xlu0 %2017
    %2019 = vrot.lane.b32.xlu0 %v2014, 32
    %v2020 = vpop.permute.xlu0 %2019
    %v2023 = vadd.f32 %v2003, %v2018
    %v2024 = vadd.f32 %v2004, %v2020
    %v2025 = vtanh.pop %v2023
    %v2026 = vtanh.pop %v2024
    %2029 = vrot.lane.b32.xlu0 %v2025, 64
    %v2030 = vpop.permute.xlu0 %2029
    %2031 = vrot.lane.b32.xlu0 %v2026, 64
    %v2032 = vpop.permute.xlu0 %2031
    %v2035 = vmul.f32 %v1998, %v2030
    %v2036 = vmul.f32 %v2000, %v2032
    %v2037 = vpack.c.bf16 %v2036, %v2035
    %v2038 = vld [vmem:[#allocation2 + $0x60] sm:$0xff]
    %v2039 = vld [vmem:[#allocation2 + $0x68] sm:$0xff]
    %2041 = vrot.lane.b32.xlu0 %v2037, 32
    %v2042 = vpop.permute.xlu0 %2041
    %v2044 = vsel %vm279, %v2042, 0
    %2046 = vmatprep.subr.bf16.mxu0 0
    %2047 = vmatpush1.bf16.msra.mxu0 0
    %2048 = vmatprep.subr.bf16.mxu0 0
    %2049 = vmatpush1.bf16.msra.mxu0 0
    %2050 = vmatprep.subr.bf16.mxu0 0
    %2051 = vmatpush1.bf16.msra.mxu0 0
    %2052 = vmatprep.subr.bf16.mxu0 0
    %2053 = vmatpush1.bf16.msra.mxu0 0
    %2054 = vmatprep.subr.bf16.mxu0 0
    %2055 = vmatpush1.bf16.msra.mxu0 0
    %2056 = vmatprep.subr.bf16.mxu0 0
    %2057 = vmatpush1.bf16.msra.mxu0 0
    %2058 = vmatprep.subr.bf16.mxu0 0
    %2059 = vmatpush1.bf16.msra.mxu0 %v1437
    %2060 = vmatprep.subr.bf16.mxu0 0
    %2061 = vmatpush1.bf16.msra.mxu0 %v1436
    %2062 = vmatprep.subr.bf16.mxu0 0
    %2063 = vmatpush2.bf16.msra.mxu0 0
    %2064 = vmatprep.subr.bf16.mxu0 0
    %2065 = vmatpush2.bf16.msra.mxu0 0
    %2066 = vmatprep.subr.bf16.mxu0 0
    %2067 = vmatpush2.bf16.msra.mxu0 0
    %2068 = vmatprep.subr.bf16.mxu0 0
    %2069 = vmatpush2.bf16.msra.mxu0 0
    %2070 = vmatprep.subr.bf16.mxu0 0
    %2071 = vmatpush2.bf16.msra.mxu0 0
    %2072 = vmatprep.subr.bf16.mxu0 0
    %2073 = vmatpush2.bf16.msra.mxu0 0
    %2074 = vmatprep.subr.bf16.mxu0 0
    %2075 = vmatpush2.bf16.msra.mxu0 0
    %2076 = vmatprep.subr.bf16.mxu0 0
    %2077 = vmatpush2.bf16.msra.mxu0 0
    %2078 = vmatprep.mubr.bf16.mxu0 0
    %2079 = vmatmul.mubr.bf16.gmra.mxu0 %v2044
    %v2080 = vpop.f32.mrf.mxu0
    %v2081 = vadd.f32 0.0, %v2080
    %v2082 = vpop.f32.mrf.mxu0
    %v2083 = vpop.f32.mrf.mxu0
    %v2084 = vadd.f32 0.0, %v2083
    %v2085 = vpop.f32.mrf.mxu0
    %2086 = vdwg.mxu0
    %v2087 = vadd.f32 %v2038, %v2081
    %v2088 = vadd.f32 %v2039, %v2084
    %v2089 = vxor.u32 %v2087, 2147483648
    %v2090 = vxor.u32 %v2088, 2147483648
    %v2091 = vmul.f32 %v2089, 1.442695
    %v2092 = vpow.pop %v2091
    %v2093 = vmul.f32 %v2090, 1.442695
    %v2094 = vpow.pop %v2093
    %v2095 = vadd.f32 %v2092, 1.0
    %v2096 = vadd.f32 %v2094, 1.0
    %v2097 = vrcp.pop %v2095
    %v2098 = vmul.f32 1.0, %v2097
    %v2099 = vrcp.pop %v2096
    %v2100 = vmul.f32 1.0, %v2099
    %v2101 = vtanh.pop %v2087
    %v2102 = vtanh.pop %v2088
    %v2103 = vmul.f32 %v2098, %v2023
    %v2104 = vmul.f32 %v2100, %v2024
    %2107 = vrot.lane.b32.xlu0 %v2101, 64
    %v2108 = vpop.permute.xlu0 %2107
    %2109 = vrot.lane.b32.xlu0 %v2102, 64
    %v2110 = vpop.permute.xlu0 %2109
    %v2113 = vmul.f32 %v2098, %v2108
    %v2114 = vmul.f32 %v2100, %v2110
    %2117 = vrot.lane.b32.xlu0 %v2113, 32
    %v2118 = vpop.permute.xlu0 %2117
    %2119 = vrot.lane.b32.xlu0 %v2114, 32
    %v2120 = vpop.permute.xlu0 %2119
    %v2123 = vadd.f32 %v2103, %v2118
    %v2124 = vadd.f32 %v2104, %v2120
    %v2125 = vtanh.pop %v2123
    %v2126 = vtanh.pop %v2124
    %2129 = vrot.lane.b32.xlu0 %v2125, 64
    %v2130 = vpop.permute.xlu0 %2129
    %2131 = vrot.lane.b32.xlu0 %v2126, 64
    %v2132 = vpop.permute.xlu0 %2131
    %v2135 = vmul.f32 %v2098, %v2130
    %v2136 = vmul.f32 %v2100, %v2132
    %v2137 = vpack.c.bf16 %v2136, %v2135
    %v2138 = vld [vmem:[#allocation2 + $0x70] sm:$0xff]
    %v2139 = vld [vmem:[#allocation2 + $0x78] sm:$0xff]
    %2141 = vrot.lane.b32.xlu0 %v2137, 32
    %v2142 = vpop.permute.xlu0 %2141
    %v2144 = vsel %vm279, %v2142, 0
    %2146 = vmatprep.subr.bf16.mxu0 0
    %2147 = vmatpush1.bf16.msra.mxu0 0
    %2148 = vmatprep.subr.bf16.mxu0 0
    %2149 = vmatpush1.bf16.msra.mxu0 0
    %2150 = vmatprep.subr.bf16.mxu0 0
    %2151 = vmatpush1.bf16.msra.mxu0 0
    %2152 = vmatprep.subr.bf16.mxu0 0
    %2153 = vmatpush1.bf16.msra.mxu0 0
    %2154 = vmatprep.subr.bf16.mxu0 0
    %2155 = vmatpush1.bf16.msra.mxu0 0
    %2156 = vmatprep.subr.bf16.mxu0 0
    %2157 = vmatpush1.bf16.msra.mxu0 0
    %2158 = vmatprep.subr.bf16.mxu0 0
    %2159 = vmatpush1.bf16.msra.mxu0 %v1437
    %2160 = vmatprep.subr.bf16.mxu0 0
    %2161 = vmatpush1.bf16.msra.mxu0 %v1436
    %2162 = vmatprep.subr.bf16.mxu0 0
    %2163 = vmatpush2.bf16.msra.mxu0 0
    %2164 = vmatprep.subr.bf16.mxu0 0
    %2165 = vmatpush2.bf16.msra.mxu0 0
    %2166 = vmatprep.subr.bf16.mxu0 0
    %2167 = vmatpush2.bf16.msra.mxu0 0
    %2168 = vmatprep.subr.bf16.mxu0 0
    %2169 = vmatpush2.bf16.msra.mxu0 0
    %2170 = vmatprep.subr.bf16.mxu0 0
    %2171 = vmatpush2.bf16.msra.mxu0 0
    %2172 = vmatprep.subr.bf16.mxu0 0
    %2173 = vmatpush2.bf16.msra.mxu0 0
    %2174 = vmatprep.subr.bf16.mxu0 0
    %2175 = vmatpush2.bf16.msra.mxu0 0
    %2176 = vmatprep.subr.bf16.mxu0 0
    %2177 = vmatpush2.bf16.msra.mxu0 0
    %2178 = vmatprep.mubr.bf16.mxu0 0
    %2179 = vmatmul.mubr.bf16.gmra.mxu0 %v2144
    %v2180 = vpop.f32.mrf.mxu0
    %v2181 = vadd.f32 0.0, %v2180
    %v2182 = vpop.f32.mrf.mxu0
    %v2183 = vpop.f32.mrf.mxu0
    %v2184 = vadd.f32 0.0, %v2183
    %v2185 = vpop.f32.mrf.mxu0
    %2186 = vdwg.mxu0
    %v2187 = vadd.f32 %v2138, %v2181
    %v2188 = vadd.f32 %v2139, %v2184
    %v2189 = vxor.u32 %v2187, 2147483648
    %v2190 = vxor.u32 %v2188, 2147483648
    %v2191 = vmul.f32 %v2189, 1.442695
    %v2192 = vpow.pop %v2191
    %v2193 = vmul.f32 %v2190, 1.442695
    %v2194 = vpow.pop %v2193
    %v2195 = vadd.f32 %v2192, 1.0
    %v2196 = vadd.f32 %v2194, 1.0
    %v2197 = vrcp.pop %v2195
    %v2198 = vmul.f32 1.0, %v2197
    %v2199 = vrcp.pop %v2196
    %v2200 = vmul.f32 1.0, %v2199
    %v2201 = vtanh.pop %v2187
    %v2202 = vtanh.pop %v2188
    %v2203 = vmul.f32 %v2198, %v2123
    %v2204 = vmul.f32 %v2200, %v2124
    %2207 = vrot.lane.b32.xlu0 %v2201, 64
    %v2208 = vpop.permute.xlu0 %2207
    %2209 = vrot.lane.b32.xlu0 %v2202, 64
    %v2210 = vpop.permute.xlu0 %2209
    %v2213 = vmul.f32 %v2198, %v2208
    %v2214 = vmul.f32 %v2200, %v2210
    %2217 = vrot.lane.b32.xlu0 %v2213, 32
    %v2218 = vpop.permute.xlu0 %2217
    %2219 = vrot.lane.b32.xlu0 %v2214, 32
    %v2220 = vpop.permute.xlu0 %2219
    %v2223 = vadd.f32 %v2203, %v2218
    %v2224 = vadd.f32 %v2204, %v2220
    %v2225 = vtanh.pop %v2223
    %v2226 = vtanh.pop %v2224
    %2229 = vrot.lane.b32.xlu0 %v2225, 64
    %v2230 = vpop.permute.xlu0 %2229
    %2231 = vrot.lane.b32.xlu0 %v2226, 64
    %v2232 = vpop.permute.xlu0 %2231
    %v2235 = vmul.f32 %v2198, %v2230
    %v2236 = vmul.f32 %v2200, %v2232
    %v2237 = vpack.c.bf16 %v2236, %v2235
    %v2239 = vunpack.c.l.b16 %v1537
    %v2240 = vunpack.c.h.b16 %v1537
    %v2241 = vunpack.c.l.b16 %v1637
    %v2242 = vunpack.c.h.b16 %v1637
    %v2243 = vunpack.c.l.b16 %v1737
    %v2244 = vunpack.c.h.b16 %v1737
    %v2245 = vunpack.c.l.b16 %v1837
    %v2246 = vunpack.c.h.b16 %v1837
    %v2247 = vunpack.c.l.b16 %v1937
    %v2248 = vunpack.c.h.b16 %v1937
    %v2249 = vunpack.c.l.b16 %v2037
    %v2250 = vunpack.c.h.b16 %v2037
    %v2251 = vunpack.c.l.b16 %v2137
    %v2252 = vunpack.c.h.b16 %v2137
    %v2253 = vunpack.c.l.b16 %v2237
    %v2254 = vunpack.c.h.b16 %v2237
    %v2255 = vpack.c.b16 %v2239, %v2239
    %v2256 = vpack.c.b16 %v2240, %v2240
    %v2257 = vpack.c.b16 %v2241, %v2241
    %v2258 = vpack.c.b16 %v2242, %v2242
    %v2259 = vpack.c.b16 %v2243, %v2243
    %v2260 = vpack.c.b16 %v2244, %v2244
    %v2261 = vpack.c.b16 %v2245, %v2245
    %v2262 = vpack.c.b16 %v2246, %v2246
    %v2263 = vpack.c.b16 %v2247, %v2247
    %v2264 = vpack.c.b16 %v2248, %v2248
    %v2265 = vpack.c.b16 %v2249, %v2249
    %v2266 = vpack.c.b16 %v2250, %v2250
    %v2267 = vpack.c.b16 %v2251, %v2251
    %v2268 = vpack.c.b16 %v2252, %v2252
    %v2269 = vpack.c.b16 %v2253, %v2253
    %v2270 = vpack.c.b16 %v2254, %v2254
    %2271 = vrot.lane.b32.xlu0 %v2255, 32
    %v2272 = vpop.permute.xlu0 %2271
    %2273 = vrot.lane.b32.xlu0 %v2256, 32
    %v2274 = vpop.permute.xlu0 %2273
    %2275 = vrot.lane.b32.xlu0 %v2257, 32
    %v2276 = vpop.permute.xlu0 %2275
    %2277 = vrot.lane.b32.xlu0 %v2258, 32
    %v2278 = vpop.permute.xlu0 %2277
    %2279 = vrot.lane.b32.xlu0 %v2259, 32
    %v2280 = vpop.permute.xlu0 %2279
    %2281 = vrot.lane.b32.xlu0 %v2260, 32
    %v2282 = vpop.permute.xlu0 %2281
    %2283 = vrot.lane.b32.xlu0 %v2261, 32
    %v2284 = vpop.permute.xlu0 %2283
    %2285 = vrot.lane.b32.xlu0 %v2262, 32
    %v2286 = vpop.permute.xlu0 %2285
    %2287 = vrot.lane.b32.xlu0 %v2263, 32
    %v2288 = vpop.permute.xlu0 %2287
    %2289 = vrot.lane.b32.xlu0 %v2264, 32
    %v2290 = vpop.permute.xlu0 %2289
    %2291 = vrot.lane.b32.xlu0 %v2265, 32
    %v2292 = vpop.permute.xlu0 %2291
    %2293 = vrot.lane.b32.xlu0 %v2266, 32
    %v2294 = vpop.permute.xlu0 %2293
    %2295 = vrot.lane.b32.xlu0 %v2267, 32
    %v2296 = vpop.permute.xlu0 %2295
    %2297 = vrot.lane.b32.xlu0 %v2268, 32
    %v2298 = vpop.permute.xlu0 %2297
    %2299 = vrot.lane.b32.xlu0 %v2269, 32
    %v2300 = vpop.permute.xlu0 %2299
    %2301 = vrot.lane.b32.xlu0 %v2270, 32
    %v2302 = vpop.permute.xlu0 %2301
    %2319 = vst.msk [vmem:[#allocation3 + $0x8] sm:$0xf] %vm1159, %v2272
    %2320 = vst.msk [vmem:[#allocation3 + $0xc] sm:$0xf] %vm1159, %v2274
    %2321 = vst.msk [vmem:[#allocation3 + $0x10] sm:$0xf] %vm1159, %v2276
    %2322 = vst.msk [vmem:[#allocation3 + $0x14] sm:$0xf] %vm1159, %v2278
    %2323 = vst.msk [vmem:[#allocation3 + $0x18] sm:$0xf] %vm1159, %v2280
    %2324 = vst.msk [vmem:[#allocation3 + $0x1c] sm:$0xf] %vm1159, %v2282
    %2325 = vst.msk [vmem:[#allocation3 + $0x20] sm:$0xf] %vm1159, %v2284
    %2326 = vst.msk [vmem:[#allocation3 + $0x24] sm:$0xf] %vm1159, %v2286
    %2327 = vst.msk [vmem:[#allocation3 + $0x28] sm:$0xf] %vm1159, %v2288
    %2328 = vst.msk [vmem:[#allocation3 + $0x2c] sm:$0xf] %vm1159, %v2290
    %2329 = vst.msk [vmem:[#allocation3 + $0x30] sm:$0xf] %vm1159, %v2292
    %2330 = vst.msk [vmem:[#allocation3 + $0x34] sm:$0xf] %vm1159, %v2294
    %2331 = vst.msk [vmem:[#allocation3 + $0x38] sm:$0xf] %vm1159, %v2296
    %2332 = vst.msk [vmem:[#allocation3 + $0x3c] sm:$0xf] %vm1159, %v2298
    %2333 = vst.msk [vmem:[#allocation3 + $0x40] sm:$0xf] %vm1159, %v2300
    %2334 = vst.msk [vmem:[#allocation3 + $0x44] sm:$0xf] %vm1159, %v2302
    %s2335 = sld [smem:[#allocation4]]
    %v2336 = vstv %s2335
    %v2337 = vrcp.pop %v2336
    %s2338 = vtos %v2337
    %v2339 = vld [vmem:[#allocation3] sm:$0xf]
    %v2340 = vld [vmem:[#allocation3 + $0x4] sm:$0xf]
    %v2341 = vld [vmem:[#allocation3 + $0x8] sm:$0xf]
    %v2342 = vld [vmem:[#allocation3 + $0xc] sm:$0xf]
    %v2343 = vld [vmem:[#allocation3 + $0x10] sm:$0xf]
    %v2344 = vld [vmem:[#allocation3 + $0x14] sm:$0xf]
    %v2345 = vld [vmem:[#allocation3 + $0x18] sm:$0xf]
    %v2346 = vld [vmem:[#allocation3 + $0x1c] sm:$0xf]
    %v2347 = vld [vmem:[#allocation3 + $0x20] sm:$0xf]
    %v2348 = vld [vmem:[#allocation3 + $0x24] sm:$0xf]
    %v2349 = vld [vmem:[#allocation3 + $0x28] sm:$0xf]
    %v2350 = vld [vmem:[#allocation3 + $0x2c] sm:$0xf]
    %v2351 = vld [vmem:[#allocation3 + $0x30] sm:$0xf]
    %v2352 = vld [vmem:[#allocation3 + $0x34] sm:$0xf]
    %v2353 = vld [vmem:[#allocation3 + $0x38] sm:$0xf]
    %v2354 = vld [vmem:[#allocation3 + $0x3c] sm:$0xf]
    %v2355 = vld [vmem:[%s9] sm:$0xf]
    %v2356 = vld [vmem:[%s9 + $0x4] sm:$0xf]
    %v2357 = vld [vmem:[%s9 + $0x8] sm:$0xf]
    %v2358 = vld [vmem:[%s9 + $0xc] sm:$0xf]
    %v2375 = vunpack.c.l.b16 %v2339
    %v2376 = vunpack.c.l.b16 %v2340
    %v2377 = vunpack.c.l.b16 %v2341
    %v2378 = vunpack.c.l.b16 %v2342
    %v2379 = vunpack.c.l.b16 %v2343
    %v2380 = vunpack.c.l.b16 %v2344
    %v2381 = vunpack.c.l.b16 %v2345
    %v2382 = vunpack.c.l.b16 %v2346
    %v2383 = vunpack.c.l.b16 %v2347
    %v2384 = vunpack.c.l.b16 %v2348
    %v2385 = vunpack.c.l.b16 %v2349
    %v2386 = vunpack.c.l.b16 %v2350
    %v2387 = vunpack.c.l.b16 %v2351
    %v2388 = vunpack.c.l.b16 %v2352
    %v2389 = vunpack.c.l.b16 %v2353
    %v2390 = vunpack.c.l.b16 %v2354
    %v2391 = vpack.c.b16 %v2376, %v2375
    %v2392 = vpack.c.b16 %v2378, %v2377
    %v2393 = vpack.c.b16 %v2380, %v2379
    %v2394 = vpack.c.b16 %v2382, %v2381
    %v2395 = vpack.c.b16 %v2384, %v2383
    %v2396 = vpack.c.b16 %v2386, %v2385
    %v2397 = vpack.c.b16 %v2388, %v2387
    %v2398 = vpack.c.b16 %v2390, %v2389
    %v2403 = vunpack.c.l.b16 %v2355
    %v2404 = vunpack.c.l.b16 %v2356
    %v2405 = vunpack.c.l.b16 %v2357
    %v2406 = vunpack.c.l.b16 %v2358
    %v2407 = vpack.c.b16 %v2404, %v2403
    %v2408 = vpack.c.b16 %v2406, %v2405
    %v2412 = vsel %vm279, %v2391, 0
    %v2415 = vsel %vm279, %v2392, 0
    %v2418 = vsel %vm279, %v2393, 0
    %v2421 = vsel %vm279, %v2394, 0
    %v2424 = vsel %vm279, %v2395, 0
    %v2427 = vsel %vm279, %v2396, 0
    %v2430 = vsel %vm279, %v2397, 0
    %v2433 = vsel %vm279, %v2398, 0
    %2435 = vmatprep.subr.bf16.mxu0 0
    %2436 = vmatpush1.bf16.msra.mxu0 0
    %2437 = vmatprep.subr.bf16.mxu0 0
    %2438 = vmatpush1.bf16.msra.mxu0 0
    %2439 = vmatprep.subr.bf16.mxu0 0
    %2440 = vmatpush1.bf16.msra.mxu0 0
    %2441 = vmatprep.subr.bf16.mxu0 0
    %2442 = vmatpush1.bf16.msra.mxu0 0
    %2443 = vmatprep.subr.bf16.mxu0 0
    %2444 = vmatpush1.bf16.msra.mxu0 0
    %2445 = vmatprep.subr.bf16.mxu0 0
    %2446 = vmatpush1.bf16.msra.mxu0 0
    %2447 = vmatprep.subr.bf16.mxu0 0
    %2448 = vmatpush1.bf16.msra.mxu0 %v2408
    %2449 = vmatprep.subr.bf16.mxu0 0
    %2450 = vmatpush1.bf16.msra.mxu0 %v2407
    %2451 = vmatprep.subr.bf16.mxu0 0
    %2452 = vmatpush2.bf16.msra.mxu0 0
    %2453 = vmatprep.subr.bf16.mxu0 0
    %2454 = vmatpush2.bf16.msra.mxu0 0
    %2455 = vmatprep.subr.bf16.mxu0 0
    %2456 = vmatpush2.bf16.msra.mxu0 0
    %2457 = vmatprep.subr.bf16.mxu0 0
    %2458 = vmatpush2.bf16.msra.mxu0 0
    %2459 = vmatprep.subr.bf16.mxu0 0
    %2460 = vmatpush2.bf16.msra.mxu0 0
    %2461 = vmatprep.subr.bf16.mxu0 0
    %2462 = vmatpush2.bf16.msra.mxu0 0
    %2463 = vmatprep.subr.bf16.mxu0 0
    %2464 = vmatpush2.bf16.msra.mxu0 0
    %2465 = vmatprep.subr.bf16.mxu0 0
    %2466 = vmatpush2.bf16.msra.mxu0 0
    %2467 = vmatprep.mubr.bf16.mxu0 0
    %2468 = vmatmul.mubr.bf16.gmra.mxu0 %v2412
    %v2469 = vpop.f32.mrf.mxu0
    %v2470 = vadd.f32 0.0, %v2469
    %v2471 = vpop.f32.mrf.mxu0
    %v2472 = vpop.f32.mrf.mxu0
    %v2473 = vadd.f32 0.0, %v2472
    %v2474 = vpop.f32.mrf.mxu0
    %2475 = vmatprep.mubr.bf16.mxu0 0
    %2476 = vmatmul.mubr.bf16.gmra.mxu0 %v2415
    %v2477 = vpop.f32.mrf.mxu0
    %v2478 = vadd.f32 0.0, %v2477
    %v2479 = vpop.f32.mrf.mxu0
    %v2480 = vpop.f32.mrf.mxu0
    %v2481 = vadd.f32 0.0, %v2480
    %v2482 = vpop.f32.mrf.mxu0
    %2483 = vmatprep.mubr.bf16.mxu0 0
    %2484 = vmatmul.mubr.bf16.gmra.mxu0 %v2418
    %v2485 = vpop.f32.mrf.mxu0
    %v2486 = vadd.f32 0.0, %v2485
    %v2487 = vpop.f32.mrf.mxu0
    %v2488 = vpop.f32.mrf.mxu0
    %v2489 = vadd.f32 0.0, %v2488
    %v2490 = vpop.f32.mrf.mxu0
    %2491 = vmatprep.mubr.bf16.mxu0 0
    %2492 = vmatmul.mubr.bf16.gmra.mxu0 %v2421
    %v2493 = vpop.f32.mrf.mxu0
    %v2494 = vadd.f32 0.0, %v2493
    %v2495 = vpop.f32.mrf.mxu0
    %v2496 = vpop.f32.mrf.mxu0
    %v2497 = vadd.f32 0.0, %v2496
    %v2498 = vpop.f32.mrf.mxu0
    %2499 = vmatprep.mubr.bf16.mxu0 0
    %2500 = vmatmul.mubr.bf16.gmra.mxu0 %v2424
    %v2501 = vpop.f32.mrf.mxu0
    %v2502 = vadd.f32 0.0, %v2501
    %v2503 = vpop.f32.mrf.mxu0
    %v2504 = vpop.f32.mrf.mxu0
    %v2505 = vadd.f32 0.0, %v2504
    %v2506 = vpop.f32.mrf.mxu0
    %2507 = vmatprep.mubr.bf16.mxu0 0
    %2508 = vmatmul.mubr.bf16.gmra.mxu0 %v2427
    %v2509 = vpop.f32.mrf.mxu0
    %v2510 = vadd.f32 0.0, %v2509
    %v2511 = vpop.f32.mrf.mxu0
    %v2512 = vpop.f32.mrf.mxu0
    %v2513 = vadd.f32 0.0, %v2512
    %v2514 = vpop.f32.mrf.mxu0
    %2515 = vmatprep.mubr.bf16.mxu0 0
    %2516 = vmatmul.mubr.bf16.gmra.mxu0 %v2430
    %v2517 = vpop.f32.mrf.mxu0
    %v2518 = vadd.f32 0.0, %v2517
    %v2519 = vpop.f32.mrf.mxu0
    %v2520 = vpop.f32.mrf.mxu0
    %v2521 = vadd.f32 0.0, %v2520
    %v2522 = vpop.f32.mrf.mxu0
    %2523 = vmatprep.mubr.bf16.mxu0 0
    %2524 = vmatmul.mubr.bf16.gmra.mxu0 %v2433
    %v2525 = vpop.f32.mrf.mxu0
    %v2526 = vadd.f32 0.0, %v2525
    %v2527 = vpop.f32.mrf.mxu0
    %v2528 = vpop.f32.mrf.mxu0
    %v2529 = vadd.f32 0.0, %v2528
    %v2530 = vpop.f32.mrf.mxu0
    %2531 = vdwg.mxu0
    %v2532 = vstv %s2338
    %v2533 = vmul.f32 %v2470, %v2532
    %v2534 = vmul.f32 %v2473, %v2532
    %v2535 = vmul.f32 %v2478, %v2532
    %v2536 = vmul.f32 %v2481, %v2532
    %v2537 = vmul.f32 %v2486, %v2532
    %v2538 = vmul.f32 %v2489, %v2532
    %v2539 = vmul.f32 %v2494, %v2532
    %v2540 = vmul.f32 %v2497, %v2532
    %v2541 = vmul.f32 %v2502, %v2532
    %v2542 = vmul.f32 %v2505, %v2532
    %v2543 = vmul.f32 %v2510, %v2532
    %v2544 = vmul.f32 %v2513, %v2532
    %v2545 = vmul.f32 %v2518, %v2532
    %v2546 = vmul.f32 %v2521, %v2532
    %v2547 = vmul.f32 %v2526, %v2532
    %v2548 = vmul.f32 %v2529, %v2532
    %v2549 = vmax.f32 %v2533, 0.0
    %v2550 = vmax.f32 %v2534, 0.0
    %v2551 = vmax.f32 %v2535, 0.0
    %v2552 = vmax.f32 %v2536, 0.0
    %v2553 = vmax.f32 %v2537, 0.0
    %v2554 = vmax.f32 %v2538, 0.0
    %v2555 = vmax.f32 %v2539, 0.0
    %v2556 = vmax.f32 %v2540, 0.0
    %v2557 = vmax.f32 %v2541, 0.0
    %v2558 = vmax.f32 %v2542, 0.0
    %v2559 = vmax.f32 %v2543, 0.0
    %v2560 = vmax.f32 %v2544, 0.0
    %v2561 = vmax.f32 %v2545, 0.0
    %v2562 = vmax.f32 %v2546, 0.0
    %v2563 = vmax.f32 %v2547, 0.0
    %v2564 = vmax.f32 %v2548, 0.0
    %v2565 = vand.u32 2147483647, %v2533
    %v2566 = vand.u32 2147483647, %v2534
    %v2567 = vand.u32 2147483647, %v2535
    %v2568 = vand.u32 2147483647, %v2536
    %v2569 = vand.u32 2147483647, %v2537
    %v2570 = vand.u32 2147483647, %v2538
    %v2571 = vand.u32 2147483647, %v2539
    %v2572 = vand.u32 2147483647, %v2540
    %v2573 = vand.u32 2147483647, %v2541
    %v2574 = vand.u32 2147483647, %v2542
    %v2575 = vand.u32 2147483647, %v2543
    %v2576 = vand.u32 2147483647, %v2544
    %v2577 = vand.u32 2147483647, %v2545
    %v2578 = vand.u32 2147483647, %v2546
    %v2579 = vand.u32 2147483647, %v2547
    %v2580 = vand.u32 2147483647, %v2548
    %v2581 = vsub.f32 0.0, %v2565
    %v2582 = vsub.f32 0.0, %v2566
    %v2583 = vsub.f32 0.0, %v2567
    %v2584 = vsub.f32 0.0, %v2568
    %v2585 = vsub.f32 0.0, %v2569
    %v2586 = vsub.f32 0.0, %v2570
    %v2587 = vsub.f32 0.0, %v2571
    %v2588 = vsub.f32 0.0, %v2572
    %v2589 = vsub.f32 0.0, %v2573
    %v2590 = vsub.f32 0.0, %v2574
    %v2591 = vsub.f32 0.0, %v2575
    %v2592 = vsub.f32 0.0, %v2576
    %v2593 = vsub.f32 0.0, %v2577
    %v2594 = vsub.f32 0.0, %v2578
    %v2595 = vsub.f32 0.0, %v2579
    %v2596 = vsub.f32 0.0, %v2580
    %v2597 = vmul.f32 %v2581, 1.442695
    %v2598 = vpow.pop %v2597
    %v2599 = vmul.f32 %v2582, 1.442695
    %v2600 = vpow.pop %v2599
    %v2601 = vmul.f32 %v2583, 1.442695
    %v2602 = vpow.pop %v2601
    %v2603 = vmul.f32 %v2584, 1.442695
    %v2604 = vpow.pop %v2603
    %v2605 = vmul.f32 %v2585, 1.442695
    %v2606 = vpow.pop %v2605
    %v2607 = vmul.f32 %v2586, 1.442695
    %v2608 = vpow.pop %v2607
    %v2609 = vmul.f32 %v2587, 1.442695
    %v2610 = vpow.pop %v2609
    %v2611 = vmul.f32 %v2588, 1.442695
    %v2612 = vpow.pop %v2611
    %v2613 = vmul.f32 %v2589, 1.442695
    %v2614 = vpow.pop %v2613
    %v2615 = vmul.f32 %v2590, 1.442695
    %v2616 = vpow.pop %v2615
    %v2617 = vmul.f32 %v2591, 1.442695
    %v2618 = vpow.pop %v2617
    %v2619 = vmul.f32 %v2592, 1.442695
    %v2620 = vpow.pop %v2619
    %v2621 = vmul.f32 %v2593, 1.442695
    %v2622 = vpow.pop %v2621
    %v2623 = vmul.f32 %v2594, 1.442695
    %v2624 = vpow.pop %v2623
    %v2625 = vmul.f32 %v2595, 1.442695
    %v2626 = vpow.pop %v2625
    %v2627 = vmul.f32 %v2596, 1.442695
    %v2628 = vpow.pop %v2627
    %v2629 = vadd.f32 %v2598, 1.0
    %v2630 = vadd.f32 %v2600, 1.0
    %v2631 = vadd.f32 %v2602, 1.0
    %v2632 = vadd.f32 %v2604, 1.0
    %v2633 = vadd.f32 %v2606, 1.0
    %v2634 = vadd.f32 %v2608, 1.0
    %v2635 = vadd.f32 %v2610, 1.0
    %v2636 = vadd.f32 %v2612, 1.0
    %v2637 = vadd.f32 %v2614, 1.0
    %v2638 = vadd.f32 %v2616, 1.0
    %v2639 = vadd.f32 %v2618, 1.0
    %v2640 = vadd.f32 %v2620, 1.0
    %v2641 = vadd.f32 %v2622, 1.0
    %v2642 = vadd.f32 %v2624, 1.0
    %v2643 = vadd.f32 %v2626, 1.0
    %v2644 = vadd.f32 %v2628, 1.0
    %v2645 = vlog2.pop %v2629
    %v2646 = vmul.f32 %v2645, 0.6931472
    %v2647 = vlog2.pop %v2630
    %v2648 = vmul.f32 %v2647, 0.6931472
    %v2649 = vlog2.pop %v2631
    %v2650 = vmul.f32 %v2649, 0.6931472
    %v2651 = vlog2.pop %v2632
    %v2652 = vmul.f32 %v2651, 0.6931472
    %v2653 = vlog2.pop %v2633
    %v2654 = vmul.f32 %v2653, 0.6931472
    %v2655 = vlog2.pop %v2634
    %v2656 = vmul.f32 %v2655, 0.6931472
    %v2657 = vlog2.pop %v2635
    %v2658 = vmul.f32 %v2657, 0.6931472
    %v2659 = vlog2.pop %v2636
    %v2660 = vmul.f32 %v2659, 0.6931472
    %v2661 = vlog2.pop %v2637
    %v2662 = vmul.f32 %v2661, 0.6931472
    %v2663 = vlog2.pop %v2638
    %v2664 = vmul.f32 %v2663, 0.6931472
    %v2665 = vlog2.pop %v2639
    %v2666 = vmul.f32 %v2665, 0.6931472
    %v2667 = vlog2.pop %v2640
    %v2668 = vmul.f32 %v2667, 0.6931472
    %v2669 = vlog2.pop %v2641
    %v2670 = vmul.f32 %v2669, 0.6931472
    %v2671 = vlog2.pop %v2642
    %v2672 = vmul.f32 %v2671, 0.6931472
    %v2673 = vlog2.pop %v2643
    %v2674 = vmul.f32 %v2673, 0.6931472
    %v2675 = vlog2.pop %v2644
    %v2676 = vmul.f32 %v2675, 0.6931472
    %v2677 = vadd.f32 %v2549, %v2646
    %v2678 = vadd.f32 %v2550, %v2648
    %v2679 = vadd.f32 %v2551, %v2650
    %v2680 = vadd.f32 %v2552, %v2652
    %v2681 = vadd.f32 %v2553, %v2654
    %v2682 = vadd.f32 %v2554, %v2656
    %v2683 = vadd.f32 %v2555, %v2658
    %v2684 = vadd.f32 %v2556, %v2660
    %v2685 = vadd.f32 %v2557, %v2662
    %v2686 = vadd.f32 %v2558, %v2664
    %v2687 = vadd.f32 %v2559, %v2666
    %v2688 = vadd.f32 %v2560, %v2668
    %v2689 = vadd.f32 %v2561, %v2670
    %v2690 = vadd.f32 %v2562, %v2672
    %v2691 = vadd.f32 %v2563, %v2674
    %v2692 = vadd.f32 %v2564, %v2676
    %v2693 = vstv %s2335
    %v2694 = vmul.f32 %v2693, %v2677
    %v2695 = vmul.f32 %v2693, %v2678
    %v2696 = vmul.f32 %v2693, %v2679
    %v2697 = vmul.f32 %v2693, %v2680
    %v2698 = vmul.f32 %v2693, %v2681
    %v2699 = vmul.f32 %v2693, %v2682
    %v2700 = vmul.f32 %v2693, %v2683
    %v2701 = vmul.f32 %v2693, %v2684
    %v2702 = vmul.f32 %v2693, %v2685
    %v2703 = vmul.f32 %v2693, %v2686
    %v2704 = vmul.f32 %v2693, %v2687
    %v2705 = vmul.f32 %v2693, %v2688
    %v2706 = vmul.f32 %v2693, %v2689
    %v2707 = vmul.f32 %v2693, %v2690
    %v2708 = vmul.f32 %v2693, %v2691
    %v2709 = vmul.f32 %v2693, %v2692
    %2710 = vst [vmem:[#allocation5] sm:$0xff] %v2694
    %2711 = vst [vmem:[#allocation5 + $0x8] sm:$0xff] %v2695
    %2712 = vst [vmem:[#allocation5 + $0x10] sm:$0xff] %v2696
    %2713 = vst [vmem:[#allocation5 + $0x18] sm:$0xff] %v2697
    %2714 = vst [vmem:[#allocation5 + $0x20] sm:$0xff] %v2698
    %2715 = vst [vmem:[#allocation5 + $0x28] sm:$0xff] %v2699
    %2716 = vst [vmem:[#allocation5 + $0x30] sm:$0xff] %v2700
    %2717 = vst [vmem:[#allocation5 + $0x38] sm:$0xff] %v2701
    %2718 = vst [vmem:[#allocation5 + $0x40] sm:$0xff] %v2702
    %2719 = vst [vmem:[#allocation5 + $0x48] sm:$0xff] %v2703
    %2720 = vst [vmem:[#allocation5 + $0x50] sm:$0xff] %v2704
    %2721 = vst [vmem:[#allocation5 + $0x58] sm:$0xff] %v2705
    %2722 = vst [vmem:[#allocation5 + $0x60] sm:$0xff] %v2706
    %2723 = vst [vmem:[#allocation5 + $0x68] sm:$0xff] %v2707
    %2724 = vst [vmem:[#allocation5 + $0x70] sm:$0xff] %v2708
    %2725 = vst [vmem:[#allocation5 + $0x78] sm:$0xff] %v2709
    // Predicated region
    $region46: #{tpu_custom_call.1} parent=1 // pred_check
      _
    $region47: #{tpu_custom_call.1} parent=1 // pred_check_branch
      %2727 = sbr.rel (0) target = $region49
    $region48: #{tpu_custom_call.1} parent=1 // pred_region
      %s2729 = ssub.s32 2048, 2048
      %2730 = vsyncadd [#allocation6], %s2729
      %s2731 = sshll.u32 [#allocation5], 4
      %s2732 = int_to_ptr.vmem [resolvable:$true] %s2731
      %2737 = dma.vmem_to_hbm [thread:$0]  %s2732, 2048, %s11, [#allocation6], 128, 128, 8
    $region49: #{tpu_custom_call.1} parent=1 // pred_fallthru
      _
    // Predicated region
    $region50: #{tpu_custom_call.1} parent=1 // pred_check
      _
    $region51: #{tpu_custom_call.1} parent=1 // pred_check_branch
      %2739 = sbr.rel (0) target = $region53
    $region52: #{tpu_custom_call.1} parent=1 // pred_region
      %2740 = dma.done [#allocation6], 2048
    $region53: #{tpu_custom_call.1} parent=1 // pred_fallthru
      _
    %2741 = vsyncpa [#allocation6], 1

</llo_original>
